<compile_context>
chip_gen: v6e
topology: v6e:2x2x1
jax: 0.10.0
libtpu: 0.0.40
codegen_flags: <defaults>
</compile_context>

<pallas_src>
import jax
import jax.numpy as jnp
from jax.experimental import pallas as pl
from jax.experimental.pallas import tpu as pltpu


def vae_decoder_kernel(z_ref, w1_ref, b1_ref, w2_ref, b2_ref, w3_ref, b3_ref,
                       o_ref):
    # In-kernel bf16 cast of the small (block_b, L) activation tile.
    z = z_ref[...].astype(jnp.bfloat16)
    # fc1: bf16 x bf16 on the MXU, f32 accumulate; epilogue (bias+ReLU) in f32
    # (v5e has no bf16 VPU/EUP path, so keep the epilogue f32 everywhere).
    h = jnp.dot(z, w1_ref[...], preferred_element_type=jnp.float32)
    h = jnp.maximum(h + b1_ref[...], 0.0)
    # fc2: cast activation back to bf16 only at the matmul input.
    h = jnp.dot(h.astype(jnp.bfloat16), w2_ref[...],
                preferred_element_type=jnp.float32)
    h = jnp.maximum(h + b2_ref[...], 0.0)
    # fc3 + tanh (tanh in f32 on the EUP; only the final store is narrowed).
    y = jnp.dot(h.astype(jnp.bfloat16), w3_ref[...],
                preferred_element_type=jnp.float32)
    o_ref[...] = jnp.tanh(y + b3_ref[...]).astype(o_ref.dtype)


def prepare_decoder_params(params):
    """One-time dtype preparation. Call ONCE and cache the result.

    Weights -> bf16 (MXU-native on v6e/v7x, halves resident weight bytes),
    biases -> f32 (added in the f32 epilogue).
    """
    return dict(
        w1=params["w1"].astype(jnp.bfloat16),
        b1=params["b1"].astype(jnp.float32),
        w2=params["w2"].astype(jnp.bfloat16),
        b2=params["b2"].astype(jnp.float32),
        w3=params["w3"].astype(jnp.bfloat16),
        b3=params["b3"].astype(jnp.float32),
    )


def _pick_block_b(B, block_b=None):
    """Batch tile: >=2 grid steps when the batch allows (v7x megacore), capped
    at 512 rows to amortize per-step overhead; multiple of 128."""
    if block_b is not None:
        return block_b
    if B <= 128:
        return 128
    half = (B + 1) // 2
    blk = ((half + 127) // 128) * 128
    return min(blk, 512)


def vae_decoder(z, prepared_params, *, block_b=None, out_dtype=jnp.bfloat16):
    """Fused VAE decoder MLP.

    z: (B, latent_dim) float32 (cast to bf16 inside the kernel for the MXU)
    prepared_params: output of prepare_decoder_params (bf16 weights, f32 biases)
    out_dtype: bf16 by default (tanh output is bounded in [-1,1]); pass
               jnp.float32 if the consumer needs full precision.
    """
    p = prepared_params
    B, L = z.shape
    H1 = p["w1"].shape[1]
    H2 = p["w2"].shape[1]
    OUT = p["w3"].shape[1]

    block_b = _pick_block_b(B, block_b)
    B_pad = ((B + block_b - 1) // block_b) * block_b
    z_p = z if B_pad == B else jnp.pad(z, ((0, B_pad - B), (0, 0)))
    # TODO(synk): padded rows compute tanh(bias-chain) garbage that gets sliced
    # off; a masked final store would avoid the wasted writes for ragged batches.

    grid = (B_pad // block_b,)

    # Weights/biases: same full block for every batch tile (constant index 0);
    # refetch across grid steps is already elided by the pipeliner.
    # TODO(synk): pipeline_mode=pl.Buffered(1) on these constant specs would
    # save ~1.6 MiB of VMEM if hidden dims grow; negligible at this size.
    full = lambda shape: pl.BlockSpec(shape, lambda i: (0, 0))

    # Advisory cost estimate so XLA schedules neighbours sensibly.
    flops = 2 * B_pad * (L * H1 + H1 * H2 + H2 * OUT)
    transcendentals = B_pad * OUT  # tanh
    out_bytes_per_el = jnp.dtype(out_dtype).itemsize
    bytes_accessed = (
        B_pad * L * 4                                   # z (f32)
        + (L * H1 + H1 * H2 + H2 * OUT) * 2             # weights (bf16)
        + (H1 + H2 + OUT) * 4                           # biases (f32)
        + B_pad * OUT * out_bytes_per_el                # output
    )

    # Tight-but-safe VMEM budget: weights double-buffered + per-tile buffers
    # + f32/bf16 activation temporaries + headroom.
    weight_bytes = (L * H1 + H1 * H2 + H2 * OUT) * 2 + (H1 + H2 + OUT) * 4
    tile_bytes = 2 * block_b * (L * 4 + OUT * out_bytes_per_el)   # dbl-buffered z/out
    act_bytes = block_b * (H1 + H2) * (4 + 2)                     # f32 h + bf16 copies
    vmem_budget = min(2 * weight_bytes + tile_bytes + act_bytes + (6 << 20),
                      32 << 20)

    out = pl.pallas_call(
        vae_decoder_kernel,
        out_shape=jax.ShapeDtypeStruct((B_pad, OUT), out_dtype),
        grid_spec=pltpu.PrefetchScalarGridSpec(
            num_scalar_prefetch=0,
            grid=grid,
            in_specs=[
                pl.BlockSpec((block_b, L), lambda i: (i, 0)),   # z tile (f32)
                full((L, H1)),    # w1
                full((1, H1)),    # b1
                full((H1, H2)),   # w2
                full((1, H2)),    # b2
                full((H2, OUT)),  # w3
                full((1, OUT)),   # b3
            ],
            out_specs=pl.BlockSpec((block_b, OUT), lambda i: (i, 0)),
        ),
        compiler_params=pltpu.CompilerParams(
            dimension_semantics=("parallel",),
            vmem_limit_bytes=int(vmem_budget),
        ),
        cost_estimate=pl.CostEstimate(
            flops=flops,
            transcendentals=transcendentals,
            bytes_accessed=bytes_accessed,
        ),
    )(z_p, p["w1"], p["b1"], p["w2"], p["b2"], p["w3"], p["b3"])

    return out[:B] if B_pad != B else out


def init_params(key, latent_dim, output_dim):
    """Deterministic synthetic f32 parameter init (shapes match nn.Linear stack)."""
    H1, H2 = 512, 1024
    ks = jax.random.split(key, 6)

    def lin(kw, kb, fan_in, fan_out):
        bound = 1.0 / jnp.sqrt(fan_in)
        w = jax.random.uniform(kw, (fan_in, fan_out), jnp.float32,
                               minval=-bound, maxval=bound)
        b = jax.random.uniform(kb, (1, fan_out), jnp.float32,
                               minval=-bound, maxval=bound)
        return w, b

    w1, b1 = lin(ks[0], ks[1], latent_dim, H1)
    w2, b2 = lin(ks[2], ks[3], H1, H2)
    w3, b3 = lin(ks[4], ks[5], H2, output_dim)
    return dict(w1=w1, b1=b1, w2=w2, b2=b2, w3=w3, b3=b3)


def reference(z, p):
    h = jnp.maximum(z @ p["w1"] + p["b1"], 0.0)
    h = jnp.maximum(h @ p["w2"] + p["b2"], 0.0)
    return jnp.tanh(h @ p["w3"] + p["b3"])


if __name__ == "__main__":
    latent_dim = 32
    output_dim = 256   # multiple of 128 -> lane-dense output stores
    batch = 256        # -> block_b=128, 2 grid tiles (both v7x TensorCores busy)

    key = jax.random.PRNGKey(0)
    k_z, k_p = jax.random.split(key)
    z = jax.random.normal(k_z, (batch, latent_dim), jnp.float32)

    params = init_params(k_p, latent_dim, output_dim)          # f32 "checkpoint"
    prepared = prepare_decoder_params(params)                   # cast ONCE, reuse
    prepared = jax.block_until_ready(prepared)

    out = vae_decoder(z, prepared)                              # bf16 output
    out = jax.block_until_ready(out)

    ref = reference(z, params)  # f32 reference
    assert out.shape == (batch, output_dim)
    # bf16 matmul inputs + bf16 output vs the f32 ref -> relaxed tolerance.
    assert jnp.allclose(out.astype(jnp.float32), ref, atol=3e-2, rtol=3e-2), \
        "mismatch vs reference"

    print("KERNEL_OK")
</pallas_src>

<mosaic_0001>
module attributes {stable_mosaic.version = 11 : i64} {
  func.func @vae_decoder_kernel(%arg0: i32, %arg1: memref<128x32xf32, #tpu.memory_space<vmem>>, %arg2: memref<32x512xbf16, #tpu.memory_space<vmem>>, %arg3: memref<1x512xf32, #tpu.memory_space<vmem>>, %arg4: memref<512x1024xbf16, #tpu.memory_space<vmem>>, %arg5: memref<1x1024xf32, #tpu.memory_space<vmem>>, %arg6: memref<1024x256xbf16, #tpu.memory_space<vmem>>, %arg7: memref<1x256xf32, #tpu.memory_space<vmem>>, %arg8: memref<128x256xbf16, #tpu.memory_space<vmem>>) attributes {dimension_semantics = [#tpu.dimension_semantics<parallel>], iteration_bounds = array<i64: 2>, scalar_prefetch = 0 : i64, scratch_operands = 0 : i64, tpu.core_type = #tpu.core_type<tc>, window_params = [{transform_indices = @transform_0, window_bounds = array<i64: 128, 32>}, {pipeline_mode = #tpu.pipeline_mode<synchronous>, transform_indices = @transform_1, window_bounds = array<i64: 32, 512>}, {pipeline_mode = #tpu.pipeline_mode<synchronous>, transform_indices = @transform_2, window_bounds = array<i64: 1, 512>}, {pipeline_mode = #tpu.pipeline_mode<synchronous>, transform_indices = @transform_3, window_bounds = array<i64: 512, 1024>}, {pipeline_mode = #tpu.pipeline_mode<synchronous>, transform_indices = @transform_4, window_bounds = array<i64: 1, 1024>}, {pipeline_mode = #tpu.pipeline_mode<synchronous>, transform_indices = @transform_5, window_bounds = array<i64: 1024, 256>}, {pipeline_mode = #tpu.pipeline_mode<synchronous>, transform_indices = @transform_6, window_bounds = array<i64: 1, 256>}, {transform_indices = @transform_7, window_bounds = array<i64: 128, 256>}]} {
    %c0 = arith.constant 0 : index
    %c0_0 = arith.constant 0 : index
    %0 = vector.load %arg1[%c0, %c0_0] : memref<128x32xf32, #tpu.memory_space<vmem>>, vector<128x32xf32>
    %1 = arith.truncf %0 : vector<128x32xf32> to vector<128x32xbf16>
    %c0_1 = arith.constant 0 : index
    %c0_2 = arith.constant 0 : index
    %2 = vector.load %arg2[%c0_1, %c0_2] : memref<32x512xbf16, #tpu.memory_space<vmem>>, vector<32x512xbf16>
    %cst = arith.constant dense<0.000000e+00> : vector<128x512xf32>
    %3 = tpu.matmul %1, %2, %cst {dimension_numbers = #tpu.dot_dimension_numbers<[1], [0], [0], [1], [0, 0, 1, 1], [], []>} : vector<128x32xbf16>, vector<32x512xbf16>, vector<128x512xf32> -> vector<128x512xf32>
    %c0_3 = arith.constant 0 : index
    %c0_4 = arith.constant 0 : index
    %4 = vector.load %arg3[%c0_3, %c0_4] : memref<1x512xf32, #tpu.memory_space<vmem>>, vector<1x512xf32>
    %5 = vector.broadcast %4 : vector<1x512xf32> to vector<128x512xf32>
    %6 = arith.addf %3, %5 : vector<128x512xf32>
    %cst_5 = arith.constant 0.000000e+00 : f32
    %7 = vector.broadcast %cst_5 : f32 to vector<128x512xf32>
    %8 = arith.maximumf %6, %7 : vector<128x512xf32>
    %9 = arith.truncf %8 : vector<128x512xf32> to vector<128x512xbf16>
    %c0_6 = arith.constant 0 : index
    %c0_7 = arith.constant 0 : index
    %10 = vector.load %arg4[%c0_6, %c0_7] : memref<512x1024xbf16, #tpu.memory_space<vmem>>, vector<512x1024xbf16>
    %cst_8 = arith.constant dense<0.000000e+00> : vector<128x1024xf32>
    %11 = tpu.matmul %9, %10, %cst_8 {dimension_numbers = #tpu.dot_dimension_numbers<[1], [0], [0], [1], [0, 0, 1, 1], [], []>} : vector<128x512xbf16>, vector<512x1024xbf16>, vector<128x1024xf32> -> vector<128x1024xf32>
    %c0_9 = arith.constant 0 : index
    %c0_10 = arith.constant 0 : index
    %12 = vector.load %arg5[%c0_9, %c0_10] : memref<1x1024xf32, #tpu.memory_space<vmem>>, vector<1x1024xf32>
    %13 = vector.broadcast %12 : vector<1x1024xf32> to vector<128x1024xf32>
    %14 = arith.addf %11, %13 : vector<128x1024xf32>
    %cst_11 = arith.constant 0.000000e+00 : f32
    %15 = vector.broadcast %cst_11 : f32 to vector<128x1024xf32>
    %16 = arith.maximumf %14, %15 : vector<128x1024xf32>
    %17 = arith.truncf %16 : vector<128x1024xf32> to vector<128x1024xbf16>
    %c0_12 = arith.constant 0 : index
    %c0_13 = arith.constant 0 : index
    %18 = vector.load %arg6[%c0_12, %c0_13] : memref<1024x256xbf16, #tpu.memory_space<vmem>>, vector<1024x256xbf16>
    %cst_14 = arith.constant dense<0.000000e+00> : vector<128x256xf32>
    %19 = tpu.matmul %17, %18, %cst_14 {dimension_numbers = #tpu.dot_dimension_numbers<[1], [0], [0], [1], [0, 0, 1, 1], [], []>} : vector<128x1024xbf16>, vector<1024x256xbf16>, vector<128x256xf32> -> vector<128x256xf32>
    %c0_15 = arith.constant 0 : index
    %c0_16 = arith.constant 0 : index
    %20 = vector.load %arg7[%c0_15, %c0_16] : memref<1x256xf32, #tpu.memory_space<vmem>>, vector<1x256xf32>
    %21 = vector.broadcast %20 : vector<1x256xf32> to vector<128x256xf32>
    %22 = arith.addf %19, %21 : vector<128x256xf32>
    %23 = math.tanh %22 : vector<128x256xf32>
    %24 = arith.truncf %23 : vector<128x256xf32> to vector<128x256xbf16>
    %c0_17 = arith.constant 0 : index
    %c0_18 = arith.constant 0 : index
    %25 = vector.load %arg8[%c0_17, %c0_18] : memref<128x256xbf16, #tpu.memory_space<vmem>>, vector<128x256xbf16>
    tpu.vector_store %arg8[%c0_17, %c0_18], %24 {strides = array<i32>} : memref<128x256xbf16, #tpu.memory_space<vmem>>, vector<128x256xbf16>,
    return
  }
  func.func @transform_0(%arg0: i32) -> (i32, i32) {
    %c0_i32 = arith.constant 0 : i32
    %c0_i32_0 = arith.constant 0 : i32
    return %arg0, %c0_i32 : i32, i32
  }
  func.func @transform_1(%arg0: i32) -> (i32, i32) {
    %c0_i32 = arith.constant 0 : i32
    %c0_i32_0 = arith.constant 0 : i32
    %c0_i32_1 = arith.constant 0 : i32
    return %c0_i32, %c0_i32_0 : i32, i32
  }
  func.func @transform_2(%arg0: i32) -> (i32, i32) {
    %c0_i32 = arith.constant 0 : i32
    %c0_i32_0 = arith.constant 0 : i32
    %c0_i32_1 = arith.constant 0 : i32
    return %c0_i32, %c0_i32_0 : i32, i32
  }
  func.func @transform_3(%arg0: i32) -> (i32, i32) {
    %c0_i32 = arith.constant 0 : i32
    %c0_i32_0 = arith.constant 0 : i32
    %c0_i32_1 = arith.constant 0 : i32
    return %c0_i32, %c0_i32_0 : i32, i32
  }
  func.func @transform_4(%arg0: i32) -> (i32, i32) {
    %c0_i32 = arith.constant 0 : i32
    %c0_i32_0 = arith.constant 0 : i32
    %c0_i32_1 = arith.constant 0 : i32
    return %c0_i32, %c0_i32_0 : i32, i32
  }
  func.func @transform_5(%arg0: i32) -> (i32, i32) {
    %c0_i32 = arith.constant 0 : i32
    %c0_i32_0 = arith.constant 0 : i32
    %c0_i32_1 = arith.constant 0 : i32
    return %c0_i32, %c0_i32_0 : i32, i32
  }
  func.func @transform_6(%arg0: i32) -> (i32, i32) {
    %c0_i32 = arith.constant 0 : i32
    %c0_i32_0 = arith.constant 0 : i32
    %c0_i32_1 = arith.constant 0 : i32
    return %c0_i32, %c0_i32_0 : i32, i32
  }
  func.func @transform_7(%arg0: i32) -> (i32, i32) {
    %c0_i32 = arith.constant 0 : i32
    %c0_i32_0 = arith.constant 0 : i32
    return %arg0, %c0_i32 : i32, i32
  }
}

</mosaic_0001>

<llo_original>
// kernel: tpu_custom_call.1
$region0: #{tpu_custom_call.1}
  #allocation0 [shape = 'u32[]', space=smem, size = 0x4, offset = 0x4, fixed_abs, tag = 'smem constant byte address 0x4 - core index']
  #allocation1 [shape = 'u32[144,128]{1,0:T(1,128)}', space=vmem, size = 0x12000, scoped, tag = 'internal scratch']
  %s0 = inlined_call_operand.vmem [shape: f32[256,32], index: 0, kind: input, shape index: {}]
  %s1 = inlined_call_operand.vmem [shape: bf16[32,512], index: 1, kind: input, shape index: {}]
  %s2 = inlined_call_operand.vmem [shape: f32[1,512], index: 2, kind: input, shape index: {}]
  %s3 = inlined_call_operand.hbm [shape: bf16[512,1024], index: 3, kind: input, shape index: {}]
  %s4 = inlined_call_operand.vmem [shape: f32[1,1024], index: 4, kind: input, shape index: {}]
  %s5 = inlined_call_operand.hbm [shape: bf16[1024,256], index: 5, kind: input, shape index: {}]
  %s6 = inlined_call_operand.vmem [shape: f32[1,256], index: 6, kind: input, shape index: {}]
  %s7 = inlined_call_operand.hbm [shape: bf16[256,256], index: 7, kind: output, shape index: {}]
  %s8 = sld [smem:[#allocation0]]
  $region69: #{tpu_custom_call.1} parent=0
    _
  %s10 = ssub.s32 1, %s8
  %s11 = scalar_select 0, %s10, %s8
  $region1: #{tpu_custom_call.1} parent=0
    #allocation2 [shape = 'u8[1048576]{0}', space=vmem, size = 0x100000, scoped, tag = 'input window, operand 3, single buffered']
    #allocation3 [shape = 's32[2]{0}', space=sflag, size = 0x8, scoped, tag = 'scoped memory for tpu_custom_call.1']
    #allocation4 [shape = 's32[2]{0}', space=sflag, size = 0x8, scoped, tag = 'scoped memory for tpu_custom_call.1']
    #allocation5 [shape = 'u8[524288]{0}', space=vmem, size = 0x80000, scoped, tag = 'input window, operand 5, single buffered']
    #allocation6 [shape = 's32[1]{0}', space=sflag, size = 0x4, scoped, tag = 'scoped memory for tpu_custom_call.1']
    #allocation7 [shape = 'u8[131072]{0}', space=vmem, size = 0x20000, scoped, tag = 'output window, operand 0']
    %12 = vsyncpa [#allocation3], 0
    %13 = vsyncpa [#allocation6], 0
    %14 = vsyncpa [#allocation4], 0
    %s15 = scalar_lea.sflag [#allocation4], 1
    %16 = vsyncpa %s15, 0
    loop: start=0, step=1, limit=4
    $region2: #{tpu_custom_call.1} parent=1 // loop_pre_header
      _
    $region3: #{tpu_custom_call.1} parent=1 // loop_header
      %s18 = sphi 0, %s22
      %p19 = scmp.ge.s32.totalorder %s18, 4
      %s28 = sphi 0, %s30
      %s31 = sphi 0, %s28
      %s32 = sphi 0, %s31
      %s48 = sphi 0, %s32
      %s52 = sphi 0, %s52
      %s54 = sphi 0, %s52
      %s55 = sphi 0, %s54
      %s69 = sphi 0, %s55
      %s73 = sphi 0, %s73
      %s75 = sphi 0, %s73
      %s76 = sphi 0, %s75
      %s90 = sphi 0, %s76
      %s94 = sphi 0, %s94
      %s96 = sphi 0, %s94
      %s97 = sphi 0, %s96
      %s111 = sphi 0, %s97
      %s115 = sphi 0, %s115
      %s117 = sphi 0, %s115
      %s118 = sphi 0, %s117
      %s132 = sphi 0, %s118
      %s136 = sphi 0, %s136
      %s138 = sphi 0, %s136
      %s139 = sphi 0, %s138
      %s153 = sphi 0, %s139
      %s157 = sphi 0, %s157
      %s159 = sphi 0, %s157
      %s160 = sphi 0, %s159
      %s174 = sphi 0, %s160
      %s180 = sphi 0, %s182
      %s183 = sphi 0, %s180
      %s184 = sphi 0, %s183
      %s200 = sphi 0, %s184
    $region4: #{tpu_custom_call.1} parent=1 // loop_header_branch
      %21 = sbr.rel (%p19) target = $region8
    $region5: #{tpu_custom_call.1} parent=1 // loop_body
      %s23 = ssub.s32 %s18, 1
      %s24 = ssub.s32 %s18, 2
      %s25 = sadd.s32 %s18, 1
      %s26 = ssub.s32 %s18, %s25
      %p27 = scmp.eq.s32.totalorder %s26, 0
      %s29 = sadd.s32 %s28, 1
      %s30 = scalar_select %p27, %s28, %s29
      %p33 = pneg %p27
      %p34 = scmp.eq.s32.totalorder %s18, 1
      %p35 = por %p33, %p34
      %p36 = scmp.ne.s32.totalorder %s28, %s31
      %p37 = scmp.eq.s32.totalorder %s18, 0
      %p38 = por %p36, %p37
      %p39 = scmp.ne.s32.totalorder %s28, %s31
      %p40 = scmp.eq.s32.totalorder %s23, 1
      %p41 = por %p39, %p40
      %p42 = scmp.ne.s32.totalorder %s31, %s32
      %p43 = scmp.eq.s32.totalorder %s23, 0
      %p44 = por %p42, %p43
      %p45 = scmp.ne.s32.totalorder %s31, %s32
      %p46 = scmp.eq.s32.totalorder %s24, 1
      %p47 = por %p45, %p46
      %p49 = scmp.ne.s32.totalorder %s32, %s48
      %p50 = scmp.eq.s32.totalorder %s24, 0
      %p51 = por %p49, %p50
      %s53 = sadd.s32 %s52, 1
      %p56 = scmp.eq.s32.totalorder %s18, 1
      %p57 = scmp.ne.s32.totalorder %s52, %s54
      %p58 = scmp.eq.s32.totalorder %s18, 0
      %p59 = por %p57, %p58
      %p60 = scmp.ne.s32.totalorder %s52, %s54
      %p61 = scmp.eq.s32.totalorder %s23, 1
      %p62 = por %p60, %p61
      %p63 = scmp.ne.s32.totalorder %s54, %s55
      %p64 = scmp.eq.s32.totalorder %s23, 0
      %p65 = por %p63, %p64
      %p66 = scmp.ne.s32.totalorder %s54, %s55
      %p67 = scmp.eq.s32.totalorder %s24, 1
      %p68 = por %p66, %p67
      %p70 = scmp.ne.s32.totalorder %s55, %s69
      %p71 = scmp.eq.s32.totalorder %s24, 0
      %p72 = por %p70, %p71
      %s74 = sadd.s32 %s73, 1
      %p77 = scmp.eq.s32.totalorder %s18, 1
      %p78 = scmp.ne.s32.totalorder %s73, %s75
      %p79 = scmp.eq.s32.totalorder %s18, 0
      %p80 = por %p78, %p79
      %p81 = scmp.ne.s32.totalorder %s73, %s75
      %p82 = scmp.eq.s32.totalorder %s23, 1
      %p83 = por %p81, %p82
      %p84 = scmp.ne.s32.totalorder %s75, %s76
      %p85 = scmp.eq.s32.totalorder %s23, 0
      %p86 = por %p84, %p85
      %p87 = scmp.ne.s32.totalorder %s75, %s76
      %p88 = scmp.eq.s32.totalorder %s24, 1
      %p89 = por %p87, %p88
      %p91 = scmp.ne.s32.totalorder %s76, %s90
      %p92 = scmp.eq.s32.totalorder %s24, 0
      %p93 = por %p91, %p92
      %s95 = sadd.s32 %s94, 1
      %p98 = scmp.eq.s32.totalorder %s18, 1
      %p99 = scmp.ne.s32.totalorder %s94, %s96
      %p100 = scmp.eq.s32.totalorder %s18, 0
      %p101 = por %p99, %p100
      %p102 = scmp.ne.s32.totalorder %s94, %s96
      %p103 = scmp.eq.s32.totalorder %s23, 1
      %p104 = por %p102, %p103
      %p105 = scmp.ne.s32.totalorder %s96, %s97
      %p106 = scmp.eq.s32.totalorder %s23, 0
      %p107 = por %p105, %p106
      %p108 = scmp.ne.s32.totalorder %s96, %s97
      %p109 = scmp.eq.s32.totalorder %s24, 1
      %p110 = por %p108, %p109
      %p112 = scmp.ne.s32.totalorder %s97, %s111
      %p113 = scmp.eq.s32.totalorder %s24, 0
      %p114 = por %p112, %p113
      %s116 = sadd.s32 %s115, 1
      %p119 = scmp.eq.s32.totalorder %s18, 1
      %p120 = scmp.ne.s32.totalorder %s115, %s117
      %p121 = scmp.eq.s32.totalorder %s18, 0
      %p122 = por %p120, %p121
      %p123 = scmp.ne.s32.totalorder %s115, %s117
      %p124 = scmp.eq.s32.totalorder %s23, 1
      %p125 = por %p123, %p124
      %p126 = scmp.ne.s32.totalorder %s117, %s118
      %p127 = scmp.eq.s32.totalorder %s23, 0
      %p128 = por %p126, %p127
      %p129 = scmp.ne.s32.totalorder %s117, %s118
      %p130 = scmp.eq.s32.totalorder %s24, 1
      %p131 = por %p129, %p130
      %p133 = scmp.ne.s32.totalorder %s118, %s132
      %p134 = scmp.eq.s32.totalorder %s24, 0
      %p135 = por %p133, %p134
      %s137 = sadd.s32 %s136, 1
      %p140 = scmp.eq.s32.totalorder %s18, 1
      %p141 = scmp.ne.s32.totalorder %s136, %s138
      %p142 = scmp.eq.s32.totalorder %s18, 0
      %p143 = por %p141, %p142
      %p144 = scmp.ne.s32.totalorder %s136, %s138
      %p145 = scmp.eq.s32.totalorder %s23, 1
      %p146 = por %p144, %p145
      %p147 = scmp.ne.s32.totalorder %s138, %s139
      %p148 = scmp.eq.s32.totalorder %s23, 0
      %p149 = por %p147, %p148
      %p150 = scmp.ne.s32.totalorder %s138, %s139
      %p151 = scmp.eq.s32.totalorder %s24, 1
      %p152 = por %p150, %p151
      %p154 = scmp.ne.s32.totalorder %s139, %s153
      %p155 = scmp.eq.s32.totalorder %s24, 0
      %p156 = por %p154, %p155
      %s158 = sadd.s32 %s157, 1
      %p161 = scmp.eq.s32.totalorder %s18, 1
      %p162 = scmp.ne.s32.totalorder %s157, %s159
      %p163 = scmp.eq.s32.totalorder %s18, 0
      %p164 = por %p162, %p163
      %p165 = scmp.ne.s32.totalorder %s157, %s159
      %p166 = scmp.eq.s32.totalorder %s23, 1
      %p167 = por %p165, %p166
      %p168 = scmp.ne.s32.totalorder %s159, %s160
      %p169 = scmp.eq.s32.totalorder %s23, 0
      %p170 = por %p168, %p169
      %p171 = scmp.ne.s32.totalorder %s159, %s160
      %p172 = scmp.eq.s32.totalorder %s24, 1
      %p173 = por %p171, %p172
      %p175 = scmp.ne.s32.totalorder %s160, %s174
      %p176 = scmp.eq.s32.totalorder %s24, 0
      %p177 = por %p175, %p176
      %s178 = ssub.s32 %s18, %s25
      %p179 = scmp.eq.s32.totalorder %s178, 0
      %s181 = sadd.s32 %s180, 1
      %s182 = scalar_select %p179, %s180, %s181
      %p185 = pneg %p179
      %p186 = scmp.eq.s32.totalorder %s18, 1
      %p187 = por %p185, %p186
      %p188 = scmp.ne.s32.totalorder %s180, %s183
      %p189 = scmp.eq.s32.totalorder %s18, 0
      %p190 = por %p188, %p189
      %p191 = scmp.ne.s32.totalorder %s180, %s183
      %p192 = scmp.eq.s32.totalorder %s23, 1
      %p193 = por %p191, %p192
      %p194 = scmp.ne.s32.totalorder %s183, %s184
      %p195 = scmp.eq.s32.totalorder %s23, 0
      %p196 = por %p194, %p195
      %p197 = scmp.ne.s32.totalorder %s183, %s184
      %p198 = scmp.eq.s32.totalorder %s24, 1
      %p199 = por %p197, %p198
      %p201 = scmp.ne.s32.totalorder %s184, %s200
      %p202 = scmp.eq.s32.totalorder %s24, 0
      %p203 = por %p201, %p202
      %p204 = scmp.le.s32.totalorder 1, %s18
      %p205 = scmp.lt.s32.totalorder %s18, 3
      %p206 = pnand %p204, %p205
      %p207 = pneg %p206
      // Predicated region
      $region9: #{tpu_custom_call.1} parent=5 // pred_check
        _
      $region10: #{tpu_custom_call.1} parent=5 // pred_check_branch
        %209 = sbr.rel (%p206) target = $region12
      $region11: #{tpu_custom_call.1} parent=5 // pred_region
        %s210 = ssub.s32 %s18, 1
        // Predicated region
        $region13: #{tpu_custom_call.1} parent=11 // pred_check
          %p211 = pneg %p65
        $region14: #{tpu_custom_call.1} parent=11 // pred_check_branch
          %213 = sbr.rel (%p211) target = $region16
        $region15: #{tpu_custom_call.1} parent=11 // pred_region
          _
        $region16: #{tpu_custom_call.1} parent=11 // pred_fallthru
          _
        // Predicated region
        $region17: #{tpu_custom_call.1} parent=11 // pred_check
          %p214 = pneg %p86
        $region18: #{tpu_custom_call.1} parent=11 // pred_check_branch
          %216 = sbr.rel (%p214) target = $region20
        $region19: #{tpu_custom_call.1} parent=11 // pred_region
          _
        $region20: #{tpu_custom_call.1} parent=11 // pred_fallthru
          _
        // Predicated region
        $region21: #{tpu_custom_call.1} parent=11 // pred_check
          %p217 = pneg %p107
        $region22: #{tpu_custom_call.1} parent=11 // pred_check_branch
          %219 = sbr.rel (%p217) target = $region24
        $region23: #{tpu_custom_call.1} parent=11 // pred_region
          %s221 = ssub.s32 32768, 32768
          %222 = vsyncadd [#allocation3], %s221
          %s223 = sshll.u32 [#allocation2], 4
          %s224 = int_to_ptr.vmem [resolvable:$true] %s223
          %229 = dma.hbm_to_vmem [thread:$0]  %s3, 32768, %s224, [#allocation3], 512, 512, 32
        $region24: #{tpu_custom_call.1} parent=11 // pred_fallthru
          _
        // Predicated region
        $region25: #{tpu_custom_call.1} parent=11 // pred_check
          %p230 = pneg %p128
        $region26: #{tpu_custom_call.1} parent=11 // pred_check_branch
          %232 = sbr.rel (%p230) target = $region28
        $region27: #{tpu_custom_call.1} parent=11 // pred_region
          _
        $region28: #{tpu_custom_call.1} parent=11 // pred_fallthru
          _
        // Predicated region
        $region29: #{tpu_custom_call.1} parent=11 // pred_check
          %p233 = pneg %p149
        $region30: #{tpu_custom_call.1} parent=11 // pred_check_branch
          %235 = sbr.rel (%p233) target = $region32
        $region31: #{tpu_custom_call.1} parent=11 // pred_region
          %s237 = ssub.s32 16384, 16384
          %238 = vsyncadd [#allocation6], %s237
          %s239 = sshll.u32 [#allocation5], 4
          %s240 = int_to_ptr.vmem [resolvable:$true] %s239
          %245 = dma.hbm_to_vmem [thread:$0]  %s5, 16384, %s240, [#allocation6], 128, 128, 8
        $region32: #{tpu_custom_call.1} parent=11 // pred_fallthru
          _
        // Predicated region
        $region33: #{tpu_custom_call.1} parent=11 // pred_check
          %p246 = pneg %p170
        $region34: #{tpu_custom_call.1} parent=11 // pred_check_branch
          %248 = sbr.rel (%p246) target = $region36
        $region35: #{tpu_custom_call.1} parent=11 // pred_region
          _
        $region36: #{tpu_custom_call.1} parent=11 // pred_fallthru
          _
      $region12: #{tpu_custom_call.1} parent=5 // pred_fallthru
        _
      %p249 = scmp.lt.s32.totalorder %s18, 2
      // Predicated region
      $region37: #{tpu_custom_call.1} parent=5 // pred_check
        %p250 = pneg %p249
      $region38: #{tpu_custom_call.1} parent=5 // pred_check_branch
        %252 = sbr.rel (%p250) target = $region40
      $region39: #{tpu_custom_call.1} parent=5 // pred_region
        // Predicated region
        $region41: #{tpu_custom_call.1} parent=39 // pred_check
          %p253 = pneg %p38
        $region42: #{tpu_custom_call.1} parent=39 // pred_check_branch
          %255 = sbr.rel (%p253) target = $region44
        $region43: #{tpu_custom_call.1} parent=39 // pred_region
          %s256 = smul.u32 16, %s18
          %p257 = scmp.lt.s32.totalorder %s256, 31
          %s258 = scalar_select %p257, %s256, 31
          %s259 = smul.addr %s258, 8
          %s260 = scalar_lea.vmem %s0, %s259
          %s261 = smul.u32 16, %s18
        $region44: #{tpu_custom_call.1} parent=39 // pred_fallthru
          _
      $region40: #{tpu_custom_call.1} parent=5 // pred_fallthru
        _
      %p262 = scmp.le.s32.totalorder 1, %s18
      %p263 = scmp.lt.s32.totalorder %s18, 3
      %p264 = pnand %p262, %p263
      %p265 = pneg %p264
      // Predicated region
      $region45: #{tpu_custom_call.1} parent=5 // pred_check
        _
      $region46: #{tpu_custom_call.1} parent=5 // pred_check_branch
        %267 = sbr.rel (%p264) target = $region48
      $region47: #{tpu_custom_call.1} parent=5 // pred_region
        %s268 = ssub.s32 %s18, 1
        // Predicated region
        $region49: #{tpu_custom_call.1} parent=47 // pred_check
          %p269 = pneg %p107
        $region50: #{tpu_custom_call.1} parent=47 // pred_check_branch
          %271 = sbr.rel (%p269) target = $region52
        $region51: #{tpu_custom_call.1} parent=47 // pred_region
          %272 = dma.done [#allocation3], 32768
        $region52: #{tpu_custom_call.1} parent=47 // pred_fallthru
          _
        // Predicated region
        $region53: #{tpu_custom_call.1} parent=47 // pred_check
          %p273 = pneg %p149
        $region54: #{tpu_custom_call.1} parent=47 // pred_check_branch
          %275 = sbr.rel (%p273) target = $region56
        $region55: #{tpu_custom_call.1} parent=47 // pred_region
          %276 = dma.done [#allocation6], 16384
        $region56: #{tpu_custom_call.1} parent=47 // pred_fallthru
          _
        %s277 = smul.u32 16, %s23
        %p278 = scmp.lt.s32.totalorder %s277, 31
        %s279 = scalar_select %p278, %s277, 31
        %s280 = smul.addr %s279, 8
        %s281 = scalar_lea.vmem %s0, %s280
        %p282 = pneg %p44
        %p283 = pneg %p41
        %p284 = pneg %p65
        %p285 = pneg %p62
        %p286 = pneg %p86
        %p287 = pneg %p83
        %p288 = pneg %p107
        %p289 = pneg %p104
        %p290 = pneg %p128
        %p291 = pneg %p125
        %p292 = pneg %p149
        %p293 = pneg %p146
        %p294 = pneg %p170
        %p295 = pneg %p167
        %p296 = pneg %p196
        %p297 = pneg %p193
        %s298 = sand.u32 %s183, 1
        %s299 = scalar_lea.sflag [#allocation4], %s298
        %s300 = sand.u32 %s183, 1
        %s301 = smul.addr %s300, 128
        %s302 = scalar_lea.vmem [#allocation7], %s301
        %s303 = smul.u32 16, %s23
        %p304 = scmp.lt.s32.totalorder %s303, 31
        %s305 = scalar_select %p304, %s303, 31
        %s306 = smul.addr %s305, 8
        %s307 = scalar_lea.vmem %s0, %s306
        %s308 = smul.u32 16, %s23
        %s309 = smul.u32 16, %s23
        %v311 = vld [vmem:[%s307] sm:$0xff]
        %v312 = vld [vmem:[%s307 + $0x8] sm:$0xff]
        %v313 = vld [vmem:[%s307 + $0x10] sm:$0xff]
        %v314 = vld [vmem:[%s307 + $0x18] sm:$0xff]
        %v315 = vld [vmem:[%s307 + $0x20] sm:$0xff]
        %v316 = vld [vmem:[%s307 + $0x28] sm:$0xff]
        %v317 = vld [vmem:[%s307 + $0x30] sm:$0xff]
        %v318 = vld [vmem:[%s307 + $0x38] sm:$0xff]
        %v319 = vld [vmem:[%s307 + $0x40] sm:$0xff]
        %v320 = vld [vmem:[%s307 + $0x48] sm:$0xff]
        %v321 = vld [vmem:[%s307 + $0x50] sm:$0xff]
        %v322 = vld [vmem:[%s307 + $0x58] sm:$0xff]
        %v323 = vld [vmem:[%s307 + $0x60] sm:$0xff]
        %v324 = vld [vmem:[%s307 + $0x68] sm:$0xff]
        %v325 = vld [vmem:[%s307 + $0x70] sm:$0xff]
        %v326 = vld [vmem:[%s307 + $0x78] sm:$0xff]
        %v327 = vpack.c.bf16 %v312, %v311
        %v328 = vpack.c.bf16 %v314, %v313
        %v329 = vpack.c.bf16 %v316, %v315
        %v330 = vpack.c.bf16 %v318, %v317
        %v331 = vpack.c.bf16 %v320, %v319
        %v332 = vpack.c.bf16 %v322, %v321
        %v333 = vpack.c.bf16 %v324, %v323
        %v334 = vpack.c.bf16 %v326, %v325
        %v335 = vld [vmem:[%s1] sm:$0xff]
        %v336 = vld [vmem:[%s1 + $0x8] sm:$0xff]
        %v337 = vld [vmem:[%s1 + $0x10] sm:$0xff]
        %v338 = vld [vmem:[%s1 + $0x18] sm:$0xff]
        %v339 = vld [vmem:[%s1 + $0x20] sm:$0xff]
        %v340 = vld [vmem:[%s1 + $0x28] sm:$0xff]
        %v341 = vld [vmem:[%s1 + $0x30] sm:$0xff]
        %v342 = vld [vmem:[%s1 + $0x38] sm:$0xff]
        %v343 = vld [vmem:[%s2] sm:$0xf]
        %v345 = vlaneseq
        %v346 = vshrl.u32 %v345, 7
        %v347 = vsub.s32 0, %v346
        %v348 = vrot.slane %v343, %v347
        %v349 = vlaneseq
        %v350 = vshrl.u32 %v349, 7
        %v351 = vsub.s32 1, %v350
        %v352 = vrot.slane %v343, %v351
        %v353 = vlaneseq
        %v354 = vshrl.u32 %v353, 7
        %v355 = vsub.s32 2, %v354
        %v356 = vrot.slane %v343, %v355
        %v357 = vlaneseq
        %v358 = vshrl.u32 %v357, 7
        %v359 = vsub.s32 3, %v358
        %v360 = vrot.slane %v343, %v359
        %v373 = vunpack.c.l.b16 %v335
        %v374 = vunpack.c.h.b16 %v335
        %v375 = vunpack.c.l.b16 %v336
        %v376 = vunpack.c.h.b16 %v336
        %v377 = vunpack.c.l.b16 %v337
        %v378 = vunpack.c.h.b16 %v337
        %v379 = vunpack.c.l.b16 %v338
        %v380 = vunpack.c.h.b16 %v338
        %v381 = vunpack.c.l.b16 %v339
        %v382 = vunpack.c.h.b16 %v339
        %v383 = vunpack.c.l.b16 %v340
        %v384 = vunpack.c.h.b16 %v340
        %v385 = vunpack.c.l.b16 %v341
        %v386 = vunpack.c.h.b16 %v341
        %v387 = vunpack.c.l.b16 %v342
        %v388 = vunpack.c.h.b16 %v342
        %v389 = vpack.c.b16 %v377, %v373
        %v390 = vpack.c.b16 %v378, %v374
        %v391 = vpack.c.b16 %v379, %v375
        %v392 = vpack.c.b16 %v380, %v376
        %v393 = vpack.c.b16 %v385, %v381
        %v394 = vpack.c.b16 %v386, %v382
        %v395 = vpack.c.b16 %v387, %v383
        %v396 = vpack.c.b16 %v388, %v384
        %vm405 = vcmask 261120
        %v407 = vsel %vm405, %v327, 0
        %v410 = vsel %vm405, %v328, 0
        %v413 = vsel %vm405, %v329, 0
        %v416 = vsel %vm405, %v330, 0
        %v419 = vsel %vm405, %v331, 0
        %v422 = vsel %vm405, %v332, 0
        %v425 = vsel %vm405, %v333, 0
        %v428 = vsel %vm405, %v334, 0
        %430 = vmatprep.subr.bf16.mxu0 0
        %431 = vmatpush1.bf16.msra.mxu0 0
        %432 = vmatprep.subr.bf16.mxu0 0
        %433 = vmatpush1.bf16.msra.mxu0 0
        %434 = vmatprep.subr.bf16.mxu0 0
        %435 = vmatpush1.bf16.msra.mxu0 0
        %436 = vmatprep.subr.bf16.mxu0 0
        %437 = vmatpush1.bf16.msra.mxu0 0
        %438 = vmatprep.subr.bf16.mxu0 0
        %439 = vmatpush1.bf16.msra.mxu0 0
        %440 = vmatprep.subr.bf16.mxu0 0
        %441 = vmatpush1.bf16.msra.mxu0 0
        %442 = vmatprep.subr.bf16.mxu0 %v394
        %443 = vmatpush1.bf16.msra.mxu0 %v393
        %444 = vmatprep.subr.bf16.mxu0 %v390
        %445 = vmatpush1.bf16.msra.mxu0 %v389
        %446 = vmatprep.subr.bf16.mxu0 0
        %447 = vmatpush2.bf16.msra.mxu0 0
        %448 = vmatprep.subr.bf16.mxu0 0
        %449 = vmatpush2.bf16.msra.mxu0 0
        %450 = vmatprep.subr.bf16.mxu0 0
        %451 = vmatpush2.bf16.msra.mxu0 0
        %452 = vmatprep.subr.bf16.mxu0 0
        %453 = vmatpush2.bf16.msra.mxu0 0
        %454 = vmatprep.subr.bf16.mxu0 0
        %455 = vmatpush2.bf16.msra.mxu0 0
        %456 = vmatprep.subr.bf16.mxu0 0
        %457 = vmatpush2.bf16.msra.mxu0 0
        %458 = vmatprep.subr.bf16.mxu0 0
        %459 = vmatpush2.bf16.msra.mxu0 0
        %460 = vmatprep.subr.bf16.mxu0 0
        %461 = vmatpush2.bf16.msra.mxu0 0
        %462 = vmatprep.mubr.bf16.mxu0 0
        %463 = vmatmul.mubr.bf16.gmra.mxu0 %v407
        %v464 = vpop.f32.mrf.mxu0
        %v465 = vadd.f32 %v348, %v464
        %v466 = vpop.f32.mrf.mxu0
        %v467 = vadd.f32 %v352, %v466
        %v468 = vpop.f32.mrf.mxu0
        %v469 = vadd.f32 %v348, %v468
        %v470 = vpop.f32.mrf.mxu0
        %v471 = vadd.f32 %v352, %v470
        %472 = vmatprep.mubr.bf16.mxu0 0
        %473 = vmatmul.mubr.bf16.gmra.mxu0 %v410
        %v474 = vpop.f32.mrf.mxu0
        %v475 = vadd.f32 %v348, %v474
        %v476 = vpop.f32.mrf.mxu0
        %v477 = vadd.f32 %v352, %v476
        %v478 = vpop.f32.mrf.mxu0
        %v479 = vadd.f32 %v348, %v478
        %v480 = vpop.f32.mrf.mxu0
        %v481 = vadd.f32 %v352, %v480
        %482 = vmatprep.mubr.bf16.mxu0 0
        %483 = vmatmul.mubr.bf16.gmra.mxu0 %v413
        %v484 = vpop.f32.mrf.mxu0
        %v485 = vadd.f32 %v348, %v484
        %v486 = vpop.f32.mrf.mxu0
        %v487 = vadd.f32 %v352, %v486
        %v488 = vpop.f32.mrf.mxu0
        %v489 = vadd.f32 %v348, %v488
        %v490 = vpop.f32.mrf.mxu0
        %v491 = vadd.f32 %v352, %v490
        %492 = vmatprep.mubr.bf16.mxu0 0
        %493 = vmatmul.mubr.bf16.gmra.mxu0 %v416
        %v494 = vpop.f32.mrf.mxu0
        %v495 = vadd.f32 %v348, %v494
        %v496 = vpop.f32.mrf.mxu0
        %v497 = vadd.f32 %v352, %v496
        %v498 = vpop.f32.mrf.mxu0
        %v499 = vadd.f32 %v348, %v498
        %v500 = vpop.f32.mrf.mxu0
        %v501 = vadd.f32 %v352, %v500
        %502 = vmatprep.mubr.bf16.mxu0 0
        %503 = vmatmul.mubr.bf16.gmra.mxu0 %v419
        %v504 = vpop.f32.mrf.mxu0
        %v505 = vadd.f32 %v348, %v504
        %v506 = vpop.f32.mrf.mxu0
        %v507 = vadd.f32 %v352, %v506
        %v508 = vpop.f32.mrf.mxu0
        %v509 = vadd.f32 %v348, %v508
        %v510 = vpop.f32.mrf.mxu0
        %v511 = vadd.f32 %v352, %v510
        %512 = vmatprep.mubr.bf16.mxu0 0
        %513 = vmatmul.mubr.bf16.gmra.mxu0 %v422
        %v514 = vpop.f32.mrf.mxu0
        %v515 = vadd.f32 %v348, %v514
        %v516 = vpop.f32.mrf.mxu0
        %v517 = vadd.f32 %v352, %v516
        %v518 = vpop.f32.mrf.mxu0
        %v519 = vadd.f32 %v348, %v518
        %v520 = vpop.f32.mrf.mxu0
        %v521 = vadd.f32 %v352, %v520
        %522 = vmatprep.mubr.bf16.mxu0 0
        %523 = vmatmul.mubr.bf16.gmra.mxu0 %v425
        %v524 = vpop.f32.mrf.mxu0
        %v525 = vadd.f32 %v348, %v524
        %v526 = vpop.f32.mrf.mxu0
        %v527 = vadd.f32 %v352, %v526
        %v528 = vpop.f32.mrf.mxu0
        %v529 = vadd.f32 %v348, %v528
        %v530 = vpop.f32.mrf.mxu0
        %v531 = vadd.f32 %v352, %v530
        %532 = vmatprep.mubr.bf16.mxu0 0
        %533 = vmatmul.mubr.bf16.gmra.mxu0 %v428
        %v534 = vpop.f32.mrf.mxu0
        %v535 = vadd.f32 %v348, %v534
        %v536 = vpop.f32.mrf.mxu0
        %v537 = vadd.f32 %v352, %v536
        %v538 = vpop.f32.mrf.mxu0
        %v539 = vadd.f32 %v348, %v538
        %v540 = vpop.f32.mrf.mxu0
        %v541 = vadd.f32 %v352, %v540
        %542 = vdwg.mxu0
        %543 = vmatprep.subr.bf16.mxu0 0
        %544 = vmatpush1.bf16.msra.mxu0 0
        %545 = vmatprep.subr.bf16.mxu0 0
        %546 = vmatpush1.bf16.msra.mxu0 0
        %547 = vmatprep.subr.bf16.mxu0 0
        %548 = vmatpush1.bf16.msra.mxu0 0
        %549 = vmatprep.subr.bf16.mxu0 0
        %550 = vmatpush1.bf16.msra.mxu0 0
        %551 = vmatprep.subr.bf16.mxu0 0
        %552 = vmatpush1.bf16.msra.mxu0 0
        %553 = vmatprep.subr.bf16.mxu0 0
        %554 = vmatpush1.bf16.msra.mxu0 0
        %555 = vmatprep.subr.bf16.mxu0 %v396
        %556 = vmatpush1.bf16.msra.mxu0 %v395
        %557 = vmatprep.subr.bf16.mxu0 %v392
        %558 = vmatpush1.bf16.msra.mxu0 %v391
        %559 = vmatprep.subr.bf16.mxu0 0
        %560 = vmatpush2.bf16.msra.mxu0 0
        %561 = vmatprep.subr.bf16.mxu0 0
        %562 = vmatpush2.bf16.msra.mxu0 0
        %563 = vmatprep.subr.bf16.mxu0 0
        %564 = vmatpush2.bf16.msra.mxu0 0
        %565 = vmatprep.subr.bf16.mxu0 0
        %566 = vmatpush2.bf16.msra.mxu0 0
        %567 = vmatprep.subr.bf16.mxu0 0
        %568 = vmatpush2.bf16.msra.mxu0 0
        %569 = vmatprep.subr.bf16.mxu0 0
        %570 = vmatpush2.bf16.msra.mxu0 0
        %571 = vmatprep.subr.bf16.mxu0 0
        %572 = vmatpush2.bf16.msra.mxu0 0
        %573 = vmatprep.subr.bf16.mxu0 0
        %574 = vmatpush2.bf16.msra.mxu0 0
        %575 = vmatprep.mubr.bf16.mxu0 0
        %576 = vmatmul.mubr.bf16.gmra.mxu0 %v407
        %v577 = vpop.f32.mrf.mxu0
        %v578 = vadd.f32 %v356, %v577
        %v579 = vpop.f32.mrf.mxu0
        %v580 = vadd.f32 %v360, %v579
        %v581 = vpop.f32.mrf.mxu0
        %v582 = vadd.f32 %v356, %v581
        %v583 = vpop.f32.mrf.mxu0
        %v584 = vadd.f32 %v360, %v583
        %585 = vmatprep.mubr.bf16.mxu0 0
        %586 = vmatmul.mubr.bf16.gmra.mxu0 %v410
        %v587 = vpop.f32.mrf.mxu0
        %v588 = vadd.f32 %v356, %v587
        %v589 = vpop.f32.mrf.mxu0
        %v590 = vadd.f32 %v360, %v589
        %v591 = vpop.f32.mrf.mxu0
        %v592 = vadd.f32 %v356, %v591
        %v593 = vpop.f32.mrf.mxu0
        %v594 = vadd.f32 %v360, %v593
        %595 = vmatprep.mubr.bf16.mxu0 0
        %596 = vmatmul.mubr.bf16.gmra.mxu0 %v413
        %v597 = vpop.f32.mrf.mxu0
        %v598 = vadd.f32 %v356, %v597
        %v599 = vpop.f32.mrf.mxu0
        %v600 = vadd.f32 %v360, %v599
        %v601 = vpop.f32.mrf.mxu0
        %v602 = vadd.f32 %v356, %v601
        %v603 = vpop.f32.mrf.mxu0
        %v604 = vadd.f32 %v360, %v603
        %605 = vmatprep.mubr.bf16.mxu0 0
        %606 = vmatmul.mubr.bf16.gmra.mxu0 %v416
        %v607 = vpop.f32.mrf.mxu0
        %v608 = vadd.f32 %v356, %v607
        %v609 = vpop.f32.mrf.mxu0
        %v610 = vadd.f32 %v360, %v609
        %v611 = vpop.f32.mrf.mxu0
        %v612 = vadd.f32 %v356, %v611
        %v613 = vpop.f32.mrf.mxu0
        %v614 = vadd.f32 %v360, %v613
        %615 = vmatprep.mubr.bf16.mxu0 0
        %616 = vmatmul.mubr.bf16.gmra.mxu0 %v419
        %v617 = vpop.f32.mrf.mxu0
        %v618 = vadd.f32 %v356, %v617
        %v619 = vpop.f32.mrf.mxu0
        %v620 = vadd.f32 %v360, %v619
        %v621 = vpop.f32.mrf.mxu0
        %v622 = vadd.f32 %v356, %v621
        %v623 = vpop.f32.mrf.mxu0
        %v624 = vadd.f32 %v360, %v623
        %625 = vmatprep.mubr.bf16.mxu0 0
        %626 = vmatmul.mubr.bf16.gmra.mxu0 %v422
        %v627 = vpop.f32.mrf.mxu0
        %v628 = vadd.f32 %v356, %v627
        %v629 = vpop.f32.mrf.mxu0
        %v630 = vadd.f32 %v360, %v629
        %v631 = vpop.f32.mrf.mxu0
        %v632 = vadd.f32 %v356, %v631
        %v633 = vpop.f32.mrf.mxu0
        %v634 = vadd.f32 %v360, %v633
        %635 = vmatprep.mubr.bf16.mxu0 0
        %636 = vmatmul.mubr.bf16.gmra.mxu0 %v425
        %v637 = vpop.f32.mrf.mxu0
        %v638 = vadd.f32 %v356, %v637
        %v639 = vpop.f32.mrf.mxu0
        %v640 = vadd.f32 %v360, %v639
        %v641 = vpop.f32.mrf.mxu0
        %v642 = vadd.f32 %v356, %v641
        %v643 = vpop.f32.mrf.mxu0
        %v644 = vadd.f32 %v360, %v643
        %645 = vmatprep.mubr.bf16.mxu0 0
        %646 = vmatmul.mubr.bf16.gmra.mxu0 %v428
        %v647 = vpop.f32.mrf.mxu0
        %v648 = vadd.f32 %v356, %v647
        %v649 = vpop.f32.mrf.mxu0
        %v650 = vadd.f32 %v360, %v649
        %v651 = vpop.f32.mrf.mxu0
        %v652 = vadd.f32 %v356, %v651
        %v653 = vpop.f32.mrf.mxu0
        %v654 = vadd.f32 %v360, %v653
        %655 = vdwg.mxu0
        %v656 = vmax.f32 %v465, 0.0
        %v657 = vmax.f32 %v467, 0.0
        %v658 = vmax.f32 %v578, 0.0
        %v659 = vmax.f32 %v580, 0.0
        %v660 = vmax.f32 %v469, 0.0
        %v661 = vmax.f32 %v471, 0.0
        %v662 = vmax.f32 %v582, 0.0
        %v663 = vmax.f32 %v584, 0.0
        %v664 = vmax.f32 %v475, 0.0
        %v665 = vmax.f32 %v477, 0.0
        %v666 = vmax.f32 %v588, 0.0
        %v667 = vmax.f32 %v590, 0.0
        %v668 = vmax.f32 %v479, 0.0
        %v669 = vmax.f32 %v481, 0.0
        %v670 = vmax.f32 %v592, 0.0
        %v671 = vmax.f32 %v594, 0.0
        %v672 = vmax.f32 %v485, 0.0
        %v673 = vmax.f32 %v487, 0.0
        %v674 = vmax.f32 %v598, 0.0
        %v675 = vmax.f32 %v600, 0.0
        %v676 = vmax.f32 %v489, 0.0
        %v677 = vmax.f32 %v491, 0.0
        %v678 = vmax.f32 %v602, 0.0
        %v679 = vmax.f32 %v604, 0.0
        %v680 = vmax.f32 %v495, 0.0
        %v681 = vmax.f32 %v497, 0.0
        %v682 = vmax.f32 %v608, 0.0
        %v683 = vmax.f32 %v610, 0.0
        %v684 = vmax.f32 %v499, 0.0
        %v685 = vmax.f32 %v501, 0.0
        %v686 = vmax.f32 %v612, 0.0
        %v687 = vmax.f32 %v614, 0.0
        %v688 = vmax.f32 %v505, 0.0
        %v689 = vmax.f32 %v507, 0.0
        %v690 = vmax.f32 %v618, 0.0
        %v691 = vmax.f32 %v620, 0.0
        %v692 = vmax.f32 %v509, 0.0
        %v693 = vmax.f32 %v511, 0.0
        %v694 = vmax.f32 %v622, 0.0
        %v695 = vmax.f32 %v624, 0.0
        %v696 = vmax.f32 %v515, 0.0
        %v697 = vmax.f32 %v517, 0.0
        %v698 = vmax.f32 %v628, 0.0
        %v699 = vmax.f32 %v630, 0.0
        %v700 = vmax.f32 %v519, 0.0
        %v701 = vmax.f32 %v521, 0.0
        %v702 = vmax.f32 %v632, 0.0
        %v703 = vmax.f32 %v634, 0.0
        %v704 = vmax.f32 %v525, 0.0
        %v705 = vmax.f32 %v527, 0.0
        %v706 = vmax.f32 %v638, 0.0
        %v707 = vmax.f32 %v640, 0.0
        %v708 = vmax.f32 %v529, 0.0
        %v709 = vmax.f32 %v531, 0.0
        %v710 = vmax.f32 %v642, 0.0
        %v711 = vmax.f32 %v644, 0.0
        %v712 = vmax.f32 %v535, 0.0
        %v713 = vmax.f32 %v537, 0.0
        %v714 = vmax.f32 %v648, 0.0
        %v715 = vmax.f32 %v650, 0.0
        %v716 = vmax.f32 %v539, 0.0
        %v717 = vmax.f32 %v541, 0.0
        %v718 = vmax.f32 %v652, 0.0
        %v719 = vmax.f32 %v654, 0.0
        %v720 = vpack.c.bf16 %v660, %v656
        %v721 = vpack.c.bf16 %v661, %v657
        %v722 = vpack.c.bf16 %v662, %v658
        %v723 = vpack.c.bf16 %v663, %v659
        %v724 = vpack.c.bf16 %v668, %v664
        %v725 = vpack.c.bf16 %v669, %v665
        %v726 = vpack.c.bf16 %v670, %v666
        %v727 = vpack.c.bf16 %v671, %v667
        %v728 = vpack.c.bf16 %v676, %v672
        %v729 = vpack.c.bf16 %v677, %v673
        %v730 = vpack.c.bf16 %v678, %v674
        %v731 = vpack.c.bf16 %v679, %v675
        %v732 = vpack.c.bf16 %v684, %v680
        %v733 = vpack.c.bf16 %v685, %v681
        %v734 = vpack.c.bf16 %v686, %v682
        %v735 = vpack.c.bf16 %v687, %v683
        %v736 = vpack.c.bf16 %v692, %v688
        %v737 = vpack.c.bf16 %v693, %v689
        %v738 = vpack.c.bf16 %v694, %v690
        %v739 = vpack.c.bf16 %v695, %v691
        %v740 = vpack.c.bf16 %v700, %v696
        %v741 = vpack.c.bf16 %v701, %v697
        %v742 = vpack.c.bf16 %v702, %v698
        %v743 = vpack.c.bf16 %v703, %v699
        %v744 = vpack.c.bf16 %v708, %v704
        %v745 = vpack.c.bf16 %v709, %v705
        %v746 = vpack.c.bf16 %v710, %v706
        %v747 = vpack.c.bf16 %v711, %v707
        %v748 = vpack.c.bf16 %v716, %v712
        %v749 = vpack.c.bf16 %v717, %v713
        %v750 = vpack.c.bf16 %v718, %v714
        %v751 = vpack.c.bf16 %v719, %v715
        %v752 = vld [vmem:[#allocation2] sm:$0xff]
        %v753 = vld [vmem:[#allocation2 + $0x8] sm:$0xff]
        %v754 = vld [vmem:[#allocation2 + $0x10] sm:$0xff]
        %v755 = vld [vmem:[#allocation2 + $0x18] sm:$0xff]
        %v756 = vld [vmem:[#allocation2 + $0x20] sm:$0xff]
        %v757 = vld [vmem:[#allocation2 + $0x28] sm:$0xff]
        %v758 = vld [vmem:[#allocation2 + $0x30] sm:$0xff]
        %v759 = vld [vmem:[#allocation2 + $0x38] sm:$0xff]
        %v760 = vld [vmem:[#allocation2 + $0x40] sm:$0xff]
        %v761 = vld [vmem:[#allocation2 + $0x48] sm:$0xff]
        %v762 = vld [vmem:[#allocation2 + $0x50] sm:$0xff]
        %v763 = vld [vmem:[#allocation2 + $0x58] sm:$0xff]
        %v764 = vld [vmem:[#allocation2 + $0x60] sm:$0xff]
        %v765 = vld [vmem:[#allocation2 + $0x68] sm:$0xff]
        %v766 = vld [vmem:[#allocation2 + $0x70] sm:$0xff]
        %v767 = vld [vmem:[#allocation2 + $0x78] sm:$0xff]
        %v768 = vld [vmem:[#allocation2 + $0x80] sm:$0xff]
        %v769 = vld [vmem:[#allocation2 + $0x88] sm:$0xff]
        %v770 = vld [vmem:[#allocation2 + $0x90] sm:$0xff]
        %v771 = vld [vmem:[#allocation2 + $0x98] sm:$0xff]
        %v772 = vld [vmem:[#allocation2 + $0xa0] sm:$0xff]
        %v773 = vld [vmem:[#allocation2 + $0xa8] sm:$0xff]
        %v774 = vld [vmem:[#allocation2 + $0xb0] sm:$0xff]
        %v775 = vld [vmem:[#allocation2 + $0xb8] sm:$0xff]
        %v776 = vld [vmem:[#allocation2 + $0xc0] sm:$0xff]
        %v777 = vld [vmem:[#allocation2 + $0xc8] sm:$0xff]
        %v778 = vld [vmem:[#allocation2 + $0xd0] sm:$0xff]
        %v779 = vld [vmem:[#allocation2 + $0xd8] sm:$0xff]
        %v780 = vld [vmem:[#allocation2 + $0xe0] sm:$0xff]
        %v781 = vld [vmem:[#allocation2 + $0xe8] sm:$0xff]
        %v782 = vld [vmem:[#allocation2 + $0xf0] sm:$0xff]
        %v783 = vld [vmem:[#allocation2 + $0xf8] sm:$0xff]
        %v784 = vld [vmem:[#allocation2 + $0x100] sm:$0xff]
        %v785 = vld [vmem:[#allocation2 + $0x108] sm:$0xff]
        %v786 = vld [vmem:[#allocation2 + $0x110] sm:$0xff]
        %v787 = vld [vmem:[#allocation2 + $0x118] sm:$0xff]
        %v788 = vld [vmem:[#allocation2 + $0x120] sm:$0xff]
        %v789 = vld [vmem:[#allocation2 + $0x128] sm:$0xff]
        %v790 = vld [vmem:[#allocation2 + $0x130] sm:$0xff]
        %v791 = vld [vmem:[#allocation2 + $0x138] sm:$0xff]
        %v792 = vld [vmem:[#allocation2 + $0x140] sm:$0xff]
        %v793 = vld [vmem:[#allocation2 + $0x148] sm:$0xff]
        %v794 = vld [vmem:[#allocation2 + $0x150] sm:$0xff]
        %v795 = vld [vmem:[#allocation2 + $0x158] sm:$0xff]
        %v796 = vld [vmem:[#allocation2 + $0x160] sm:$0xff]
        %v797 = vld [vmem:[#allocation2 + $0x168] sm:$0xff]
        %v798 = vld [vmem:[#allocation2 + $0x170] sm:$0xff]
        %v799 = vld [vmem:[#allocation2 + $0x178] sm:$0xff]
        %v800 = vld [vmem:[#allocation2 + $0x180] sm:$0xff]
        %v801 = vld [vmem:[#allocation2 + $0x188] sm:$0xff]
        %v802 = vld [vmem:[#allocation2 + $0x190] sm:$0xff]
        %v803 = vld [vmem:[#allocation2 + $0x198] sm:$0xff]
        %v804 = vld [vmem:[#allocation2 + $0x1a0] sm:$0xff]
        %v805 = vld [vmem:[#allocation2 + $0x1a8] sm:$0xff]
        %v806 = vld [vmem:[#allocation2 + $0x1b0] sm:$0xff]
        %v807 = vld [vmem:[#allocation2 + $0x1b8] sm:$0xff]
        %v808 = vld [vmem:[#allocation2 + $0x1c0] sm:$0xff]
        %v809 = vld [vmem:[#allocation2 + $0x1c8] sm:$0xff]
        %v810 = vld [vmem:[#allocation2 + $0x1d0] sm:$0xff]
        %v811 = vld [vmem:[#allocation2 + $0x1d8] sm:$0xff]
        %v812 = vld [vmem:[#allocation2 + $0x1e0] sm:$0xff]
        %v813 = vld [vmem:[#allocation2 + $0x1e8] sm:$0xff]
        %v814 = vld [vmem:[#allocation2 + $0x1f0] sm:$0xff]
        %v815 = vld [vmem:[#allocation2 + $0x1f8] sm:$0xff]
        %v816 = vld [vmem:[#allocation2 + $0x200] sm:$0xff]
        %v817 = vld [vmem:[#allocation2 + $0x208] sm:$0xff]
        %v818 = vld [vmem:[#allocation2 + $0x210] sm:$0xff]
        %v819 = vld [vmem:[#allocation2 + $0x218] sm:$0xff]
        %v820 = vld [vmem:[#allocation2 + $0x220] sm:$0xff]
        %v821 = vld [vmem:[#allocation2 + $0x228] sm:$0xff]
        %v822 = vld [vmem:[#allocation2 + $0x230] sm:$0xff]
        %v823 = vld [vmem:[#allocation2 + $0x238] sm:$0xff]
        %v824 = vld [vmem:[#allocation2 + $0x240] sm:$0xff]
        %v825 = vld [vmem:[#allocation2 + $0x248] sm:$0xff]
        %v826 = vld [vmem:[#allocation2 + $0x250] sm:$0xff]
        %v827 = vld [vmem:[#allocation2 + $0x258] sm:$0xff]
        %v828 = vld [vmem:[#allocation2 + $0x260] sm:$0xff]
        %v829 = vld [vmem:[#allocation2 + $0x268] sm:$0xff]
        %v830 = vld [vmem:[#allocation2 + $0x270] sm:$0xff]
        %v831 = vld [vmem:[#allocation2 + $0x278] sm:$0xff]
        %v832 = vld [vmem:[#allocation2 + $0x280] sm:$0xff]
        %v833 = vld [vmem:[#allocation2 + $0x288] sm:$0xff]
        %v834 = vld [vmem:[#allocation2 + $0x290] sm:$0xff]
        %v835 = vld [vmem:[#allocation2 + $0x298] sm:$0xff]
        %v836 = vld [vmem:[#allocation2 + $0x2a0] sm:$0xff]
        %v837 = vld [vmem:[#allocation2 + $0x2a8] sm:$0xff]
        %v838 = vld [vmem:[#allocation2 + $0x2b0] sm:$0xff]
        %v839 = vld [vmem:[#allocation2 + $0x2b8] sm:$0xff]
        %v840 = vld [vmem:[#allocation2 + $0x2c0] sm:$0xff]
        %v841 = vld [vmem:[#allocation2 + $0x2c8] sm:$0xff]
        %v842 = vld [vmem:[#allocation2 + $0x2d0] sm:$0xff]
        %v843 = vld [vmem:[#allocation2 + $0x2d8] sm:$0xff]
        %v844 = vld [vmem:[#allocation2 + $0x2e0] sm:$0xff]
        %v845 = vld [vmem:[#allocation2 + $0x2e8] sm:$0xff]
        %v846 = vld [vmem:[#allocation2 + $0x2f0] sm:$0xff]
        %v847 = vld [vmem:[#allocation2 + $0x2f8] sm:$0xff]
        %v848 = vld [vmem:[#allocation2 + $0x300] sm:$0xff]
        %v849 = vld [vmem:[#allocation2 + $0x308] sm:$0xff]
        %v850 = vld [vmem:[#allocation2 + $0x310] sm:$0xff]
        %v851 = vld [vmem:[#allocation2 + $0x318] sm:$0xff]
        %v852 = vld [vmem:[#allocation2 + $0x320] sm:$0xff]
        %v853 = vld [vmem:[#allocation2 + $0x328] sm:$0xff]
        %v854 = vld [vmem:[#allocation2 + $0x330] sm:$0xff]
        %v855 = vld [vmem:[#allocation2 + $0x338] sm:$0xff]
        %v856 = vld [vmem:[#allocation2 + $0x340] sm:$0xff]
        %v857 = vld [vmem:[#allocation2 + $0x348] sm:$0xff]
        %v858 = vld [vmem:[#allocation2 + $0x350] sm:$0xff]
        %v859 = vld [vmem:[#allocation2 + $0x358] sm:$0xff]
        %v860 = vld [vmem:[#allocation2 + $0x360] sm:$0xff]
        %v861 = vld [vmem:[#allocation2 + $0x368] sm:$0xff]
        %v862 = vld [vmem:[#allocation2 + $0x370] sm:$0xff]
        %v863 = vld [vmem:[#allocation2 + $0x378] sm:$0xff]
        %v864 = vld [vmem:[#allocation2 + $0x380] sm:$0xff]
        %v865 = vld [vmem:[#allocation2 + $0x388] sm:$0xff]
        %v866 = vld [vmem:[#allocation2 + $0x390] sm:$0xff]
        %v867 = vld [vmem:[#allocation2 + $0x398] sm:$0xff]
        %v868 = vld [vmem:[#allocation2 + $0x3a0] sm:$0xff]
        %v869 = vld [vmem:[#allocation2 + $0x3a8] sm:$0xff]
        %v870 = vld [vmem:[#allocation2 + $0x3b0] sm:$0xff]
        %v871 = vld [vmem:[#allocation2 + $0x3b8] sm:$0xff]
        %v872 = vld [vmem:[#allocation2 + $0x3c0] sm:$0xff]
        %v873 = vld [vmem:[#allocation2 + $0x3c8] sm:$0xff]
        %v874 = vld [vmem:[#allocation2 + $0x3d0] sm:$0xff]
        %v875 = vld [vmem:[#allocation2 + $0x3d8] sm:$0xff]
        %v876 = vld [vmem:[#allocation2 + $0x3e0] sm:$0xff]
        %v877 = vld [vmem:[#allocation2 + $0x3e8] sm:$0xff]
        %v878 = vld [vmem:[#allocation2 + $0x3f0] sm:$0xff]
        %v879 = vld [vmem:[#allocation2 + $0x3f8] sm:$0xff]
        %v880 = vld [vmem:[#allocation2 + $0x400] sm:$0xff]
        %v881 = vld [vmem:[#allocation2 + $0x408] sm:$0xff]
        %v882 = vld [vmem:[#allocation2 + $0x410] sm:$0xff]
        %v883 = vld [vmem:[#allocation2 + $0x418] sm:$0xff]
        %v884 = vld [vmem:[#allocation2 + $0x420] sm:$0xff]
        %v885 = vld [vmem:[#allocation2 + $0x428] sm:$0xff]
        %v886 = vld [vmem:[#allocation2 + $0x430] sm:$0xff]
        %v887 = vld [vmem:[#allocation2 + $0x438] sm:$0xff]
        %v888 = vld [vmem:[#allocation2 + $0x440] sm:$0xff]
        %v889 = vld [vmem:[#allocation2 + $0x448] sm:$0xff]
        %v890 = vld [vmem:[#allocation2 + $0x450] sm:$0xff]
        %v891 = vld [vmem:[#allocation2 + $0x458] sm:$0xff]
        %v892 = vld [vmem:[#allocation2 + $0x460] sm:$0xff]
        %v893 = vld [vmem:[#allocation2 + $0x468] sm:$0xff]
        %v894 = vld [vmem:[#allocation2 + $0x470] sm:$0xff]
        %v895 = vld [vmem:[#allocation2 + $0x478] sm:$0xff]
        %v896 = vld [vmem:[#allocation2 + $0x480] sm:$0xff]
        %v897 = vld [vmem:[#allocation2 + $0x488] sm:$0xff]
        %v898 = vld [vmem:[#allocation2 + $0x490] sm:$0xff]
        %v899 = vld [vmem:[#allocation2 + $0x498] sm:$0xff]
        %v900 = vld [vmem:[#allocation2 + $0x4a0] sm:$0xff]
        %v901 = vld [vmem:[#allocation2 + $0x4a8] sm:$0xff]
        %v902 = vld [vmem:[#allocation2 + $0x4b0] sm:$0xff]
        %v903 = vld [vmem:[#allocation2 + $0x4b8] sm:$0xff]
        %v904 = vld [vmem:[#allocation2 + $0x4c0] sm:$0xff]
        %v905 = vld [vmem:[#allocation2 + $0x4c8] sm:$0xff]
        %v906 = vld [vmem:[#allocation2 + $0x4d0] sm:$0xff]
        %v907 = vld [vmem:[#allocation2 + $0x4d8] sm:$0xff]
        %v908 = vld [vmem:[#allocation2 + $0x4e0] sm:$0xff]
        %v909 = vld [vmem:[#allocation2 + $0x4e8] sm:$0xff]
        %v910 = vld [vmem:[#allocation2 + $0x4f0] sm:$0xff]
        %v911 = vld [vmem:[#allocation2 + $0x4f8] sm:$0xff]
        %v912 = vld [vmem:[#allocation2 + $0x500] sm:$0xff]
        %v913 = vld [vmem:[#allocation2 + $0x508] sm:$0xff]
        %v914 = vld [vmem:[#allocation2 + $0x510] sm:$0xff]
        %v915 = vld [vmem:[#allocation2 + $0x518] sm:$0xff]
        %v916 = vld [vmem:[#allocation2 + $0x520] sm:$0xff]
        %v917 = vld [vmem:[#allocation2 + $0x528] sm:$0xff]
        %v918 = vld [vmem:[#allocation2 + $0x530] sm:$0xff]
        %v919 = vld [vmem:[#allocation2 + $0x538] sm:$0xff]
        %v920 = vld [vmem:[#allocation2 + $0x540] sm:$0xff]
        %v921 = vld [vmem:[#allocation2 + $0x548] sm:$0xff]
        %v922 = vld [vmem:[#allocation2 + $0x550] sm:$0xff]
        %v923 = vld [vmem:[#allocation2 + $0x558] sm:$0xff]
        %v924 = vld [vmem:[#allocation2 + $0x560] sm:$0xff]
        %v925 = vld [vmem:[#allocation2 + $0x568] sm:$0xff]
        %v926 = vld [vmem:[#allocation2 + $0x570] sm:$0xff]
        %v927 = vld [vmem:[#allocation2 + $0x578] sm:$0xff]
        %v928 = vld [vmem:[#allocation2 + $0x580] sm:$0xff]
        %v929 = vld [vmem:[#allocation2 + $0x588] sm:$0xff]
        %v930 = vld [vmem:[#allocation2 + $0x590] sm:$0xff]
        %v931 = vld [vmem:[#allocation2 + $0x598] sm:$0xff]
        %v932 = vld [vmem:[#allocation2 + $0x5a0] sm:$0xff]
        %v933 = vld [vmem:[#allocation2 + $0x5a8] sm:$0xff]
        %v934 = vld [vmem:[#allocation2 + $0x5b0] sm:$0xff]
        %v935 = vld [vmem:[#allocation2 + $0x5b8] sm:$0xff]
        %v936 = vld [vmem:[#allocation2 + $0x5c0] sm:$0xff]
        %v937 = vld [vmem:[#allocation2 + $0x5c8] sm:$0xff]
        %v938 = vld [vmem:[#allocation2 + $0x5d0] sm:$0xff]
        %v939 = vld [vmem:[#allocation2 + $0x5d8] sm:$0xff]
        %v940 = vld [vmem:[#allocation2 + $0x5e0] sm:$0xff]
        %v941 = vld [vmem:[#allocation2 + $0x5e8] sm:$0xff]
        %v942 = vld [vmem:[#allocation2 + $0x5f0] sm:$0xff]
        %v943 = vld [vmem:[#allocation2 + $0x5f8] sm:$0xff]
        %v944 = vld [vmem:[#allocation2 + $0x600] sm:$0xff]
        %v945 = vld [vmem:[#allocation2 + $0x608] sm:$0xff]
        %v946 = vld [vmem:[#allocation2 + $0x610] sm:$0xff]
        %v947 = vld [vmem:[#allocation2 + $0x618] sm:$0xff]
        %v948 = vld [vmem:[#allocation2 + $0x620] sm:$0xff]
        %v949 = vld [vmem:[#allocation2 + $0x628] sm:$0xff]
        %v950 = vld [vmem:[#allocation2 + $0x630] sm:$0xff]
        %v951 = vld [vmem:[#allocation2 + $0x638] sm:$0xff]
        %v952 = vld [vmem:[#allocation2 + $0x640] sm:$0xff]
        %v953 = vld [vmem:[#allocation2 + $0x648] sm:$0xff]
        %v954 = vld [vmem:[#allocation2 + $0x650] sm:$0xff]
        %v955 = vld [vmem:[#allocation2 + $0x658] sm:$0xff]
        %v956 = vld [vmem:[#allocation2 + $0x660] sm:$0xff]
        %v957 = vld [vmem:[#allocation2 + $0x668] sm:$0xff]
        %v958 = vld [vmem:[#allocation2 + $0x670] sm:$0xff]
        %v959 = vld [vmem:[#allocation2 + $0x678] sm:$0xff]
        %v960 = vld [vmem:[#allocation2 + $0x680] sm:$0xff]
        %v961 = vld [vmem:[#allocation2 + $0x688] sm:$0xff]
        %v962 = vld [vmem:[#allocation2 + $0x690] sm:$0xff]
        %v963 = vld [vmem:[#allocation2 + $0x698] sm:$0xff]
        %v964 = vld [vmem:[#allocation2 + $0x6a0] sm:$0xff]
        %v965 = vld [vmem:[#allocation2 + $0x6a8] sm:$0xff]
        %v966 = vld [vmem:[#allocation2 + $0x6b0] sm:$0xff]
        %v967 = vld [vmem:[#allocation2 + $0x6b8] sm:$0xff]
        %v968 = vld [vmem:[#allocation2 + $0x6c0] sm:$0xff]
        %v969 = vld [vmem:[#allocation2 + $0x6c8] sm:$0xff]
        %v970 = vld [vmem:[#allocation2 + $0x6d0] sm:$0xff]
        %v971 = vld [vmem:[#allocation2 + $0x6d8] sm:$0xff]
        %v972 = vld [vmem:[#allocation2 + $0x6e0] sm:$0xff]
        %v973 = vld [vmem:[#allocation2 + $0x6e8] sm:$0xff]
        %v974 = vld [vmem:[#allocation2 + $0x6f0] sm:$0xff]
        %v975 = vld [vmem:[#allocation2 + $0x6f8] sm:$0xff]
        %v976 = vld [vmem:[#allocation2 + $0x700] sm:$0xff]
        %v977 = vld [vmem:[#allocation2 + $0x708] sm:$0xff]
        %v978 = vld [vmem:[#allocation2 + $0x710] sm:$0xff]
        %v979 = vld [vmem:[#allocation2 + $0x718] sm:$0xff]
        %v980 = vld [vmem:[#allocation2 + $0x720] sm:$0xff]
        %v981 = vld [vmem:[#allocation2 + $0x728] sm:$0xff]
        %v982 = vld [vmem:[#allocation2 + $0x730] sm:$0xff]
        %v983 = vld [vmem:[#allocation2 + $0x738] sm:$0xff]
        %v984 = vld [vmem:[#allocation2 + $0x740] sm:$0xff]
        %v985 = vld [vmem:[#allocation2 + $0x748] sm:$0xff]
        %v986 = vld [vmem:[#allocation2 + $0x750] sm:$0xff]
        %v987 = vld [vmem:[#allocation2 + $0x758] sm:$0xff]
        %v988 = vld [vmem:[#allocation2 + $0x760] sm:$0xff]
        %v989 = vld [vmem:[#allocation2 + $0x768] sm:$0xff]
        %v990 = vld [vmem:[#allocation2 + $0x770] sm:$0xff]
        %v991 = vld [vmem:[#allocation2 + $0x778] sm:$0xff]
        %v992 = vld [vmem:[#allocation2 + $0x780] sm:$0xff]
        %v993 = vld [vmem:[#allocation2 + $0x788] sm:$0xff]
        %v994 = vld [vmem:[#allocation2 + $0x790] sm:$0xff]
        %v995 = vld [vmem:[#allocation2 + $0x798] sm:$0xff]
        %v996 = vld [vmem:[#allocation2 + $0x7a0] sm:$0xff]
        %v997 = vld [vmem:[#allocation2 + $0x7a8] sm:$0xff]
        %v998 = vld [vmem:[#allocation2 + $0x7b0] sm:$0xff]
        %v999 = vld [vmem:[#allocation2 + $0x7b8] sm:$0xff]
        %v1000 = vld [vmem:[#allocation2 + $0x7c0] sm:$0xff]
        %v1001 = vld [vmem:[#allocation2 + $0x7c8] sm:$0xff]
        %v1002 = vld [vmem:[#allocation2 + $0x7d0] sm:$0xff]
        %v1003 = vld [vmem:[#allocation2 + $0x7d8] sm:$0xff]
        %v1004 = vld [vmem:[#allocation2 + $0x7e0] sm:$0xff]
        %v1005 = vld [vmem:[#allocation2 + $0x7e8] sm:$0xff]
        %v1006 = vld [vmem:[#allocation2 + $0x7f0] sm:$0xff]
        %v1007 = vld [vmem:[#allocation2 + $0x7f8] sm:$0xff]
        %v1008 = vld [vmem:[%s4] sm:$0xff]
        %v1010 = vlaneseq
        %v1011 = vshrl.u32 %v1010, 7
        %v1012 = vsub.s32 0, %v1011
        %v1013 = vrot.slane %v1008, %v1012
        %v1014 = vlaneseq
        %v1015 = vshrl.u32 %v1014, 7
        %v1016 = vsub.s32 1, %v1015
        %v1017 = vrot.slane %v1008, %v1016
        %v1018 = vlaneseq
        %v1019 = vshrl.u32 %v1018, 7
        %v1020 = vsub.s32 2, %v1019
        %v1021 = vrot.slane %v1008, %v1020
        %v1022 = vlaneseq
        %v1023 = vshrl.u32 %v1022, 7
        %v1024 = vsub.s32 3, %v1023
        %v1025 = vrot.slane %v1008, %v1024
        %v1026 = vlaneseq
        %v1027 = vshrl.u32 %v1026, 7
        %v1028 = vsub.s32 4, %v1027
        %v1029 = vrot.slane %v1008, %v1028
        %v1030 = vlaneseq
        %v1031 = vshrl.u32 %v1030, 7
        %v1032 = vsub.s32 5, %v1031
        %v1033 = vrot.slane %v1008, %v1032
        %v1034 = vlaneseq
        %v1035 = vshrl.u32 %v1034, 7
        %v1036 = vsub.s32 6, %v1035
        %v1037 = vrot.slane %v1008, %v1036
        %v1038 = vlaneseq
        %v1039 = vshrl.u32 %v1038, 7
        %v1040 = vsub.s32 7, %v1039
        %v1041 = vrot.slane %v1008, %v1040
        %v1306 = vunpack.c.l.b16 %v752
        %v1307 = vunpack.c.h.b16 %v752
        %v1308 = vunpack.c.l.b16 %v753
        %v1309 = vunpack.c.h.b16 %v753
        %v1310 = vunpack.c.l.b16 %v754
        %v1311 = vunpack.c.h.b16 %v754
        %v1312 = vunpack.c.l.b16 %v755
        %v1313 = vunpack.c.h.b16 %v755
        %v1314 = vunpack.c.l.b16 %v756
        %v1315 = vunpack.c.h.b16 %v756
        %v1316 = vunpack.c.l.b16 %v757
        %v1317 = vunpack.c.h.b16 %v757
        %v1318 = vunpack.c.l.b16 %v758
        %v1319 = vunpack.c.h.b16 %v758
        %v1320 = vunpack.c.l.b16 %v759
        %v1321 = vunpack.c.h.b16 %v759
        %v1322 = vunpack.c.l.b16 %v760
        %v1323 = vunpack.c.h.b16 %v760
        %v1324 = vunpack.c.l.b16 %v761
        %v1325 = vunpack.c.h.b16 %v761
        %v1326 = vunpack.c.l.b16 %v762
        %v1327 = vunpack.c.h.b16 %v762
        %v1328 = vunpack.c.l.b16 %v763
        %v1329 = vunpack.c.h.b16 %v763
        %v1330 = vunpack.c.l.b16 %v764
        %v1331 = vunpack.c.h.b16 %v764
        %v1332 = vunpack.c.l.b16 %v765
        %v1333 = vunpack.c.h.b16 %v765
        %v1334 = vunpack.c.l.b16 %v766
        %v1335 = vunpack.c.h.b16 %v766
        %v1336 = vunpack.c.l.b16 %v767
        %v1337 = vunpack.c.h.b16 %v767
        %v1338 = vunpack.c.l.b16 %v768
        %v1339 = vunpack.c.h.b16 %v768
        %v1340 = vunpack.c.l.b16 %v769
        %v1341 = vunpack.c.h.b16 %v769
        %v1342 = vunpack.c.l.b16 %v770
        %v1343 = vunpack.c.h.b16 %v770
        %v1344 = vunpack.c.l.b16 %v771
        %v1345 = vunpack.c.h.b16 %v771
        %v1346 = vunpack.c.l.b16 %v772
        %v1347 = vunpack.c.h.b16 %v772
        %v1348 = vunpack.c.l.b16 %v773
        %v1349 = vunpack.c.h.b16 %v773
        %v1350 = vunpack.c.l.b16 %v774
        %v1351 = vunpack.c.h.b16 %v774
        %v1352 = vunpack.c.l.b16 %v775
        %v1353 = vunpack.c.h.b16 %v775
        %v1354 = vunpack.c.l.b16 %v776
        %v1355 = vunpack.c.h.b16 %v776
        %v1356 = vunpack.c.l.b16 %v777
        %v1357 = vunpack.c.h.b16 %v777
        %v1358 = vunpack.c.l.b16 %v778
        %v1359 = vunpack.c.h.b16 %v778
        %v1360 = vunpack.c.l.b16 %v779
        %v1361 = vunpack.c.h.b16 %v779
        %v1362 = vunpack.c.l.b16 %v780
        %v1363 = vunpack.c.h.b16 %v780
        %v1364 = vunpack.c.l.b16 %v781
        %v1365 = vunpack.c.h.b16 %v781
        %v1366 = vunpack.c.l.b16 %v782
        %v1367 = vunpack.c.h.b16 %v782
        %v1368 = vunpack.c.l.b16 %v783
        %v1369 = vunpack.c.h.b16 %v783
        %v1370 = vunpack.c.l.b16 %v784
        %v1371 = vunpack.c.h.b16 %v784
        %v1372 = vunpack.c.l.b16 %v785
        %v1373 = vunpack.c.h.b16 %v785
        %v1374 = vunpack.c.l.b16 %v786
        %v1375 = vunpack.c.h.b16 %v786
        %v1376 = vunpack.c.l.b16 %v787
        %v1377 = vunpack.c.h.b16 %v787
        %v1378 = vunpack.c.l.b16 %v788
        %v1379 = vunpack.c.h.b16 %v788
        %v1380 = vunpack.c.l.b16 %v789
        %v1381 = vunpack.c.h.b16 %v789
        %v1382 = vunpack.c.l.b16 %v790
        %v1383 = vunpack.c.h.b16 %v790
        %v1384 = vunpack.c.l.b16 %v791
        %v1385 = vunpack.c.h.b16 %v791
        %v1386 = vunpack.c.l.b16 %v792
        %v1387 = vunpack.c.h.b16 %v792
        %v1388 = vunpack.c.l.b16 %v793
        %v1389 = vunpack.c.h.b16 %v793
        %v1390 = vunpack.c.l.b16 %v794
        %v1391 = vunpack.c.h.b16 %v794
        %v1392 = vunpack.c.l.b16 %v795
        %v1393 = vunpack.c.h.b16 %v795
        %v1394 = vunpack.c.l.b16 %v796
        %v1395 = vunpack.c.h.b16 %v796
        %v1396 = vunpack.c.l.b16 %v797
        %v1397 = vunpack.c.h.b16 %v797
        %v1398 = vunpack.c.l.b16 %v798
        %v1399 = vunpack.c.h.b16 %v798
        %v1400 = vunpack.c.l.b16 %v799
        %v1401 = vunpack.c.h.b16 %v799
        %v1402 = vunpack.c.l.b16 %v800
        %v1403 = vunpack.c.h.b16 %v800
        %v1404 = vunpack.c.l.b16 %v801
        %v1405 = vunpack.c.h.b16 %v801
        %v1406 = vunpack.c.l.b16 %v802
        %v1407 = vunpack.c.h.b16 %v802
        %v1408 = vunpack.c.l.b16 %v803
        %v1409 = vunpack.c.h.b16 %v803
        %v1410 = vunpack.c.l.b16 %v804
        %v1411 = vunpack.c.h.b16 %v804
        %v1412 = vunpack.c.l.b16 %v805
        %v1413 = vunpack.c.h.b16 %v805
        %v1414 = vunpack.c.l.b16 %v806
        %v1415 = vunpack.c.h.b16 %v806
        %v1416 = vunpack.c.l.b16 %v807
        %v1417 = vunpack.c.h.b16 %v807
        %v1418 = vunpack.c.l.b16 %v808
        %v1419 = vunpack.c.h.b16 %v808
        %v1420 = vunpack.c.l.b16 %v809
        %v1421 = vunpack.c.h.b16 %v809
        %v1422 = vunpack.c.l.b16 %v810
        %v1423 = vunpack.c.h.b16 %v810
        %v1424 = vunpack.c.l.b16 %v811
        %v1425 = vunpack.c.h.b16 %v811
        %v1426 = vunpack.c.l.b16 %v812
        %v1427 = vunpack.c.h.b16 %v812
        %v1428 = vunpack.c.l.b16 %v813
        %v1429 = vunpack.c.h.b16 %v813
        %v1430 = vunpack.c.l.b16 %v814
        %v1431 = vunpack.c.h.b16 %v814
        %v1432 = vunpack.c.l.b16 %v815
        %v1433 = vunpack.c.h.b16 %v815
        %v1434 = vunpack.c.l.b16 %v816
        %v1435 = vunpack.c.h.b16 %v816
        %v1436 = vunpack.c.l.b16 %v817
        %v1437 = vunpack.c.h.b16 %v817
        %v1438 = vunpack.c.l.b16 %v818
        %v1439 = vunpack.c.h.b16 %v818
        %v1440 = vunpack.c.l.b16 %v819
        %v1441 = vunpack.c.h.b16 %v819
        %v1442 = vunpack.c.l.b16 %v820
        %v1443 = vunpack.c.h.b16 %v820
        %v1444 = vunpack.c.l.b16 %v821
        %v1445 = vunpack.c.h.b16 %v821
        %v1446 = vunpack.c.l.b16 %v822
        %v1447 = vunpack.c.h.b16 %v822
        %v1448 = vunpack.c.l.b16 %v823
        %v1449 = vunpack.c.h.b16 %v823
        %v1450 = vunpack.c.l.b16 %v824
        %v1451 = vunpack.c.h.b16 %v824
        %v1452 = vunpack.c.l.b16 %v825
        %v1453 = vunpack.c.h.b16 %v825
        %v1454 = vunpack.c.l.b16 %v826
        %v1455 = vunpack.c.h.b16 %v826
        %v1456 = vunpack.c.l.b16 %v827
        %v1457 = vunpack.c.h.b16 %v827
        %v1458 = vunpack.c.l.b16 %v828
        %v1459 = vunpack.c.h.b16 %v828
        %v1460 = vunpack.c.l.b16 %v829
        %v1461 = vunpack.c.h.b16 %v829
        %v1462 = vunpack.c.l.b16 %v830
        %v1463 = vunpack.c.h.b16 %v830
        %v1464 = vunpack.c.l.b16 %v831
        %v1465 = vunpack.c.h.b16 %v831
        %v1466 = vunpack.c.l.b16 %v832
        %v1467 = vunpack.c.h.b16 %v832
        %v1468 = vunpack.c.l.b16 %v833
        %v1469 = vunpack.c.h.b16 %v833
        %v1470 = vunpack.c.l.b16 %v834
        %v1471 = vunpack.c.h.b16 %v834
        %v1472 = vunpack.c.l.b16 %v835
        %v1473 = vunpack.c.h.b16 %v835
        %v1474 = vunpack.c.l.b16 %v836
        %v1475 = vunpack.c.h.b16 %v836
        %v1476 = vunpack.c.l.b16 %v837
        %v1477 = vunpack.c.h.b16 %v837
        %v1478 = vunpack.c.l.b16 %v838
        %v1479 = vunpack.c.h.b16 %v838
        %v1480 = vunpack.c.l.b16 %v839
        %v1481 = vunpack.c.h.b16 %v839
        %v1482 = vunpack.c.l.b16 %v840
        %v1483 = vunpack.c.h.b16 %v840
        %v1484 = vunpack.c.l.b16 %v841
        %v1485 = vunpack.c.h.b16 %v841
        %v1486 = vunpack.c.l.b16 %v842
        %v1487 = vunpack.c.h.b16 %v842
        %v1488 = vunpack.c.l.b16 %v843
        %v1489 = vunpack.c.h.b16 %v843
        %v1490 = vunpack.c.l.b16 %v844
        %v1491 = vunpack.c.h.b16 %v844
        %v1492 = vunpack.c.l.b16 %v845
        %v1493 = vunpack.c.h.b16 %v845
        %v1494 = vunpack.c.l.b16 %v846
        %v1495 = vunpack.c.h.b16 %v846
        %v1496 = vunpack.c.l.b16 %v847
        %v1497 = vunpack.c.h.b16 %v847
        %v1498 = vunpack.c.l.b16 %v848
        %v1499 = vunpack.c.h.b16 %v848
        %v1500 = vunpack.c.l.b16 %v849
        %v1501 = vunpack.c.h.b16 %v849
        %v1502 = vunpack.c.l.b16 %v850
        %v1503 = vunpack.c.h.b16 %v850
        %v1504 = vunpack.c.l.b16 %v851
        %v1505 = vunpack.c.h.b16 %v851
        %v1506 = vunpack.c.l.b16 %v852
        %v1507 = vunpack.c.h.b16 %v852
        %v1508 = vunpack.c.l.b16 %v853
        %v1509 = vunpack.c.h.b16 %v853
        %v1510 = vunpack.c.l.b16 %v854
        %v1511 = vunpack.c.h.b16 %v854
        %v1512 = vunpack.c.l.b16 %v855
        %v1513 = vunpack.c.h.b16 %v855
        %v1514 = vunpack.c.l.b16 %v856
        %v1515 = vunpack.c.h.b16 %v856
        %v1516 = vunpack.c.l.b16 %v857
        %v1517 = vunpack.c.h.b16 %v857
        %v1518 = vunpack.c.l.b16 %v858
        %v1519 = vunpack.c.h.b16 %v858
        %v1520 = vunpack.c.l.b16 %v859
        %v1521 = vunpack.c.h.b16 %v859
        %v1522 = vunpack.c.l.b16 %v860
        %v1523 = vunpack.c.h.b16 %v860
        %v1524 = vunpack.c.l.b16 %v861
        %v1525 = vunpack.c.h.b16 %v861
        %v1526 = vunpack.c.l.b16 %v862
        %v1527 = vunpack.c.h.b16 %v862
        %v1528 = vunpack.c.l.b16 %v863
        %v1529 = vunpack.c.h.b16 %v863
        %v1530 = vunpack.c.l.b16 %v864
        %v1531 = vunpack.c.h.b16 %v864
        %v1532 = vunpack.c.l.b16 %v865
        %v1533 = vunpack.c.h.b16 %v865
        %v1534 = vunpack.c.l.b16 %v866
        %v1535 = vunpack.c.h.b16 %v866
        %v1536 = vunpack.c.l.b16 %v867
        %v1537 = vunpack.c.h.b16 %v867
        %v1538 = vunpack.c.l.b16 %v868
        %v1539 = vunpack.c.h.b16 %v868
        %v1540 = vunpack.c.l.b16 %v869
        %v1541 = vunpack.c.h.b16 %v869
        %v1542 = vunpack.c.l.b16 %v870
        %v1543 = vunpack.c.h.b16 %v870
        %v1544 = vunpack.c.l.b16 %v871
        %v1545 = vunpack.c.h.b16 %v871
        %v1546 = vunpack.c.l.b16 %v872
        %v1547 = vunpack.c.h.b16 %v872
        %v1548 = vunpack.c.l.b16 %v873
        %v1549 = vunpack.c.h.b16 %v873
        %v1550 = vunpack.c.l.b16 %v874
        %v1551 = vunpack.c.h.b16 %v874
        %v1552 = vunpack.c.l.b16 %v875
        %v1553 = vunpack.c.h.b16 %v875
        %v1554 = vunpack.c.l.b16 %v876
        %v1555 = vunpack.c.h.b16 %v876
        %v1556 = vunpack.c.l.b16 %v877
        %v1557 = vunpack.c.h.b16 %v877
        %v1558 = vunpack.c.l.b16 %v878
        %v1559 = vunpack.c.h.b16 %v878
        %v1560 = vunpack.c.l.b16 %v879
        %v1561 = vunpack.c.h.b16 %v879
        %v1562 = vunpack.c.l.b16 %v880
        %v1563 = vunpack.c.h.b16 %v880
        %v1564 = vunpack.c.l.b16 %v881
        %v1565 = vunpack.c.h.b16 %v881
        %v1566 = vunpack.c.l.b16 %v882
        %v1567 = vunpack.c.h.b16 %v882
        %v1568 = vunpack.c.l.b16 %v883
        %v1569 = vunpack.c.h.b16 %v883
        %v1570 = vunpack.c.l.b16 %v884
        %v1571 = vunpack.c.h.b16 %v884
        %v1572 = vunpack.c.l.b16 %v885
        %v1573 = vunpack.c.h.b16 %v885
        %v1574 = vunpack.c.l.b16 %v886
        %v1575 = vunpack.c.h.b16 %v886
        %v1576 = vunpack.c.l.b16 %v887
        %v1577 = vunpack.c.h.b16 %v887
        %v1578 = vunpack.c.l.b16 %v888
        %v1579 = vunpack.c.h.b16 %v888
        %v1580 = vunpack.c.l.b16 %v889
        %v1581 = vunpack.c.h.b16 %v889
        %v1582 = vunpack.c.l.b16 %v890
        %v1583 = vunpack.c.h.b16 %v890
        %v1584 = vunpack.c.l.b16 %v891
        %v1585 = vunpack.c.h.b16 %v891
        %v1586 = vunpack.c.l.b16 %v892
        %v1587 = vunpack.c.h.b16 %v892
        %v1588 = vunpack.c.l.b16 %v893
        %v1589 = vunpack.c.h.b16 %v893
        %v1590 = vunpack.c.l.b16 %v894
        %v1591 = vunpack.c.h.b16 %v894
        %v1592 = vunpack.c.l.b16 %v895
        %v1593 = vunpack.c.h.b16 %v895
        %v1594 = vunpack.c.l.b16 %v896
        %v1595 = vunpack.c.h.b16 %v896
        %v1596 = vunpack.c.l.b16 %v897
        %v1597 = vunpack.c.h.b16 %v897
        %v1598 = vunpack.c.l.b16 %v898
        %v1599 = vunpack.c.h.b16 %v898
        %v1600 = vunpack.c.l.b16 %v899
        %v1601 = vunpack.c.h.b16 %v899
        %v1602 = vunpack.c.l.b16 %v900
        %v1603 = vunpack.c.h.b16 %v900
        %v1604 = vunpack.c.l.b16 %v901
        %v1605 = vunpack.c.h.b16 %v901
        %v1606 = vunpack.c.l.b16 %v902
        %v1607 = vunpack.c.h.b16 %v902
        %v1608 = vunpack.c.l.b16 %v903
        %v1609 = vunpack.c.h.b16 %v903
        %v1610 = vunpack.c.l.b16 %v904
        %v1611 = vunpack.c.h.b16 %v904
        %v1612 = vunpack.c.l.b16 %v905
        %v1613 = vunpack.c.h.b16 %v905
        %v1614 = vunpack.c.l.b16 %v906
        %v1615 = vunpack.c.h.b16 %v906
        %v1616 = vunpack.c.l.b16 %v907
        %v1617 = vunpack.c.h.b16 %v907
        %v1618 = vunpack.c.l.b16 %v908
        %v1619 = vunpack.c.h.b16 %v908
        %v1620 = vunpack.c.l.b16 %v909
        %v1621 = vunpack.c.h.b16 %v909
        %v1622 = vunpack.c.l.b16 %v910
        %v1623 = vunpack.c.h.b16 %v910
        %v1624 = vunpack.c.l.b16 %v911
        %v1625 = vunpack.c.h.b16 %v911
        %v1626 = vunpack.c.l.b16 %v912
        %v1627 = vunpack.c.h.b16 %v912
        %v1628 = vunpack.c.l.b16 %v913
        %v1629 = vunpack.c.h.b16 %v913
        %v1630 = vunpack.c.l.b16 %v914
        %v1631 = vunpack.c.h.b16 %v914
        %v1632 = vunpack.c.l.b16 %v915
        %v1633 = vunpack.c.h.b16 %v915
        %v1634 = vunpack.c.l.b16 %v916
        %v1635 = vunpack.c.h.b16 %v916
        %v1636 = vunpack.c.l.b16 %v917
        %v1637 = vunpack.c.h.b16 %v917
        %v1638 = vunpack.c.l.b16 %v918
        %v1639 = vunpack.c.h.b16 %v918
        %v1640 = vunpack.c.l.b16 %v919
        %v1641 = vunpack.c.h.b16 %v919
        %v1642 = vunpack.c.l.b16 %v920
        %v1643 = vunpack.c.h.b16 %v920
        %v1644 = vunpack.c.l.b16 %v921
        %v1645 = vunpack.c.h.b16 %v921
        %v1646 = vunpack.c.l.b16 %v922
        %v1647 = vunpack.c.h.b16 %v922
        %v1648 = vunpack.c.l.b16 %v923
        %v1649 = vunpack.c.h.b16 %v923
        %v1650 = vunpack.c.l.b16 %v924
        %v1651 = vunpack.c.h.b16 %v924
        %v1652 = vunpack.c.l.b16 %v925
        %v1653 = vunpack.c.h.b16 %v925
        %v1654 = vunpack.c.l.b16 %v926
        %v1655 = vunpack.c.h.b16 %v926
        %v1656 = vunpack.c.l.b16 %v927
        %v1657 = vunpack.c.h.b16 %v927
        %v1658 = vunpack.c.l.b16 %v928
        %v1659 = vunpack.c.h.b16 %v928
        %v1660 = vunpack.c.l.b16 %v929
        %v1661 = vunpack.c.h.b16 %v929
        %v1662 = vunpack.c.l.b16 %v930
        %v1663 = vunpack.c.h.b16 %v930
        %v1664 = vunpack.c.l.b16 %v931
        %v1665 = vunpack.c.h.b16 %v931
        %v1666 = vunpack.c.l.b16 %v932
        %v1667 = vunpack.c.h.b16 %v932
        %v1668 = vunpack.c.l.b16 %v933
        %v1669 = vunpack.c.h.b16 %v933
        %v1670 = vunpack.c.l.b16 %v934
        %v1671 = vunpack.c.h.b16 %v934
        %v1672 = vunpack.c.l.b16 %v935
        %v1673 = vunpack.c.h.b16 %v935
        %v1674 = vunpack.c.l.b16 %v936
        %v1675 = vunpack.c.h.b16 %v936
        %v1676 = vunpack.c.l.b16 %v937
        %v1677 = vunpack.c.h.b16 %v937
        %v1678 = vunpack.c.l.b16 %v938
        %v1679 = vunpack.c.h.b16 %v938
        %v1680 = vunpack.c.l.b16 %v939
        %v1681 = vunpack.c.h.b16 %v939
        %v1682 = vunpack.c.l.b16 %v940
        %v1683 = vunpack.c.h.b16 %v940
        %v1684 = vunpack.c.l.b16 %v941
        %v1685 = vunpack.c.h.b16 %v941
        %v1686 = vunpack.c.l.b16 %v942
        %v1687 = vunpack.c.h.b16 %v942
        %v1688 = vunpack.c.l.b16 %v943
        %v1689 = vunpack.c.h.b16 %v943
        %v1690 = vunpack.c.l.b16 %v944
        %v1691 = vunpack.c.h.b16 %v944
        %v1692 = vunpack.c.l.b16 %v945
        %v1693 = vunpack.c.h.b16 %v945
        %v1694 = vunpack.c.l.b16 %v946
        %v1695 = vunpack.c.h.b16 %v946
        %v1696 = vunpack.c.l.b16 %v947
        %v1697 = vunpack.c.h.b16 %v947
        %v1698 = vunpack.c.l.b16 %v948
        %v1699 = vunpack.c.h.b16 %v948
        %v1700 = vunpack.c.l.b16 %v949
        %v1701 = vunpack.c.h.b16 %v949
        %v1702 = vunpack.c.l.b16 %v950
        %v1703 = vunpack.c.h.b16 %v950
        %v1704 = vunpack.c.l.b16 %v951
        %v1705 = vunpack.c.h.b16 %v951
        %v1706 = vunpack.c.l.b16 %v952
        %v1707 = vunpack.c.h.b16 %v952
        %v1708 = vunpack.c.l.b16 %v953
        %v1709 = vunpack.c.h.b16 %v953
        %v1710 = vunpack.c.l.b16 %v954
        %v1711 = vunpack.c.h.b16 %v954
        %v1712 = vunpack.c.l.b16 %v955
        %v1713 = vunpack.c.h.b16 %v955
        %v1714 = vunpack.c.l.b16 %v956
        %v1715 = vunpack.c.h.b16 %v956
        %v1716 = vunpack.c.l.b16 %v957
        %v1717 = vunpack.c.h.b16 %v957
        %v1718 = vunpack.c.l.b16 %v958
        %v1719 = vunpack.c.h.b16 %v958
        %v1720 = vunpack.c.l.b16 %v959
        %v1721 = vunpack.c.h.b16 %v959
        %v1722 = vunpack.c.l.b16 %v960
        %v1723 = vunpack.c.h.b16 %v960
        %v1724 = vunpack.c.l.b16 %v961
        %v1725 = vunpack.c.h.b16 %v961
        %v1726 = vunpack.c.l.b16 %v962
        %v1727 = vunpack.c.h.b16 %v962
        %v1728 = vunpack.c.l.b16 %v963
        %v1729 = vunpack.c.h.b16 %v963
        %v1730 = vunpack.c.l.b16 %v964
        %v1731 = vunpack.c.h.b16 %v964
        %v1732 = vunpack.c.l.b16 %v965
        %v1733 = vunpack.c.h.b16 %v965
        %v1734 = vunpack.c.l.b16 %v966
        %v1735 = vunpack.c.h.b16 %v966
        %v1736 = vunpack.c.l.b16 %v967
        %v1737 = vunpack.c.h.b16 %v967
        %v1738 = vunpack.c.l.b16 %v968
        %v1739 = vunpack.c.h.b16 %v968
        %v1740 = vunpack.c.l.b16 %v969
        %v1741 = vunpack.c.h.b16 %v969
        %v1742 = vunpack.c.l.b16 %v970
        %v1743 = vunpack.c.h.b16 %v970
        %v1744 = vunpack.c.l.b16 %v971
        %v1745 = vunpack.c.h.b16 %v971
        %v1746 = vunpack.c.l.b16 %v972
        %v1747 = vunpack.c.h.b16 %v972
        %v1748 = vunpack.c.l.b16 %v973
        %v1749 = vunpack.c.h.b16 %v973
        %v1750 = vunpack.c.l.b16 %v974
        %v1751 = vunpack.c.h.b16 %v974
        %v1752 = vunpack.c.l.b16 %v975
        %v1753 = vunpack.c.h.b16 %v975
        %v1754 = vunpack.c.l.b16 %v976
        %v1755 = vunpack.c.h.b16 %v976
        %v1756 = vunpack.c.l.b16 %v977
        %v1757 = vunpack.c.h.b16 %v977
        %v1758 = vunpack.c.l.b16 %v978
        %v1759 = vunpack.c.h.b16 %v978
        %v1760 = vunpack.c.l.b16 %v979
        %v1761 = vunpack.c.h.b16 %v979
        %v1762 = vunpack.c.l.b16 %v980
        %v1763 = vunpack.c.h.b16 %v980
        %v1764 = vunpack.c.l.b16 %v981
        %v1765 = vunpack.c.h.b16 %v981
        %v1766 = vunpack.c.l.b16 %v982
        %v1767 = vunpack.c.h.b16 %v982
        %v1768 = vunpack.c.l.b16 %v983
        %v1769 = vunpack.c.h.b16 %v983
        %v1770 = vunpack.c.l.b16 %v984
        %v1771 = vunpack.c.h.b16 %v984
        %v1772 = vunpack.c.l.b16 %v985
        %v1773 = vunpack.c.h.b16 %v985
        %v1774 = vunpack.c.l.b16 %v986
        %v1775 = vunpack.c.h.b16 %v986
        %v1776 = vunpack.c.l.b16 %v987
        %v1777 = vunpack.c.h.b16 %v987
        %v1778 = vunpack.c.l.b16 %v988
        %v1779 = vunpack.c.h.b16 %v988
        %v1780 = vunpack.c.l.b16 %v989
        %v1781 = vunpack.c.h.b16 %v989
        %v1782 = vunpack.c.l.b16 %v990
        %v1783 = vunpack.c.h.b16 %v990
        %v1784 = vunpack.c.l.b16 %v991
        %v1785 = vunpack.c.h.b16 %v991
        %v1786 = vunpack.c.l.b16 %v992
        %v1787 = vunpack.c.h.b16 %v992
        %v1788 = vunpack.c.l.b16 %v993
        %v1789 = vunpack.c.h.b16 %v993
        %v1790 = vunpack.c.l.b16 %v994
        %v1791 = vunpack.c.h.b16 %v994
        %v1792 = vunpack.c.l.b16 %v995
        %v1793 = vunpack.c.h.b16 %v995
        %v1794 = vunpack.c.l.b16 %v996
        %v1795 = vunpack.c.h.b16 %v996
        %v1796 = vunpack.c.l.b16 %v997
        %v1797 = vunpack.c.h.b16 %v997
        %v1798 = vunpack.c.l.b16 %v998
        %v1799 = vunpack.c.h.b16 %v998
        %v1800 = vunpack.c.l.b16 %v999
        %v1801 = vunpack.c.h.b16 %v999
        %v1802 = vunpack.c.l.b16 %v1000
        %v1803 = vunpack.c.h.b16 %v1000
        %v1804 = vunpack.c.l.b16 %v1001
        %v1805 = vunpack.c.h.b16 %v1001
        %v1806 = vunpack.c.l.b16 %v1002
        %v1807 = vunpack.c.h.b16 %v1002
        %v1808 = vunpack.c.l.b16 %v1003
        %v1809 = vunpack.c.h.b16 %v1003
        %v1810 = vunpack.c.l.b16 %v1004
        %v1811 = vunpack.c.h.b16 %v1004
        %v1812 = vunpack.c.l.b16 %v1005
        %v1813 = vunpack.c.h.b16 %v1005
        %v1814 = vunpack.c.l.b16 %v1006
        %v1815 = vunpack.c.h.b16 %v1006
        %v1816 = vunpack.c.l.b16 %v1007
        %v1817 = vunpack.c.h.b16 %v1007
        %v1818 = vpack.c.b16 %v1314, %v1306
        %v1819 = vpack.c.b16 %v1315, %v1307
        %v1820 = vpack.c.b16 %v1316, %v1308
        %v1821 = vpack.c.b16 %v1317, %v1309
        %v1822 = vpack.c.b16 %v1318, %v1310
        %v1823 = vpack.c.b16 %v1319, %v1311
        %v1824 = vpack.c.b16 %v1320, %v1312
        %v1825 = vpack.c.b16 %v1321, %v1313
        %v1826 = vpack.c.b16 %v1330, %v1322
        %v1827 = vpack.c.b16 %v1331, %v1323
        %v1828 = vpack.c.b16 %v1332, %v1324
        %v1829 = vpack.c.b16 %v1333, %v1325
        %v1830 = vpack.c.b16 %v1334, %v1326
        %v1831 = vpack.c.b16 %v1335, %v1327
        %v1832 = vpack.c.b16 %v1336, %v1328
        %v1833 = vpack.c.b16 %v1337, %v1329
        %v1834 = vpack.c.b16 %v1346, %v1338
        %v1835 = vpack.c.b16 %v1347, %v1339
        %v1836 = vpack.c.b16 %v1348, %v1340
        %v1837 = vpack.c.b16 %v1349, %v1341
        %v1838 = vpack.c.b16 %v1350, %v1342
        %v1839 = vpack.c.b16 %v1351, %v1343
        %v1840 = vpack.c.b16 %v1352, %v1344
        %v1841 = vpack.c.b16 %v1353, %v1345
        %v1842 = vpack.c.b16 %v1362, %v1354
        %v1843 = vpack.c.b16 %v1363, %v1355
        %v1844 = vpack.c.b16 %v1364, %v1356
        %v1845 = vpack.c.b16 %v1365, %v1357
        %v1846 = vpack.c.b16 %v1366, %v1358
        %v1847 = vpack.c.b16 %v1367, %v1359
        %v1848 = vpack.c.b16 %v1368, %v1360
        %v1849 = vpack.c.b16 %v1369, %v1361
        %v1850 = vpack.c.b16 %v1378, %v1370
        %v1851 = vpack.c.b16 %v1379, %v1371
        %v1852 = vpack.c.b16 %v1380, %v1372
        %v1853 = vpack.c.b16 %v1381, %v1373
        %v1854 = vpack.c.b16 %v1382, %v1374
        %v1855 = vpack.c.b16 %v1383, %v1375
        %v1856 = vpack.c.b16 %v1384, %v1376
        %v1857 = vpack.c.b16 %v1385, %v1377
        %v1858 = vpack.c.b16 %v1394, %v1386
        %v1859 = vpack.c.b16 %v1395, %v1387
        %v1860 = vpack.c.b16 %v1396, %v1388
        %v1861 = vpack.c.b16 %v1397, %v1389
        %v1862 = vpack.c.b16 %v1398, %v1390
        %v1863 = vpack.c.b16 %v1399, %v1391
        %v1864 = vpack.c.b16 %v1400, %v1392
        %v1865 = vpack.c.b16 %v1401, %v1393
        %v1866 = vpack.c.b16 %v1410, %v1402
        %v1867 = vpack.c.b16 %v1411, %v1403
        %v1868 = vpack.c.b16 %v1412, %v1404
        %v1869 = vpack.c.b16 %v1413, %v1405
        %v1870 = vpack.c.b16 %v1414, %v1406
        %v1871 = vpack.c.b16 %v1415, %v1407
        %v1872 = vpack.c.b16 %v1416, %v1408
        %v1873 = vpack.c.b16 %v1417, %v1409
        %v1874 = vpack.c.b16 %v1426, %v1418
        %v1875 = vpack.c.b16 %v1427, %v1419
        %v1876 = vpack.c.b16 %v1428, %v1420
        %v1877 = vpack.c.b16 %v1429, %v1421
        %v1878 = vpack.c.b16 %v1430, %v1422
        %v1879 = vpack.c.b16 %v1431, %v1423
        %v1880 = vpack.c.b16 %v1432, %v1424
        %v1881 = vpack.c.b16 %v1433, %v1425
        %v1882 = vpack.c.b16 %v1442, %v1434
        %v1883 = vpack.c.b16 %v1443, %v1435
        %v1884 = vpack.c.b16 %v1444, %v1436
        %v1885 = vpack.c.b16 %v1445, %v1437
        %v1886 = vpack.c.b16 %v1446, %v1438
        %v1887 = vpack.c.b16 %v1447, %v1439
        %v1888 = vpack.c.b16 %v1448, %v1440
        %v1889 = vpack.c.b16 %v1449, %v1441
        %v1890 = vpack.c.b16 %v1458, %v1450
        %v1891 = vpack.c.b16 %v1459, %v1451
        %v1892 = vpack.c.b16 %v1460, %v1452
        %v1893 = vpack.c.b16 %v1461, %v1453
        %v1894 = vpack.c.b16 %v1462, %v1454
        %v1895 = vpack.c.b16 %v1463, %v1455
        %v1896 = vpack.c.b16 %v1464, %v1456
        %v1897 = vpack.c.b16 %v1465, %v1457
        %v1898 = vpack.c.b16 %v1474, %v1466
        %v1899 = vpack.c.b16 %v1475, %v1467
        %v1900 = vpack.c.b16 %v1476, %v1468
        %v1901 = vpack.c.b16 %v1477, %v1469
        %v1902 = vpack.c.b16 %v1478, %v1470
        %v1903 = vpack.c.b16 %v1479, %v1471
        %v1904 = vpack.c.b16 %v1480, %v1472
        %v1905 = vpack.c.b16 %v1481, %v1473
        %v1906 = vpack.c.b16 %v1490, %v1482
        %v1907 = vpack.c.b16 %v1491, %v1483
        %v1908 = vpack.c.b16 %v1492, %v1484
        %v1909 = vpack.c.b16 %v1493, %v1485
        %v1910 = vpack.c.b16 %v1494, %v1486
        %v1911 = vpack.c.b16 %v1495, %v1487
        %v1912 = vpack.c.b16 %v1496, %v1488
        %v1913 = vpack.c.b16 %v1497, %v1489
        %v1914 = vpack.c.b16 %v1506, %v1498
        %v1915 = vpack.c.b16 %v1507, %v1499
        %v1916 = vpack.c.b16 %v1508, %v1500
        %v1917 = vpack.c.b16 %v1509, %v1501
        %v1918 = vpack.c.b16 %v1510, %v1502
        %v1919 = vpack.c.b16 %v1511, %v1503
        %v1920 = vpack.c.b16 %v1512, %v1504
        %v1921 = vpack.c.b16 %v1513, %v1505
        %v1922 = vpack.c.b16 %v1522, %v1514
        %v1923 = vpack.c.b16 %v1523, %v1515
        %v1924 = vpack.c.b16 %v1524, %v1516
        %v1925 = vpack.c.b16 %v1525, %v1517
        %v1926 = vpack.c.b16 %v1526, %v1518
        %v1927 = vpack.c.b16 %v1527, %v1519
        %v1928 = vpack.c.b16 %v1528, %v1520
        %v1929 = vpack.c.b16 %v1529, %v1521
        %v1930 = vpack.c.b16 %v1538, %v1530
        %v1931 = vpack.c.b16 %v1539, %v1531
        %v1932 = vpack.c.b16 %v1540, %v1532
        %v1933 = vpack.c.b16 %v1541, %v1533
        %v1934 = vpack.c.b16 %v1542, %v1534
        %v1935 = vpack.c.b16 %v1543, %v1535
        %v1936 = vpack.c.b16 %v1544, %v1536
        %v1937 = vpack.c.b16 %v1545, %v1537
        %v1938 = vpack.c.b16 %v1554, %v1546
        %v1939 = vpack.c.b16 %v1555, %v1547
        %v1940 = vpack.c.b16 %v1556, %v1548
        %v1941 = vpack.c.b16 %v1557, %v1549
        %v1942 = vpack.c.b16 %v1558, %v1550
        %v1943 = vpack.c.b16 %v1559, %v1551
        %v1944 = vpack.c.b16 %v1560, %v1552
        %v1945 = vpack.c.b16 %v1561, %v1553
        %v1946 = vpack.c.b16 %v1570, %v1562
        %v1947 = vpack.c.b16 %v1571, %v1563
        %v1948 = vpack.c.b16 %v1572, %v1564
        %v1949 = vpack.c.b16 %v1573, %v1565
        %v1950 = vpack.c.b16 %v1574, %v1566
        %v1951 = vpack.c.b16 %v1575, %v1567
        %v1952 = vpack.c.b16 %v1576, %v1568
        %v1953 = vpack.c.b16 %v1577, %v1569
        %v1954 = vpack.c.b16 %v1586, %v1578
        %v1955 = vpack.c.b16 %v1587, %v1579
        %v1956 = vpack.c.b16 %v1588, %v1580
        %v1957 = vpack.c.b16 %v1589, %v1581
        %v1958 = vpack.c.b16 %v1590, %v1582
        %v1959 = vpack.c.b16 %v1591, %v1583
        %v1960 = vpack.c.b16 %v1592, %v1584
        %v1961 = vpack.c.b16 %v1593, %v1585
        %v1962 = vpack.c.b16 %v1602, %v1594
        %v1963 = vpack.c.b16 %v1603, %v1595
        %v1964 = vpack.c.b16 %v1604, %v1596
        %v1965 = vpack.c.b16 %v1605, %v1597
        %v1966 = vpack.c.b16 %v1606, %v1598
        %v1967 = vpack.c.b16 %v1607, %v1599
        %v1968 = vpack.c.b16 %v1608, %v1600
        %v1969 = vpack.c.b16 %v1609, %v1601
        %v1970 = vpack.c.b16 %v1618, %v1610
        %v1971 = vpack.c.b16 %v1619, %v1611
        %v1972 = vpack.c.b16 %v1620, %v1612
        %v1973 = vpack.c.b16 %v1621, %v1613
        %v1974 = vpack.c.b16 %v1622, %v1614
        %v1975 = vpack.c.b16 %v1623, %v1615
        %v1976 = vpack.c.b16 %v1624, %v1616
        %v1977 = vpack.c.b16 %v1625, %v1617
        %v1978 = vpack.c.b16 %v1634, %v1626
        %v1979 = vpack.c.b16 %v1635, %v1627
        %v1980 = vpack.c.b16 %v1636, %v1628
        %v1981 = vpack.c.b16 %v1637, %v1629
        %v1982 = vpack.c.b16 %v1638, %v1630
        %v1983 = vpack.c.b16 %v1639, %v1631
        %v1984 = vpack.c.b16 %v1640, %v1632
        %v1985 = vpack.c.b16 %v1641, %v1633
        %v1986 = vpack.c.b16 %v1650, %v1642
        %v1987 = vpack.c.b16 %v1651, %v1643
        %v1988 = vpack.c.b16 %v1652, %v1644
        %v1989 = vpack.c.b16 %v1653, %v1645
        %v1990 = vpack.c.b16 %v1654, %v1646
        %v1991 = vpack.c.b16 %v1655, %v1647
        %v1992 = vpack.c.b16 %v1656, %v1648
        %v1993 = vpack.c.b16 %v1657, %v1649
        %v1994 = vpack.c.b16 %v1666, %v1658
        %v1995 = vpack.c.b16 %v1667, %v1659
        %v1996 = vpack.c.b16 %v1668, %v1660
        %v1997 = vpack.c.b16 %v1669, %v1661
        %v1998 = vpack.c.b16 %v1670, %v1662
        %v1999 = vpack.c.b16 %v1671, %v1663
        %v2000 = vpack.c.b16 %v1672, %v1664
        %v2001 = vpack.c.b16 %v1673, %v1665
        %v2002 = vpack.c.b16 %v1682, %v1674
        %v2003 = vpack.c.b16 %v1683, %v1675
        %v2004 = vpack.c.b16 %v1684, %v1676
        %v2005 = vpack.c.b16 %v1685, %v1677
        %v2006 = vpack.c.b16 %v1686, %v1678
        %v2007 = vpack.c.b16 %v1687, %v1679
        %v2008 = vpack.c.b16 %v1688, %v1680
        %v2009 = vpack.c.b16 %v1689, %v1681
        %v2010 = vpack.c.b16 %v1698, %v1690
        %v2011 = vpack.c.b16 %v1699, %v1691
        %v2012 = vpack.c.b16 %v1700, %v1692
        %v2013 = vpack.c.b16 %v1701, %v1693
        %v2014 = vpack.c.b16 %v1702, %v1694
        %v2015 = vpack.c.b16 %v1703, %v1695
        %v2016 = vpack.c.b16 %v1704, %v1696
        %v2017 = vpack.c.b16 %v1705, %v1697
        %v2018 = vpack.c.b16 %v1714, %v1706
        %v2019 = vpack.c.b16 %v1715, %v1707
        %v2020 = vpack.c.b16 %v1716, %v1708
        %v2021 = vpack.c.b16 %v1717, %v1709
        %v2022 = vpack.c.b16 %v1718, %v1710
        %v2023 = vpack.c.b16 %v1719, %v1711
        %v2024 = vpack.c.b16 %v1720, %v1712
        %v2025 = vpack.c.b16 %v1721, %v1713
        %v2026 = vpack.c.b16 %v1730, %v1722
        %v2027 = vpack.c.b16 %v1731, %v1723
        %v2028 = vpack.c.b16 %v1732, %v1724
        %v2029 = vpack.c.b16 %v1733, %v1725
        %v2030 = vpack.c.b16 %v1734, %v1726
        %v2031 = vpack.c.b16 %v1735, %v1727
        %v2032 = vpack.c.b16 %v1736, %v1728
        %v2033 = vpack.c.b16 %v1737, %v1729
        %v2034 = vpack.c.b16 %v1746, %v1738
        %v2035 = vpack.c.b16 %v1747, %v1739
        %v2036 = vpack.c.b16 %v1748, %v1740
        %v2037 = vpack.c.b16 %v1749, %v1741
        %v2038 = vpack.c.b16 %v1750, %v1742
        %v2039 = vpack.c.b16 %v1751, %v1743
        %v2040 = vpack.c.b16 %v1752, %v1744
        %v2041 = vpack.c.b16 %v1753, %v1745
        %v2042 = vpack.c.b16 %v1762, %v1754
        %v2043 = vpack.c.b16 %v1763, %v1755
        %v2044 = vpack.c.b16 %v1764, %v1756
        %v2045 = vpack.c.b16 %v1765, %v1757
        %v2046 = vpack.c.b16 %v1766, %v1758
        %v2047 = vpack.c.b16 %v1767, %v1759
        %v2048 = vpack.c.b16 %v1768, %v1760
        %v2049 = vpack.c.b16 %v1769, %v1761
        %v2050 = vpack.c.b16 %v1778, %v1770
        %v2051 = vpack.c.b16 %v1779, %v1771
        %v2052 = vpack.c.b16 %v1780, %v1772
        %v2053 = vpack.c.b16 %v1781, %v1773
        %v2054 = vpack.c.b16 %v1782, %v1774
        %v2055 = vpack.c.b16 %v1783, %v1775
        %v2056 = vpack.c.b16 %v1784, %v1776
        %v2057 = vpack.c.b16 %v1785, %v1777
        %v2058 = vpack.c.b16 %v1794, %v1786
        %v2059 = vpack.c.b16 %v1795, %v1787
        %v2060 = vpack.c.b16 %v1796, %v1788
        %v2061 = vpack.c.b16 %v1797, %v1789
        %v2062 = vpack.c.b16 %v1798, %v1790
        %v2063 = vpack.c.b16 %v1799, %v1791
        %v2064 = vpack.c.b16 %v1800, %v1792
        %v2065 = vpack.c.b16 %v1801, %v1793
        %v2066 = vpack.c.b16 %v1810, %v1802
        %v2067 = vpack.c.b16 %v1811, %v1803
        %v2068 = vpack.c.b16 %v1812, %v1804
        %v2069 = vpack.c.b16 %v1813, %v1805
        %v2070 = vpack.c.b16 %v1814, %v1806
        %v2071 = vpack.c.b16 %v1815, %v1807
        %v2072 = vpack.c.b16 %v1816, %v1808
        %v2073 = vpack.c.b16 %v1817, %v1809
        %2330 = vmatprep.subr.bf16.mxu0 %v1875
        %2331 = vmatpush1.bf16.msra.mxu0 %v1874
        %2332 = vmatprep.subr.bf16.mxu0 %v1867
        %2333 = vmatpush1.bf16.msra.mxu0 %v1866
        %2334 = vmatprep.subr.bf16.mxu0 %v1859
        %2335 = vmatpush1.bf16.msra.mxu0 %v1858
        %2336 = vmatprep.subr.bf16.mxu0 %v1851
        %2337 = vmatpush1.bf16.msra.mxu0 %v1850
        %2338 = vmatprep.subr.bf16.mxu0 %v1843
        %2339 = vmatpush1.bf16.msra.mxu0 %v1842
        %2340 = vmatprep.subr.bf16.mxu0 %v1835
        %2341 = vmatpush1.bf16.msra.mxu0 %v1834
        %2342 = vmatprep.subr.bf16.mxu0 %v1827
        %2343 = vmatpush1.bf16.msra.mxu0 %v1826
        %2344 = vmatprep.subr.bf16.mxu0 %v1819
        %2345 = vmatpush1.bf16.msra.mxu0 %v1818
        %2346 = vmatprep.subr.bf16.mxu0 %v1939
        %2347 = vmatpush2.bf16.msra.mxu0 %v1938
        %2348 = vmatprep.subr.bf16.mxu0 %v1931
        %2349 = vmatpush2.bf16.msra.mxu0 %v1930
        %2350 = vmatprep.subr.bf16.mxu0 %v1923
        %2351 = vmatpush2.bf16.msra.mxu0 %v1922
        %2352 = vmatprep.subr.bf16.mxu0 %v1915
        %2353 = vmatpush2.bf16.msra.mxu0 %v1914
        %2354 = vmatprep.subr.bf16.mxu0 %v1907
        %2355 = vmatpush2.bf16.msra.mxu0 %v1906
        %2356 = vmatprep.subr.bf16.mxu0 %v1899
        %2357 = vmatpush2.bf16.msra.mxu0 %v1898
        %2358 = vmatprep.subr.bf16.mxu0 %v1891
        %2359 = vmatpush2.bf16.msra.mxu0 %v1890
        %2360 = vmatprep.subr.bf16.mxu0 %v1883
        %2361 = vmatpush2.bf16.msra.mxu0 %v1882
        %2362 = vmatprep.mubr.bf16.mxu0 %v721
        %2363 = vmatmul.mubr.bf16.gmra.mxu0 %v720
        %v2364 = vpop.f32.mrf.mxu0
        %v2365 = vadd.f32 %v1013, %v2364
        %v2366 = vpop.f32.mrf.mxu0
        %v2367 = vadd.f32 %v1017, %v2366
        %v2368 = vpop.f32.mrf.mxu0
        %v2369 = vadd.f32 %v1013, %v2368
        %v2370 = vpop.f32.mrf.mxu0
        %v2371 = vadd.f32 %v1017, %v2370
        %2372 = vmatprep.mubr.bf16.mxu0 %v725
        %2373 = vmatmul.mubr.bf16.gmra.mxu0 %v724
        %v2374 = vpop.f32.mrf.mxu0
        %v2375 = vadd.f32 %v1013, %v2374
        %v2376 = vpop.f32.mrf.mxu0
        %v2377 = vadd.f32 %v1017, %v2376
        %v2378 = vpop.f32.mrf.mxu0
        %v2379 = vadd.f32 %v1013, %v2378
        %v2380 = vpop.f32.mrf.mxu0
        %v2381 = vadd.f32 %v1017, %v2380
        %2382 = vmatprep.mubr.bf16.mxu0 %v729
        %2383 = vmatmul.mubr.bf16.gmra.mxu0 %v728
        %v2384 = vpop.f32.mrf.mxu0
        %v2385 = vadd.f32 %v1013, %v2384
        %v2386 = vpop.f32.mrf.mxu0
        %v2387 = vadd.f32 %v1017, %v2386
        %v2388 = vpop.f32.mrf.mxu0
        %v2389 = vadd.f32 %v1013, %v2388
        %v2390 = vpop.f32.mrf.mxu0
        %v2391 = vadd.f32 %v1017, %v2390
        %2392 = vmatprep.mubr.bf16.mxu0 %v733
        %2393 = vmatmul.mubr.bf16.gmra.mxu0 %v732
        %v2394 = vpop.f32.mrf.mxu0
        %v2395 = vadd.f32 %v1013, %v2394
        %v2396 = vpop.f32.mrf.mxu0
        %v2397 = vadd.f32 %v1017, %v2396
        %v2398 = vpop.f32.mrf.mxu0
        %v2399 = vadd.f32 %v1013, %v2398
        %v2400 = vpop.f32.mrf.mxu0
        %v2401 = vadd.f32 %v1017, %v2400
        %2402 = vmatprep.mubr.bf16.mxu0 %v737
        %2403 = vmatmul.mubr.bf16.gmra.mxu0 %v736
        %v2404 = vpop.f32.mrf.mxu0
        %v2405 = vadd.f32 %v1013, %v2404
        %v2406 = vpop.f32.mrf.mxu0
        %v2407 = vadd.f32 %v1017, %v2406
        %v2408 = vpop.f32.mrf.mxu0
        %v2409 = vadd.f32 %v1013, %v2408
        %v2410 = vpop.f32.mrf.mxu0
        %v2411 = vadd.f32 %v1017, %v2410
        %2412 = vmatprep.mubr.bf16.mxu0 %v741
        %2413 = vmatmul.mubr.bf16.gmra.mxu0 %v740
        %v2414 = vpop.f32.mrf.mxu0
        %v2415 = vadd.f32 %v1013, %v2414
        %v2416 = vpop.f32.mrf.mxu0
        %v2417 = vadd.f32 %v1017, %v2416
        %v2418 = vpop.f32.mrf.mxu0
        %v2419 = vadd.f32 %v1013, %v2418
        %v2420 = vpop.f32.mrf.mxu0
        %v2421 = vadd.f32 %v1017, %v2420
        %2422 = vmatprep.mubr.bf16.mxu0 %v745
        %2423 = vmatmul.mubr.bf16.gmra.mxu0 %v744
        %v2424 = vpop.f32.mrf.mxu0
        %v2425 = vadd.f32 %v1013, %v2424
        %v2426 = vpop.f32.mrf.mxu0
        %v2427 = vadd.f32 %v1017, %v2426
        %v2428 = vpop.f32.mrf.mxu0
        %v2429 = vadd.f32 %v1013, %v2428
        %v2430 = vpop.f32.mrf.mxu0
        %v2431 = vadd.f32 %v1017, %v2430
        %2432 = vmatprep.mubr.bf16.mxu0 %v749
        %2433 = vmatmul.mubr.bf16.gmra.mxu0 %v748
        %v2434 = vpop.f32.mrf.mxu0
        %v2435 = vadd.f32 %v1013, %v2434
        %v2436 = vpop.f32.mrf.mxu0
        %v2437 = vadd.f32 %v1017, %v2436
        %v2438 = vpop.f32.mrf.mxu0
        %v2439 = vadd.f32 %v1013, %v2438
        %v2440 = vpop.f32.mrf.mxu0
        %v2441 = vadd.f32 %v1017, %v2440
        %2442 = vdwg.mxu0
        %2443 = vmatprep.subr.bf16.mxu0 %v2003
        %2444 = vmatpush1.bf16.msra.mxu0 %v2002
        %2445 = vmatprep.subr.bf16.mxu0 %v1995
        %2446 = vmatpush1.bf16.msra.mxu0 %v1994
        %2447 = vmatprep.subr.bf16.mxu0 %v1987
        %2448 = vmatpush1.bf16.msra.mxu0 %v1986
        %2449 = vmatprep.subr.bf16.mxu0 %v1979
        %2450 = vmatpush1.bf16.msra.mxu0 %v1978
        %2451 = vmatprep.subr.bf16.mxu0 %v1971
        %2452 = vmatpush1.bf16.msra.mxu0 %v1970
        %2453 = vmatprep.subr.bf16.mxu0 %v1963
        %2454 = vmatpush1.bf16.msra.mxu0 %v1962
        %2455 = vmatprep.subr.bf16.mxu0 %v1955
        %2456 = vmatpush1.bf16.msra.mxu0 %v1954
        %2457 = vmatprep.subr.bf16.mxu0 %v1947
        %2458 = vmatpush1.bf16.msra.mxu0 %v1946
        %2459 = vmatprep.subr.bf16.mxu0 %v2067
        %2460 = vmatpush2.bf16.msra.mxu0 %v2066
        %2461 = vmatprep.subr.bf16.mxu0 %v2059
        %2462 = vmatpush2.bf16.msra.mxu0 %v2058
        %2463 = vmatprep.subr.bf16.mxu0 %v2051
        %2464 = vmatpush2.bf16.msra.mxu0 %v2050
        %2465 = vmatprep.subr.bf16.mxu0 %v2043
        %2466 = vmatpush2.bf16.msra.mxu0 %v2042
        %2467 = vmatprep.subr.bf16.mxu0 %v2035
        %2468 = vmatpush2.bf16.msra.mxu0 %v2034
        %2469 = vmatprep.subr.bf16.mxu0 %v2027
        %2470 = vmatpush2.bf16.msra.mxu0 %v2026
        %2471 = vmatprep.subr.bf16.mxu0 %v2019
        %2472 = vmatpush2.bf16.msra.mxu0 %v2018
        %2473 = vmatprep.subr.bf16.mxu0 %v2011
        %2474 = vmatpush2.bf16.msra.mxu0 %v2010
        %2475 = vmatprep.mubr.bf16.mxu0 %v723
        %2476 = vmatmul.mubr.bf16.gmra.mxu0 %v722
        %v2477 = vpop.f32.mrf.mxu0
        %v2478 = vadd.f32 %v2365, %v2477
        %v2479 = vpop.f32.mrf.mxu0
        %v2480 = vadd.f32 %v2367, %v2479
        %v2481 = vpop.f32.mrf.mxu0
        %v2482 = vadd.f32 %v2369, %v2481
        %v2483 = vpop.f32.mrf.mxu0
        %v2484 = vadd.f32 %v2371, %v2483
        %2485 = vmatprep.mubr.bf16.mxu0 %v727
        %2486 = vmatmul.mubr.bf16.gmra.mxu0 %v726
        %v2487 = vpop.f32.mrf.mxu0
        %v2488 = vadd.f32 %v2375, %v2487
        %v2489 = vpop.f32.mrf.mxu0
        %v2490 = vadd.f32 %v2377, %v2489
        %v2491 = vpop.f32.mrf.mxu0
        %v2492 = vadd.f32 %v2379, %v2491
        %v2493 = vpop.f32.mrf.mxu0
        %v2494 = vadd.f32 %v2381, %v2493
        %2495 = vmatprep.mubr.bf16.mxu0 %v731
        %2496 = vmatmul.mubr.bf16.gmra.mxu0 %v730
        %v2497 = vpop.f32.mrf.mxu0
        %v2498 = vadd.f32 %v2385, %v2497
        %v2499 = vpop.f32.mrf.mxu0
        %v2500 = vadd.f32 %v2387, %v2499
        %v2501 = vpop.f32.mrf.mxu0
        %v2502 = vadd.f32 %v2389, %v2501
        %v2503 = vpop.f32.mrf.mxu0
        %v2504 = vadd.f32 %v2391, %v2503
        %2505 = vmatprep.mubr.bf16.mxu0 %v735
        %2506 = vmatmul.mubr.bf16.gmra.mxu0 %v734
        %v2507 = vpop.f32.mrf.mxu0
        %v2508 = vadd.f32 %v2395, %v2507
        %v2509 = vpop.f32.mrf.mxu0
        %v2510 = vadd.f32 %v2397, %v2509
        %v2511 = vpop.f32.mrf.mxu0
        %v2512 = vadd.f32 %v2399, %v2511
        %v2513 = vpop.f32.mrf.mxu0
        %v2514 = vadd.f32 %v2401, %v2513
        %2515 = vmatprep.mubr.bf16.mxu0 %v739
        %2516 = vmatmul.mubr.bf16.gmra.mxu0 %v738
        %v2517 = vpop.f32.mrf.mxu0
        %v2518 = vadd.f32 %v2405, %v2517
        %v2519 = vpop.f32.mrf.mxu0
        %v2520 = vadd.f32 %v2407, %v2519
        %v2521 = vpop.f32.mrf.mxu0
        %v2522 = vadd.f32 %v2409, %v2521
        %v2523 = vpop.f32.mrf.mxu0
        %v2524 = vadd.f32 %v2411, %v2523
        %2525 = vmatprep.mubr.bf16.mxu0 %v743
        %2526 = vmatmul.mubr.bf16.gmra.mxu0 %v742
        %v2527 = vpop.f32.mrf.mxu0
        %v2528 = vadd.f32 %v2415, %v2527
        %v2529 = vpop.f32.mrf.mxu0
        %v2530 = vadd.f32 %v2417, %v2529
        %v2531 = vpop.f32.mrf.mxu0
        %v2532 = vadd.f32 %v2419, %v2531
        %v2533 = vpop.f32.mrf.mxu0
        %v2534 = vadd.f32 %v2421, %v2533
        %2535 = vmatprep.mubr.bf16.mxu0 %v747
        %2536 = vmatmul.mubr.bf16.gmra.mxu0 %v746
        %v2537 = vpop.f32.mrf.mxu0
        %v2538 = vadd.f32 %v2425, %v2537
        %v2539 = vpop.f32.mrf.mxu0
        %v2540 = vadd.f32 %v2427, %v2539
        %v2541 = vpop.f32.mrf.mxu0
        %v2542 = vadd.f32 %v2429, %v2541
        %v2543 = vpop.f32.mrf.mxu0
        %v2544 = vadd.f32 %v2431, %v2543
        %2545 = vmatprep.mubr.bf16.mxu0 %v751
        %2546 = vmatmul.mubr.bf16.gmra.mxu0 %v750
        %v2547 = vpop.f32.mrf.mxu0
        %v2548 = vadd.f32 %v2435, %v2547
        %v2549 = vpop.f32.mrf.mxu0
        %v2550 = vadd.f32 %v2437, %v2549
        %v2551 = vpop.f32.mrf.mxu0
        %v2552 = vadd.f32 %v2439, %v2551
        %v2553 = vpop.f32.mrf.mxu0
        %v2554 = vadd.f32 %v2441, %v2553
        %2555 = vdwg.mxu0
        %2556 = vmatprep.subr.bf16.mxu0 %v1877
        %2557 = vmatpush1.bf16.msra.mxu0 %v1876
        %2558 = vmatprep.subr.bf16.mxu0 %v1869
        %2559 = vmatpush1.bf16.msra.mxu0 %v1868
        %2560 = vmatprep.subr.bf16.mxu0 %v1861
        %2561 = vmatpush1.bf16.msra.mxu0 %v1860
        %2562 = vmatprep.subr.bf16.mxu0 %v1853
        %2563 = vmatpush1.bf16.msra.mxu0 %v1852
        %2564 = vmatprep.subr.bf16.mxu0 %v1845
        %2565 = vmatpush1.bf16.msra.mxu0 %v1844
        %2566 = vmatprep.subr.bf16.mxu0 %v1837
        %2567 = vmatpush1.bf16.msra.mxu0 %v1836
        %2568 = vmatprep.subr.bf16.mxu0 %v1829
        %2569 = vmatpush1.bf16.msra.mxu0 %v1828
        %2570 = vmatprep.subr.bf16.mxu0 %v1821
        %2571 = vmatpush1.bf16.msra.mxu0 %v1820
        %2572 = vmatprep.subr.bf16.mxu0 %v1941
        %2573 = vmatpush2.bf16.msra.mxu0 %v1940
        %2574 = vmatprep.subr.bf16.mxu0 %v1933
        %2575 = vmatpush2.bf16.msra.mxu0 %v1932
        %2576 = vmatprep.subr.bf16.mxu0 %v1925
        %2577 = vmatpush2.bf16.msra.mxu0 %v1924
        %2578 = vmatprep.subr.bf16.mxu0 %v1917
        %2579 = vmatpush2.bf16.msra.mxu0 %v1916
        %2580 = vmatprep.subr.bf16.mxu0 %v1909
        %2581 = vmatpush2.bf16.msra.mxu0 %v1908
        %2582 = vmatprep.subr.bf16.mxu0 %v1901
        %2583 = vmatpush2.bf16.msra.mxu0 %v1900
        %2584 = vmatprep.subr.bf16.mxu0 %v1893
        %2585 = vmatpush2.bf16.msra.mxu0 %v1892
        %2586 = vmatprep.subr.bf16.mxu0 %v1885
        %2587 = vmatpush2.bf16.msra.mxu0 %v1884
        %2588 = vmatprep.mubr.bf16.mxu0 %v721
        %2589 = vmatmul.mubr.bf16.gmra.mxu0 %v720
        %v2590 = vpop.f32.mrf.mxu0
        %v2591 = vadd.f32 %v1021, %v2590
        %v2592 = vpop.f32.mrf.mxu0
        %v2593 = vadd.f32 %v1025, %v2592
        %v2594 = vpop.f32.mrf.mxu0
        %v2595 = vadd.f32 %v1021, %v2594
        %v2596 = vpop.f32.mrf.mxu0
        %v2597 = vadd.f32 %v1025, %v2596
        %2598 = vmatprep.mubr.bf16.mxu0 %v725
        %2599 = vmatmul.mubr.bf16.gmra.mxu0 %v724
        %v2600 = vpop.f32.mrf.mxu0
        %v2601 = vadd.f32 %v1021, %v2600
        %v2602 = vpop.f32.mrf.mxu0
        %v2603 = vadd.f32 %v1025, %v2602
        %v2604 = vpop.f32.mrf.mxu0
        %v2605 = vadd.f32 %v1021, %v2604
        %v2606 = vpop.f32.mrf.mxu0
        %v2607 = vadd.f32 %v1025, %v2606
        %2608 = vmatprep.mubr.bf16.mxu0 %v729
        %2609 = vmatmul.mubr.bf16.gmra.mxu0 %v728
        %v2610 = vpop.f32.mrf.mxu0
        %v2611 = vadd.f32 %v1021, %v2610
        %v2612 = vpop.f32.mrf.mxu0
        %v2613 = vadd.f32 %v1025, %v2612
        %v2614 = vpop.f32.mrf.mxu0
        %v2615 = vadd.f32 %v1021, %v2614
        %v2616 = vpop.f32.mrf.mxu0
        %v2617 = vadd.f32 %v1025, %v2616
        %2618 = vmatprep.mubr.bf16.mxu0 %v733
        %2619 = vmatmul.mubr.bf16.gmra.mxu0 %v732
        %v2620 = vpop.f32.mrf.mxu0
        %v2621 = vadd.f32 %v1021, %v2620
        %v2622 = vpop.f32.mrf.mxu0
        %v2623 = vadd.f32 %v1025, %v2622
        %v2624 = vpop.f32.mrf.mxu0
        %v2625 = vadd.f32 %v1021, %v2624
        %v2626 = vpop.f32.mrf.mxu0
        %v2627 = vadd.f32 %v1025, %v2626
        %2628 = vmatprep.mubr.bf16.mxu0 %v737
        %2629 = vmatmul.mubr.bf16.gmra.mxu0 %v736
        %v2630 = vpop.f32.mrf.mxu0
        %v2631 = vadd.f32 %v1021, %v2630
        %v2632 = vpop.f32.mrf.mxu0
        %v2633 = vadd.f32 %v1025, %v2632
        %v2634 = vpop.f32.mrf.mxu0
        %v2635 = vadd.f32 %v1021, %v2634
        %v2636 = vpop.f32.mrf.mxu0
        %v2637 = vadd.f32 %v1025, %v2636
        %2638 = vmatprep.mubr.bf16.mxu0 %v741
        %2639 = vmatmul.mubr.bf16.gmra.mxu0 %v740
        %v2640 = vpop.f32.mrf.mxu0
        %v2641 = vadd.f32 %v1021, %v2640
        %v2642 = vpop.f32.mrf.mxu0
        %v2643 = vadd.f32 %v1025, %v2642
        %v2644 = vpop.f32.mrf.mxu0
        %v2645 = vadd.f32 %v1021, %v2644
        %v2646 = vpop.f32.mrf.mxu0
        %v2647 = vadd.f32 %v1025, %v2646
        %2648 = vmatprep.mubr.bf16.mxu0 %v745
        %2649 = vmatmul.mubr.bf16.gmra.mxu0 %v744
        %v2650 = vpop.f32.mrf.mxu0
        %v2651 = vadd.f32 %v1021, %v2650
        %v2652 = vpop.f32.mrf.mxu0
        %v2653 = vadd.f32 %v1025, %v2652
        %v2654 = vpop.f32.mrf.mxu0
        %v2655 = vadd.f32 %v1021, %v2654
        %v2656 = vpop.f32.mrf.mxu0
        %v2657 = vadd.f32 %v1025, %v2656
        %2658 = vmatprep.mubr.bf16.mxu0 %v749
        %2659 = vmatmul.mubr.bf16.gmra.mxu0 %v748
        %v2660 = vpop.f32.mrf.mxu0
        %v2661 = vadd.f32 %v1021, %v2660
        %v2662 = vpop.f32.mrf.mxu0
        %v2663 = vadd.f32 %v1025, %v2662
        %v2664 = vpop.f32.mrf.mxu0
        %v2665 = vadd.f32 %v1021, %v2664
        %v2666 = vpop.f32.mrf.mxu0
        %v2667 = vadd.f32 %v1025, %v2666
        %2668 = vdwg.mxu0
        %2669 = vmatprep.subr.bf16.mxu0 %v2005
        %2670 = vmatpush1.bf16.msra.mxu0 %v2004
        %2671 = vmatprep.subr.bf16.mxu0 %v1997
        %2672 = vmatpush1.bf16.msra.mxu0 %v1996
        %2673 = vmatprep.subr.bf16.mxu0 %v1989
        %2674 = vmatpush1.bf16.msra.mxu0 %v1988
        %2675 = vmatprep.subr.bf16.mxu0 %v1981
        %2676 = vmatpush1.bf16.msra.mxu0 %v1980
        %2677 = vmatprep.subr.bf16.mxu0 %v1973
        %2678 = vmatpush1.bf16.msra.mxu0 %v1972
        %2679 = vmatprep.subr.bf16.mxu0 %v1965
        %2680 = vmatpush1.bf16.msra.mxu0 %v1964
        %2681 = vmatprep.subr.bf16.mxu0 %v1957
        %2682 = vmatpush1.bf16.msra.mxu0 %v1956
        %2683 = vmatprep.subr.bf16.mxu0 %v1949
        %2684 = vmatpush1.bf16.msra.mxu0 %v1948
        %2685 = vmatprep.subr.bf16.mxu0 %v2069
        %2686 = vmatpush2.bf16.msra.mxu0 %v2068
        %2687 = vmatprep.subr.bf16.mxu0 %v2061
        %2688 = vmatpush2.bf16.msra.mxu0 %v2060
        %2689 = vmatprep.subr.bf16.mxu0 %v2053
        %2690 = vmatpush2.bf16.msra.mxu0 %v2052
        %2691 = vmatprep.subr.bf16.mxu0 %v2045
        %2692 = vmatpush2.bf16.msra.mxu0 %v2044
        %2693 = vmatprep.subr.bf16.mxu0 %v2037
        %2694 = vmatpush2.bf16.msra.mxu0 %v2036
        %2695 = vmatprep.subr.bf16.mxu0 %v2029
        %2696 = vmatpush2.bf16.msra.mxu0 %v2028
        %2697 = vmatprep.subr.bf16.mxu0 %v2021
        %2698 = vmatpush2.bf16.msra.mxu0 %v2020
        %2699 = vmatprep.subr.bf16.mxu0 %v2013
        %2700 = vmatpush2.bf16.msra.mxu0 %v2012
        %2701 = vmatprep.mubr.bf16.mxu0 %v723
        %2702 = vmatmul.mubr.bf16.gmra.mxu0 %v722
        %v2703 = vpop.f32.mrf.mxu0
        %v2704 = vadd.f32 %v2591, %v2703
        %v2705 = vpop.f32.mrf.mxu0
        %v2706 = vadd.f32 %v2593, %v2705
        %v2707 = vpop.f32.mrf.mxu0
        %v2708 = vadd.f32 %v2595, %v2707
        %v2709 = vpop.f32.mrf.mxu0
        %v2710 = vadd.f32 %v2597, %v2709
        %2711 = vmatprep.mubr.bf16.mxu0 %v727
        %2712 = vmatmul.mubr.bf16.gmra.mxu0 %v726
        %v2713 = vpop.f32.mrf.mxu0
        %v2714 = vadd.f32 %v2601, %v2713
        %v2715 = vpop.f32.mrf.mxu0
        %v2716 = vadd.f32 %v2603, %v2715
        %v2717 = vpop.f32.mrf.mxu0
        %v2718 = vadd.f32 %v2605, %v2717
        %v2719 = vpop.f32.mrf.mxu0
        %v2720 = vadd.f32 %v2607, %v2719
        %2721 = vmatprep.mubr.bf16.mxu0 %v731
        %2722 = vmatmul.mubr.bf16.gmra.mxu0 %v730
        %v2723 = vpop.f32.mrf.mxu0
        %v2724 = vadd.f32 %v2611, %v2723
        %v2725 = vpop.f32.mrf.mxu0
        %v2726 = vadd.f32 %v2613, %v2725
        %v2727 = vpop.f32.mrf.mxu0
        %v2728 = vadd.f32 %v2615, %v2727
        %v2729 = vpop.f32.mrf.mxu0
        %v2730 = vadd.f32 %v2617, %v2729
        %2731 = vmatprep.mubr.bf16.mxu0 %v735
        %2732 = vmatmul.mubr.bf16.gmra.mxu0 %v734
        %v2733 = vpop.f32.mrf.mxu0
        %v2734 = vadd.f32 %v2621, %v2733
        %v2735 = vpop.f32.mrf.mxu0
        %v2736 = vadd.f32 %v2623, %v2735
        %v2737 = vpop.f32.mrf.mxu0
        %v2738 = vadd.f32 %v2625, %v2737
        %v2739 = vpop.f32.mrf.mxu0
        %v2740 = vadd.f32 %v2627, %v2739
        %2741 = vmatprep.mubr.bf16.mxu0 %v739
        %2742 = vmatmul.mubr.bf16.gmra.mxu0 %v738
        %v2743 = vpop.f32.mrf.mxu0
        %v2744 = vadd.f32 %v2631, %v2743
        %v2745 = vpop.f32.mrf.mxu0
        %v2746 = vadd.f32 %v2633, %v2745
        %v2747 = vpop.f32.mrf.mxu0
        %v2748 = vadd.f32 %v2635, %v2747
        %v2749 = vpop.f32.mrf.mxu0
        %v2750 = vadd.f32 %v2637, %v2749
        %2751 = vmatprep.mubr.bf16.mxu0 %v743
        %2752 = vmatmul.mubr.bf16.gmra.mxu0 %v742
        %v2753 = vpop.f32.mrf.mxu0
        %v2754 = vadd.f32 %v2641, %v2753
        %v2755 = vpop.f32.mrf.mxu0
        %v2756 = vadd.f32 %v2643, %v2755
        %v2757 = vpop.f32.mrf.mxu0
        %v2758 = vadd.f32 %v2645, %v2757
        %v2759 = vpop.f32.mrf.mxu0
        %v2760 = vadd.f32 %v2647, %v2759
        %2761 = vmatprep.mubr.bf16.mxu0 %v747
        %2762 = vmatmul.mubr.bf16.gmra.mxu0 %v746
        %v2763 = vpop.f32.mrf.mxu0
        %v2764 = vadd.f32 %v2651, %v2763
        %v2765 = vpop.f32.mrf.mxu0
        %v2766 = vadd.f32 %v2653, %v2765
        %v2767 = vpop.f32.mrf.mxu0
        %v2768 = vadd.f32 %v2655, %v2767
        %v2769 = vpop.f32.mrf.mxu0
        %v2770 = vadd.f32 %v2657, %v2769
        %2771 = vmatprep.mubr.bf16.mxu0 %v751
        %2772 = vmatmul.mubr.bf16.gmra.mxu0 %v750
        %v2773 = vpop.f32.mrf.mxu0
        %v2774 = vadd.f32 %v2661, %v2773
        %v2775 = vpop.f32.mrf.mxu0
        %v2776 = vadd.f32 %v2663, %v2775
        %v2777 = vpop.f32.mrf.mxu0
        %v2778 = vadd.f32 %v2665, %v2777
        %v2779 = vpop.f32.mrf.mxu0
        %v2780 = vadd.f32 %v2667, %v2779
        %2781 = vdwg.mxu0
        %2782 = vmatprep.subr.bf16.mxu0 %v1879
        %2783 = vmatpush1.bf16.msra.mxu0 %v1878
        %2784 = vmatprep.subr.bf16.mxu0 %v1871
        %2785 = vmatpush1.bf16.msra.mxu0 %v1870
        %2786 = vmatprep.subr.bf16.mxu0 %v1863
        %2787 = vmatpush1.bf16.msra.mxu0 %v1862
        %2788 = vmatprep.subr.bf16.mxu0 %v1855
        %2789 = vmatpush1.bf16.msra.mxu0 %v1854
        %2790 = vmatprep.subr.bf16.mxu0 %v1847
        %2791 = vmatpush1.bf16.msra.mxu0 %v1846
        %2792 = vmatprep.subr.bf16.mxu0 %v1839
        %2793 = vmatpush1.bf16.msra.mxu0 %v1838
        %2794 = vmatprep.subr.bf16.mxu0 %v1831
        %2795 = vmatpush1.bf16.msra.mxu0 %v1830
        %2796 = vmatprep.subr.bf16.mxu0 %v1823
        %2797 = vmatpush1.bf16.msra.mxu0 %v1822
        %2798 = vmatprep.subr.bf16.mxu0 %v1943
        %2799 = vmatpush2.bf16.msra.mxu0 %v1942
        %2800 = vmatprep.subr.bf16.mxu0 %v1935
        %2801 = vmatpush2.bf16.msra.mxu0 %v1934
        %2802 = vmatprep.subr.bf16.mxu0 %v1927
        %2803 = vmatpush2.bf16.msra.mxu0 %v1926
        %2804 = vmatprep.subr.bf16.mxu0 %v1919
        %2805 = vmatpush2.bf16.msra.mxu0 %v1918
        %2806 = vmatprep.subr.bf16.mxu0 %v1911
        %2807 = vmatpush2.bf16.msra.mxu0 %v1910
        %2808 = vmatprep.subr.bf16.mxu0 %v1903
        %2809 = vmatpush2.bf16.msra.mxu0 %v1902
        %2810 = vmatprep.subr.bf16.mxu0 %v1895
        %2811 = vmatpush2.bf16.msra.mxu0 %v1894
        %2812 = vmatprep.subr.bf16.mxu0 %v1887
        %2813 = vmatpush2.bf16.msra.mxu0 %v1886
        %2814 = vmatprep.mubr.bf16.mxu0 %v721
        %2815 = vmatmul.mubr.bf16.gmra.mxu0 %v720
        %v2816 = vpop.f32.mrf.mxu0
        %v2817 = vadd.f32 %v1029, %v2816
        %v2818 = vpop.f32.mrf.mxu0
        %v2819 = vadd.f32 %v1033, %v2818
        %v2820 = vpop.f32.mrf.mxu0
        %v2821 = vadd.f32 %v1029, %v2820
        %v2822 = vpop.f32.mrf.mxu0
        %v2823 = vadd.f32 %v1033, %v2822
        %2824 = vmatprep.mubr.bf16.mxu0 %v725
        %2825 = vmatmul.mubr.bf16.gmra.mxu0 %v724
        %v2826 = vpop.f32.mrf.mxu0
        %v2827 = vadd.f32 %v1029, %v2826
        %v2828 = vpop.f32.mrf.mxu0
        %v2829 = vadd.f32 %v1033, %v2828
        %v2830 = vpop.f32.mrf.mxu0
        %v2831 = vadd.f32 %v1029, %v2830
        %v2832 = vpop.f32.mrf.mxu0
        %v2833 = vadd.f32 %v1033, %v2832
        %2834 = vmatprep.mubr.bf16.mxu0 %v729
        %2835 = vmatmul.mubr.bf16.gmra.mxu0 %v728
        %v2836 = vpop.f32.mrf.mxu0
        %v2837 = vadd.f32 %v1029, %v2836
        %v2838 = vpop.f32.mrf.mxu0
        %v2839 = vadd.f32 %v1033, %v2838
        %v2840 = vpop.f32.mrf.mxu0
        %v2841 = vadd.f32 %v1029, %v2840
        %v2842 = vpop.f32.mrf.mxu0
        %v2843 = vadd.f32 %v1033, %v2842
        %2844 = vmatprep.mubr.bf16.mxu0 %v733
        %2845 = vmatmul.mubr.bf16.gmra.mxu0 %v732
        %v2846 = vpop.f32.mrf.mxu0
        %v2847 = vadd.f32 %v1029, %v2846
        %v2848 = vpop.f32.mrf.mxu0
        %v2849 = vadd.f32 %v1033, %v2848
        %v2850 = vpop.f32.mrf.mxu0
        %v2851 = vadd.f32 %v1029, %v2850
        %v2852 = vpop.f32.mrf.mxu0
        %v2853 = vadd.f32 %v1033, %v2852
        %2854 = vmatprep.mubr.bf16.mxu0 %v737
        %2855 = vmatmul.mubr.bf16.gmra.mxu0 %v736
        %v2856 = vpop.f32.mrf.mxu0
        %v2857 = vadd.f32 %v1029, %v2856
        %v2858 = vpop.f32.mrf.mxu0
        %v2859 = vadd.f32 %v1033, %v2858
        %v2860 = vpop.f32.mrf.mxu0
        %v2861 = vadd.f32 %v1029, %v2860
        %v2862 = vpop.f32.mrf.mxu0
        %v2863 = vadd.f32 %v1033, %v2862
        %2864 = vmatprep.mubr.bf16.mxu0 %v741
        %2865 = vmatmul.mubr.bf16.gmra.mxu0 %v740
        %v2866 = vpop.f32.mrf.mxu0
        %v2867 = vadd.f32 %v1029, %v2866
        %v2868 = vpop.f32.mrf.mxu0
        %v2869 = vadd.f32 %v1033, %v2868
        %v2870 = vpop.f32.mrf.mxu0
        %v2871 = vadd.f32 %v1029, %v2870
        %v2872 = vpop.f32.mrf.mxu0
        %v2873 = vadd.f32 %v1033, %v2872
        %2874 = vmatprep.mubr.bf16.mxu0 %v745
        %2875 = vmatmul.mubr.bf16.gmra.mxu0 %v744
        %v2876 = vpop.f32.mrf.mxu0
        %v2877 = vadd.f32 %v1029, %v2876
        %v2878 = vpop.f32.mrf.mxu0
        %v2879 = vadd.f32 %v1033, %v2878
        %v2880 = vpop.f32.mrf.mxu0
        %v2881 = vadd.f32 %v1029, %v2880
        %v2882 = vpop.f32.mrf.mxu0
        %v2883 = vadd.f32 %v1033, %v2882
        %2884 = vmatprep.mubr.bf16.mxu0 %v749
        %2885 = vmatmul.mubr.bf16.gmra.mxu0 %v748
        %v2886 = vpop.f32.mrf.mxu0
        %v2887 = vadd.f32 %v1029, %v2886
        %v2888 = vpop.f32.mrf.mxu0
        %v2889 = vadd.f32 %v1033, %v2888
        %v2890 = vpop.f32.mrf.mxu0
        %v2891 = vadd.f32 %v1029, %v2890
        %v2892 = vpop.f32.mrf.mxu0
        %v2893 = vadd.f32 %v1033, %v2892
        %2894 = vdwg.mxu0
        %2895 = vmatprep.subr.bf16.mxu0 %v2007
        %2896 = vmatpush1.bf16.msra.mxu0 %v2006
        %2897 = vmatprep.subr.bf16.mxu0 %v1999
        %2898 = vmatpush1.bf16.msra.mxu0 %v1998
        %2899 = vmatprep.subr.bf16.mxu0 %v1991
        %2900 = vmatpush1.bf16.msra.mxu0 %v1990
        %2901 = vmatprep.subr.bf16.mxu0 %v1983
        %2902 = vmatpush1.bf16.msra.mxu0 %v1982
        %2903 = vmatprep.subr.bf16.mxu0 %v1975
        %2904 = vmatpush1.bf16.msra.mxu0 %v1974
        %2905 = vmatprep.subr.bf16.mxu0 %v1967
        %2906 = vmatpush1.bf16.msra.mxu0 %v1966
        %2907 = vmatprep.subr.bf16.mxu0 %v1959
        %2908 = vmatpush1.bf16.msra.mxu0 %v1958
        %2909 = vmatprep.subr.bf16.mxu0 %v1951
        %2910 = vmatpush1.bf16.msra.mxu0 %v1950
        %2911 = vmatprep.subr.bf16.mxu0 %v2071
        %2912 = vmatpush2.bf16.msra.mxu0 %v2070
        %2913 = vmatprep.subr.bf16.mxu0 %v2063
        %2914 = vmatpush2.bf16.msra.mxu0 %v2062
        %2915 = vmatprep.subr.bf16.mxu0 %v2055
        %2916 = vmatpush2.bf16.msra.mxu0 %v2054
        %2917 = vmatprep.subr.bf16.mxu0 %v2047
        %2918 = vmatpush2.bf16.msra.mxu0 %v2046
        %2919 = vmatprep.subr.bf16.mxu0 %v2039
        %2920 = vmatpush2.bf16.msra.mxu0 %v2038
        %2921 = vmatprep.subr.bf16.mxu0 %v2031
        %2922 = vmatpush2.bf16.msra.mxu0 %v2030
        %2923 = vmatprep.subr.bf16.mxu0 %v2023
        %2924 = vmatpush2.bf16.msra.mxu0 %v2022
        %2925 = vmatprep.subr.bf16.mxu0 %v2015
        %2926 = vmatpush2.bf16.msra.mxu0 %v2014
        %2927 = vmatprep.mubr.bf16.mxu0 %v723
        %2928 = vmatmul.mubr.bf16.gmra.mxu0 %v722
        %v2929 = vpop.f32.mrf.mxu0
        %v2930 = vadd.f32 %v2817, %v2929
        %v2931 = vpop.f32.mrf.mxu0
        %v2932 = vadd.f32 %v2819, %v2931
        %v2933 = vpop.f32.mrf.mxu0
        %v2934 = vadd.f32 %v2821, %v2933
        %v2935 = vpop.f32.mrf.mxu0
        %v2936 = vadd.f32 %v2823, %v2935
        %2937 = vmatprep.mubr.bf16.mxu0 %v727
        %2938 = vmatmul.mubr.bf16.gmra.mxu0 %v726
        %v2939 = vpop.f32.mrf.mxu0
        %v2940 = vadd.f32 %v2827, %v2939
        %v2941 = vpop.f32.mrf.mxu0
        %v2942 = vadd.f32 %v2829, %v2941
        %v2943 = vpop.f32.mrf.mxu0
        %v2944 = vadd.f32 %v2831, %v2943
        %v2945 = vpop.f32.mrf.mxu0
        %v2946 = vadd.f32 %v2833, %v2945
        %2947 = vmatprep.mubr.bf16.mxu0 %v731
        %2948 = vmatmul.mubr.bf16.gmra.mxu0 %v730
        %v2949 = vpop.f32.mrf.mxu0
        %v2950 = vadd.f32 %v2837, %v2949
        %v2951 = vpop.f32.mrf.mxu0
        %v2952 = vadd.f32 %v2839, %v2951
        %v2953 = vpop.f32.mrf.mxu0
        %v2954 = vadd.f32 %v2841, %v2953
        %v2955 = vpop.f32.mrf.mxu0
        %v2956 = vadd.f32 %v2843, %v2955
        %2957 = vmatprep.mubr.bf16.mxu0 %v735
        %2958 = vmatmul.mubr.bf16.gmra.mxu0 %v734
        %v2959 = vpop.f32.mrf.mxu0
        %v2960 = vadd.f32 %v2847, %v2959
        %v2961 = vpop.f32.mrf.mxu0
        %v2962 = vadd.f32 %v2849, %v2961
        %v2963 = vpop.f32.mrf.mxu0
        %v2964 = vadd.f32 %v2851, %v2963
        %v2965 = vpop.f32.mrf.mxu0
        %v2966 = vadd.f32 %v2853, %v2965
        %2967 = vmatprep.mubr.bf16.mxu0 %v739
        %2968 = vmatmul.mubr.bf16.gmra.mxu0 %v738
        %v2969 = vpop.f32.mrf.mxu0
        %v2970 = vadd.f32 %v2857, %v2969
        %v2971 = vpop.f32.mrf.mxu0
        %v2972 = vadd.f32 %v2859, %v2971
        %v2973 = vpop.f32.mrf.mxu0
        %v2974 = vadd.f32 %v2861, %v2973
        %v2975 = vpop.f32.mrf.mxu0
        %v2976 = vadd.f32 %v2863, %v2975
        %2977 = vmatprep.mubr.bf16.mxu0 %v743
        %2978 = vmatmul.mubr.bf16.gmra.mxu0 %v742
        %v2979 = vpop.f32.mrf.mxu0
        %v2980 = vadd.f32 %v2867, %v2979
        %v2981 = vpop.f32.mrf.mxu0
        %v2982 = vadd.f32 %v2869, %v2981
        %v2983 = vpop.f32.mrf.mxu0
        %v2984 = vadd.f32 %v2871, %v2983
        %v2985 = vpop.f32.mrf.mxu0
        %v2986 = vadd.f32 %v2873, %v2985
        %2987 = vmatprep.mubr.bf16.mxu0 %v747
        %2988 = vmatmul.mubr.bf16.gmra.mxu0 %v746
        %v2989 = vpop.f32.mrf.mxu0
        %v2990 = vadd.f32 %v2877, %v2989
        %v2991 = vpop.f32.mrf.mxu0
        %v2992 = vadd.f32 %v2879, %v2991
        %v2993 = vpop.f32.mrf.mxu0
        %v2994 = vadd.f32 %v2881, %v2993
        %v2995 = vpop.f32.mrf.mxu0
        %v2996 = vadd.f32 %v2883, %v2995
        %2997 = vmatprep.mubr.bf16.mxu0 %v751
        %2998 = vmatmul.mubr.bf16.gmra.mxu0 %v750
        %v2999 = vpop.f32.mrf.mxu0
        %v3000 = vadd.f32 %v2887, %v2999
        %v3001 = vpop.f32.mrf.mxu0
        %v3002 = vadd.f32 %v2889, %v3001
        %v3003 = vpop.f32.mrf.mxu0
        %v3004 = vadd.f32 %v2891, %v3003
        %v3005 = vpop.f32.mrf.mxu0
        %v3006 = vadd.f32 %v2893, %v3005
        %3007 = vdwg.mxu0
        %3008 = vmatprep.subr.bf16.mxu0 %v1881
        %3009 = vmatpush1.bf16.msra.mxu0 %v1880
        %3010 = vmatprep.subr.bf16.mxu0 %v1873
        %3011 = vmatpush1.bf16.msra.mxu0 %v1872
        %3012 = vmatprep.subr.bf16.mxu0 %v1865
        %3013 = vmatpush1.bf16.msra.mxu0 %v1864
        %3014 = vmatprep.subr.bf16.mxu0 %v1857
        %3015 = vmatpush1.bf16.msra.mxu0 %v1856
        %3016 = vmatprep.subr.bf16.mxu0 %v1849
        %3017 = vmatpush1.bf16.msra.mxu0 %v1848
        %3018 = vmatprep.subr.bf16.mxu0 %v1841
        %3019 = vmatpush1.bf16.msra.mxu0 %v1840
        %3020 = vmatprep.subr.bf16.mxu0 %v1833
        %3021 = vmatpush1.bf16.msra.mxu0 %v1832
        %3022 = vmatprep.subr.bf16.mxu0 %v1825
        %3023 = vmatpush1.bf16.msra.mxu0 %v1824
        %3024 = vmatprep.subr.bf16.mxu0 %v1945
        %3025 = vmatpush2.bf16.msra.mxu0 %v1944
        %3026 = vmatprep.subr.bf16.mxu0 %v1937
        %3027 = vmatpush2.bf16.msra.mxu0 %v1936
        %3028 = vmatprep.subr.bf16.mxu0 %v1929
        %3029 = vmatpush2.bf16.msra.mxu0 %v1928
        %3030 = vmatprep.subr.bf16.mxu0 %v1921
        %3031 = vmatpush2.bf16.msra.mxu0 %v1920
        %3032 = vmatprep.subr.bf16.mxu0 %v1913
        %3033 = vmatpush2.bf16.msra.mxu0 %v1912
        %3034 = vmatprep.subr.bf16.mxu0 %v1905
        %3035 = vmatpush2.bf16.msra.mxu0 %v1904
        %3036 = vmatprep.subr.bf16.mxu0 %v1897
        %3037 = vmatpush2.bf16.msra.mxu0 %v1896
        %3038 = vmatprep.subr.bf16.mxu0 %v1889
        %3039 = vmatpush2.bf16.msra.mxu0 %v1888
        %3040 = vmatprep.mubr.bf16.mxu0 %v721
        %3041 = vmatmul.mubr.bf16.gmra.mxu0 %v720
        %v3042 = vpop.f32.mrf.mxu0
        %v3043 = vadd.f32 %v1037, %v3042
        %v3044 = vpop.f32.mrf.mxu0
        %v3045 = vadd.f32 %v1041, %v3044
        %v3046 = vpop.f32.mrf.mxu0
        %v3047 = vadd.f32 %v1037, %v3046
        %v3048 = vpop.f32.mrf.mxu0
        %v3049 = vadd.f32 %v1041, %v3048
        %3050 = vmatprep.mubr.bf16.mxu0 %v725
        %3051 = vmatmul.mubr.bf16.gmra.mxu0 %v724
        %v3052 = vpop.f32.mrf.mxu0
        %v3053 = vadd.f32 %v1037, %v3052
        %v3054 = vpop.f32.mrf.mxu0
        %v3055 = vadd.f32 %v1041, %v3054
        %v3056 = vpop.f32.mrf.mxu0
        %v3057 = vadd.f32 %v1037, %v3056
        %v3058 = vpop.f32.mrf.mxu0
        %v3059 = vadd.f32 %v1041, %v3058
        %3060 = vmatprep.mubr.bf16.mxu0 %v729
        %3061 = vmatmul.mubr.bf16.gmra.mxu0 %v728
        %v3062 = vpop.f32.mrf.mxu0
        %v3063 = vadd.f32 %v1037, %v3062
        %v3064 = vpop.f32.mrf.mxu0
        %v3065 = vadd.f32 %v1041, %v3064
        %v3066 = vpop.f32.mrf.mxu0
        %v3067 = vadd.f32 %v1037, %v3066
        %v3068 = vpop.f32.mrf.mxu0
        %v3069 = vadd.f32 %v1041, %v3068
        %3070 = vmatprep.mubr.bf16.mxu0 %v733
        %3071 = vmatmul.mubr.bf16.gmra.mxu0 %v732
        %v3072 = vpop.f32.mrf.mxu0
        %v3073 = vadd.f32 %v1037, %v3072
        %v3074 = vpop.f32.mrf.mxu0
        %v3075 = vadd.f32 %v1041, %v3074
        %v3076 = vpop.f32.mrf.mxu0
        %v3077 = vadd.f32 %v1037, %v3076
        %v3078 = vpop.f32.mrf.mxu0
        %v3079 = vadd.f32 %v1041, %v3078
        %3080 = vmatprep.mubr.bf16.mxu0 %v737
        %3081 = vmatmul.mubr.bf16.gmra.mxu0 %v736
        %v3082 = vpop.f32.mrf.mxu0
        %v3083 = vadd.f32 %v1037, %v3082
        %v3084 = vpop.f32.mrf.mxu0
        %v3085 = vadd.f32 %v1041, %v3084
        %v3086 = vpop.f32.mrf.mxu0
        %v3087 = vadd.f32 %v1037, %v3086
        %v3088 = vpop.f32.mrf.mxu0
        %v3089 = vadd.f32 %v1041, %v3088
        %3090 = vmatprep.mubr.bf16.mxu0 %v741
        %3091 = vmatmul.mubr.bf16.gmra.mxu0 %v740
        %v3092 = vpop.f32.mrf.mxu0
        %v3093 = vadd.f32 %v1037, %v3092
        %v3094 = vpop.f32.mrf.mxu0
        %v3095 = vadd.f32 %v1041, %v3094
        %v3096 = vpop.f32.mrf.mxu0
        %v3097 = vadd.f32 %v1037, %v3096
        %v3098 = vpop.f32.mrf.mxu0
        %v3099 = vadd.f32 %v1041, %v3098
        %3100 = vmatprep.mubr.bf16.mxu0 %v745
        %3101 = vmatmul.mubr.bf16.gmra.mxu0 %v744
        %v3102 = vpop.f32.mrf.mxu0
        %v3103 = vadd.f32 %v1037, %v3102
        %v3104 = vpop.f32.mrf.mxu0
        %v3105 = vadd.f32 %v1041, %v3104
        %v3106 = vpop.f32.mrf.mxu0
        %v3107 = vadd.f32 %v1037, %v3106
        %v3108 = vpop.f32.mrf.mxu0
        %v3109 = vadd.f32 %v1041, %v3108
        %3110 = vmatprep.mubr.bf16.mxu0 %v749
        %3111 = vmatmul.mubr.bf16.gmra.mxu0 %v748
        %v3112 = vpop.f32.mrf.mxu0
        %v3113 = vadd.f32 %v1037, %v3112
        %v3114 = vpop.f32.mrf.mxu0
        %v3115 = vadd.f32 %v1041, %v3114
        %v3116 = vpop.f32.mrf.mxu0
        %v3117 = vadd.f32 %v1037, %v3116
        %v3118 = vpop.f32.mrf.mxu0
        %v3119 = vadd.f32 %v1041, %v3118
        %3120 = vdwg.mxu0
        %3121 = vmatprep.subr.bf16.mxu0 %v2009
        %3122 = vmatpush1.bf16.msra.mxu0 %v2008
        %3123 = vmatprep.subr.bf16.mxu0 %v2001
        %3124 = vmatpush1.bf16.msra.mxu0 %v2000
        %3125 = vmatprep.subr.bf16.mxu0 %v1993
        %3126 = vmatpush1.bf16.msra.mxu0 %v1992
        %3127 = vmatprep.subr.bf16.mxu0 %v1985
        %3128 = vmatpush1.bf16.msra.mxu0 %v1984
        %3129 = vmatprep.subr.bf16.mxu0 %v1977
        %3130 = vmatpush1.bf16.msra.mxu0 %v1976
        %3131 = vmatprep.subr.bf16.mxu0 %v1969
        %3132 = vmatpush1.bf16.msra.mxu0 %v1968
        %3133 = vmatprep.subr.bf16.mxu0 %v1961
        %3134 = vmatpush1.bf16.msra.mxu0 %v1960
        %3135 = vmatprep.subr.bf16.mxu0 %v1953
        %3136 = vmatpush1.bf16.msra.mxu0 %v1952
        %3137 = vmatprep.subr.bf16.mxu0 %v2073
        %3138 = vmatpush2.bf16.msra.mxu0 %v2072
        %3139 = vmatprep.subr.bf16.mxu0 %v2065
        %3140 = vmatpush2.bf16.msra.mxu0 %v2064
        %3141 = vmatprep.subr.bf16.mxu0 %v2057
        %3142 = vmatpush2.bf16.msra.mxu0 %v2056
        %3143 = vmatprep.subr.bf16.mxu0 %v2049
        %3144 = vmatpush2.bf16.msra.mxu0 %v2048
        %3145 = vmatprep.subr.bf16.mxu0 %v2041
        %3146 = vmatpush2.bf16.msra.mxu0 %v2040
        %3147 = vmatprep.subr.bf16.mxu0 %v2033
        %3148 = vmatpush2.bf16.msra.mxu0 %v2032
        %3149 = vmatprep.subr.bf16.mxu0 %v2025
        %3150 = vmatpush2.bf16.msra.mxu0 %v2024
        %3151 = vmatprep.subr.bf16.mxu0 %v2017
        %3152 = vmatpush2.bf16.msra.mxu0 %v2016
        %3153 = vmatprep.mubr.bf16.mxu0 %v723
        %3154 = vmatmul.mubr.bf16.gmra.mxu0 %v722
        %v3155 = vpop.f32.mrf.mxu0
        %v3156 = vadd.f32 %v3043, %v3155
        %v3157 = vpop.f32.mrf.mxu0
        %v3158 = vadd.f32 %v3045, %v3157
        %v3159 = vpop.f32.mrf.mxu0
        %v3160 = vadd.f32 %v3047, %v3159
        %v3161 = vpop.f32.mrf.mxu0
        %v3162 = vadd.f32 %v3049, %v3161
        %3163 = vmatprep.mubr.bf16.mxu0 %v727
        %3164 = vmatmul.mubr.bf16.gmra.mxu0 %v726
        %v3165 = vpop.f32.mrf.mxu0
        %v3166 = vadd.f32 %v3053, %v3165
        %v3167 = vpop.f32.mrf.mxu0
        %v3168 = vadd.f32 %v3055, %v3167
        %v3169 = vpop.f32.mrf.mxu0
        %v3170 = vadd.f32 %v3057, %v3169
        %v3171 = vpop.f32.mrf.mxu0
        %v3172 = vadd.f32 %v3059, %v3171
        %3173 = vmatprep.mubr.bf16.mxu0 %v731
        %3174 = vmatmul.mubr.bf16.gmra.mxu0 %v730
        %v3175 = vpop.f32.mrf.mxu0
        %v3176 = vadd.f32 %v3063, %v3175
        %v3177 = vpop.f32.mrf.mxu0
        %v3178 = vadd.f32 %v3065, %v3177
        %v3179 = vpop.f32.mrf.mxu0
        %v3180 = vadd.f32 %v3067, %v3179
        %v3181 = vpop.f32.mrf.mxu0
        %v3182 = vadd.f32 %v3069, %v3181
        %3183 = vmatprep.mubr.bf16.mxu0 %v735
        %3184 = vmatmul.mubr.bf16.gmra.mxu0 %v734
        %v3185 = vpop.f32.mrf.mxu0
        %v3186 = vadd.f32 %v3073, %v3185
        %v3187 = vpop.f32.mrf.mxu0
        %v3188 = vadd.f32 %v3075, %v3187
        %v3189 = vpop.f32.mrf.mxu0
        %v3190 = vadd.f32 %v3077, %v3189
        %v3191 = vpop.f32.mrf.mxu0
        %v3192 = vadd.f32 %v3079, %v3191
        %3193 = vmatprep.mubr.bf16.mxu0 %v739
        %3194 = vmatmul.mubr.bf16.gmra.mxu0 %v738
        %v3195 = vpop.f32.mrf.mxu0
        %v3196 = vadd.f32 %v3083, %v3195
        %v3197 = vpop.f32.mrf.mxu0
        %v3198 = vadd.f32 %v3085, %v3197
        %v3199 = vpop.f32.mrf.mxu0
        %v3200 = vadd.f32 %v3087, %v3199
        %v3201 = vpop.f32.mrf.mxu0
        %v3202 = vadd.f32 %v3089, %v3201
        %3203 = vmatprep.mubr.bf16.mxu0 %v743
        %3204 = vmatmul.mubr.bf16.gmra.mxu0 %v742
        %v3205 = vpop.f32.mrf.mxu0
        %v3206 = vadd.f32 %v3093, %v3205
        %v3207 = vpop.f32.mrf.mxu0
        %v3208 = vadd.f32 %v3095, %v3207
        %v3209 = vpop.f32.mrf.mxu0
        %v3210 = vadd.f32 %v3097, %v3209
        %v3211 = vpop.f32.mrf.mxu0
        %v3212 = vadd.f32 %v3099, %v3211
        %3213 = vmatprep.mubr.bf16.mxu0 %v747
        %3214 = vmatmul.mubr.bf16.gmra.mxu0 %v746
        %v3215 = vpop.f32.mrf.mxu0
        %v3216 = vadd.f32 %v3103, %v3215
        %v3217 = vpop.f32.mrf.mxu0
        %v3218 = vadd.f32 %v3105, %v3217
        %v3219 = vpop.f32.mrf.mxu0
        %v3220 = vadd.f32 %v3107, %v3219
        %v3221 = vpop.f32.mrf.mxu0
        %v3222 = vadd.f32 %v3109, %v3221
        %3223 = vmatprep.mubr.bf16.mxu0 %v751
        %3224 = vmatmul.mubr.bf16.gmra.mxu0 %v750
        %v3225 = vpop.f32.mrf.mxu0
        %v3226 = vadd.f32 %v3113, %v3225
        %v3227 = vpop.f32.mrf.mxu0
        %v3228 = vadd.f32 %v3115, %v3227
        %v3229 = vpop.f32.mrf.mxu0
        %v3230 = vadd.f32 %v3117, %v3229
        %v3231 = vpop.f32.mrf.mxu0
        %v3232 = vadd.f32 %v3119, %v3231
        %3233 = vdwg.mxu0
        %v3234 = vmax.f32 %v2478, 0.0
        %v3235 = vmax.f32 %v2480, 0.0
        %v3236 = vmax.f32 %v2704, 0.0
        %v3237 = vmax.f32 %v2706, 0.0
        %v3238 = vmax.f32 %v2930, 0.0
        %v3239 = vmax.f32 %v2932, 0.0
        %v3240 = vmax.f32 %v3156, 0.0
        %v3241 = vmax.f32 %v3158, 0.0
        %v3242 = vmax.f32 %v2482, 0.0
        %v3243 = vmax.f32 %v2484, 0.0
        %v3244 = vmax.f32 %v2708, 0.0
        %v3245 = vmax.f32 %v2710, 0.0
        %v3246 = vmax.f32 %v2934, 0.0
        %v3247 = vmax.f32 %v2936, 0.0
        %v3248 = vmax.f32 %v3160, 0.0
        %v3249 = vmax.f32 %v3162, 0.0
        %v3250 = vmax.f32 %v2488, 0.0
        %v3251 = vmax.f32 %v2490, 0.0
        %v3252 = vmax.f32 %v2714, 0.0
        %v3253 = vmax.f32 %v2716, 0.0
        %v3254 = vmax.f32 %v2940, 0.0
        %v3255 = vmax.f32 %v2942, 0.0
        %v3256 = vmax.f32 %v3166, 0.0
        %v3257 = vmax.f32 %v3168, 0.0
        %v3258 = vmax.f32 %v2492, 0.0
        %v3259 = vmax.f32 %v2494, 0.0
        %v3260 = vmax.f32 %v2718, 0.0
        %v3261 = vmax.f32 %v2720, 0.0
        %v3262 = vmax.f32 %v2944, 0.0
        %v3263 = vmax.f32 %v2946, 0.0
        %v3264 = vmax.f32 %v3170, 0.0
        %v3265 = vmax.f32 %v3172, 0.0
        %v3266 = vmax.f32 %v2498, 0.0
        %v3267 = vmax.f32 %v2500, 0.0
        %v3268 = vmax.f32 %v2724, 0.0
        %v3269 = vmax.f32 %v2726, 0.0
        %v3270 = vmax.f32 %v2950, 0.0
        %v3271 = vmax.f32 %v2952, 0.0
        %v3272 = vmax.f32 %v3176, 0.0
        %v3273 = vmax.f32 %v3178, 0.0
        %v3274 = vmax.f32 %v2502, 0.0
        %v3275 = vmax.f32 %v2504, 0.0
        %v3276 = vmax.f32 %v2728, 0.0
        %v3277 = vmax.f32 %v2730, 0.0
        %v3278 = vmax.f32 %v2954, 0.0
        %v3279 = vmax.f32 %v2956, 0.0
        %v3280 = vmax.f32 %v3180, 0.0
        %v3281 = vmax.f32 %v3182, 0.0
        %v3282 = vmax.f32 %v2508, 0.0
        %v3283 = vmax.f32 %v2510, 0.0
        %v3284 = vmax.f32 %v2734, 0.0
        %v3285 = vmax.f32 %v2736, 0.0
        %v3286 = vmax.f32 %v2960, 0.0
        %v3287 = vmax.f32 %v2962, 0.0
        %v3288 = vmax.f32 %v3186, 0.0
        %v3289 = vmax.f32 %v3188, 0.0
        %v3290 = vmax.f32 %v2512, 0.0
        %v3291 = vmax.f32 %v2514, 0.0
        %v3292 = vmax.f32 %v2738, 0.0
        %v3293 = vmax.f32 %v2740, 0.0
        %v3294 = vmax.f32 %v2964, 0.0
        %v3295 = vmax.f32 %v2966, 0.0
        %v3296 = vmax.f32 %v3190, 0.0
        %v3297 = vmax.f32 %v3192, 0.0
        %v3298 = vmax.f32 %v2518, 0.0
        %v3299 = vmax.f32 %v2520, 0.0
        %v3300 = vmax.f32 %v2744, 0.0
        %v3301 = vmax.f32 %v2746, 0.0
        %v3302 = vmax.f32 %v2970, 0.0
        %v3303 = vmax.f32 %v2972, 0.0
        %v3304 = vmax.f32 %v3196, 0.0
        %v3305 = vmax.f32 %v3198, 0.0
        %v3306 = vmax.f32 %v2522, 0.0
        %v3307 = vmax.f32 %v2524, 0.0
        %v3308 = vmax.f32 %v2748, 0.0
        %v3309 = vmax.f32 %v2750, 0.0
        %v3310 = vmax.f32 %v2974, 0.0
        %v3311 = vmax.f32 %v2976, 0.0
        %v3312 = vmax.f32 %v3200, 0.0
        %v3313 = vmax.f32 %v3202, 0.0
        %v3314 = vmax.f32 %v2528, 0.0
        %v3315 = vmax.f32 %v2530, 0.0
        %v3316 = vmax.f32 %v2754, 0.0
        %v3317 = vmax.f32 %v2756, 0.0
        %v3318 = vmax.f32 %v2980, 0.0
        %v3319 = vmax.f32 %v2982, 0.0
        %v3320 = vmax.f32 %v3206, 0.0
        %v3321 = vmax.f32 %v3208, 0.0
        %v3322 = vmax.f32 %v2532, 0.0
        %v3323 = vmax.f32 %v2534, 0.0
        %v3324 = vmax.f32 %v2758, 0.0
        %v3325 = vmax.f32 %v2760, 0.0
        %v3326 = vmax.f32 %v2984, 0.0
        %v3327 = vmax.f32 %v2986, 0.0
        %v3328 = vmax.f32 %v3210, 0.0
        %v3329 = vmax.f32 %v3212, 0.0
        %v3330 = vmax.f32 %v2538, 0.0
        %v3331 = vmax.f32 %v2540, 0.0
        %v3332 = vmax.f32 %v2764, 0.0
        %v3333 = vmax.f32 %v2766, 0.0
        %v3334 = vmax.f32 %v2990, 0.0
        %v3335 = vmax.f32 %v2992, 0.0
        %v3336 = vmax.f32 %v3216, 0.0
        %v3337 = vmax.f32 %v3218, 0.0
        %v3338 = vmax.f32 %v2542, 0.0
        %v3339 = vmax.f32 %v2544, 0.0
        %v3340 = vmax.f32 %v2768, 0.0
        %v3341 = vmax.f32 %v2770, 0.0
        %v3342 = vmax.f32 %v2994, 0.0
        %v3343 = vmax.f32 %v2996, 0.0
        %v3344 = vmax.f32 %v3220, 0.0
        %v3345 = vmax.f32 %v3222, 0.0
        %v3346 = vmax.f32 %v2548, 0.0
        %v3347 = vmax.f32 %v2550, 0.0
        %v3348 = vmax.f32 %v2774, 0.0
        %v3349 = vmax.f32 %v2776, 0.0
        %v3350 = vmax.f32 %v3000, 0.0
        %v3351 = vmax.f32 %v3002, 0.0
        %v3352 = vmax.f32 %v3226, 0.0
        %v3353 = vmax.f32 %v3228, 0.0
        %v3354 = vmax.f32 %v2552, 0.0
        %v3355 = vmax.f32 %v2554, 0.0
        %v3356 = vmax.f32 %v2778, 0.0
        %v3357 = vmax.f32 %v2780, 0.0
        %v3358 = vmax.f32 %v3004, 0.0
        %v3359 = vmax.f32 %v3006, 0.0
        %v3360 = vmax.f32 %v3230, 0.0
        %v3361 = vmax.f32 %v3232, 0.0
        %v3362 = vpack.c.bf16 %v3242, %v3234
        %v3363 = vpack.c.bf16 %v3243, %v3235
        %v3364 = vpack.c.bf16 %v3244, %v3236
        %v3365 = vpack.c.bf16 %v3245, %v3237
        %v3366 = vpack.c.bf16 %v3246, %v3238
        %v3367 = vpack.c.bf16 %v3247, %v3239
        %v3368 = vpack.c.bf16 %v3248, %v3240
        %v3369 = vpack.c.bf16 %v3249, %v3241
        %v3370 = vpack.c.bf16 %v3258, %v3250
        %v3371 = vpack.c.bf16 %v3259, %v3251
        %v3372 = vpack.c.bf16 %v3260, %v3252
        %v3373 = vpack.c.bf16 %v3261, %v3253
        %v3374 = vpack.c.bf16 %v3262, %v3254
        %v3375 = vpack.c.bf16 %v3263, %v3255
        %v3376 = vpack.c.bf16 %v3264, %v3256
        %v3377 = vpack.c.bf16 %v3265, %v3257
        %v3378 = vpack.c.bf16 %v3274, %v3266
        %v3379 = vpack.c.bf16 %v3275, %v3267
        %v3380 = vpack.c.bf16 %v3276, %v3268
        %v3381 = vpack.c.bf16 %v3277, %v3269
        %v3382 = vpack.c.bf16 %v3278, %v3270
        %v3383 = vpack.c.bf16 %v3279, %v3271
        %v3384 = vpack.c.bf16 %v3280, %v3272
        %v3385 = vpack.c.bf16 %v3281, %v3273
        %v3386 = vpack.c.bf16 %v3290, %v3282
        %v3387 = vpack.c.bf16 %v3291, %v3283
        %v3388 = vpack.c.bf16 %v3292, %v3284
        %v3389 = vpack.c.bf16 %v3293, %v3285
        %v3390 = vpack.c.bf16 %v3294, %v3286
        %v3391 = vpack.c.bf16 %v3295, %v3287
        %v3392 = vpack.c.bf16 %v3296, %v3288
        %v3393 = vpack.c.bf16 %v3297, %v3289
        %v3394 = vpack.c.bf16 %v3306, %v3298
        %v3395 = vpack.c.bf16 %v3307, %v3299
        %v3396 = vpack.c.bf16 %v3308, %v3300
        %v3397 = vpack.c.bf16 %v3309, %v3301
        %v3398 = vpack.c.bf16 %v3310, %v3302
        %v3399 = vpack.c.bf16 %v3311, %v3303
        %v3400 = vpack.c.bf16 %v3312, %v3304
        %v3401 = vpack.c.bf16 %v3313, %v3305
        %v3402 = vpack.c.bf16 %v3322, %v3314
        %v3403 = vpack.c.bf16 %v3323, %v3315
        %v3404 = vpack.c.bf16 %v3324, %v3316
        %v3405 = vpack.c.bf16 %v3325, %v3317
        %v3406 = vpack.c.bf16 %v3326, %v3318
        %v3407 = vpack.c.bf16 %v3327, %v3319
        %v3408 = vpack.c.bf16 %v3328, %v3320
        %v3409 = vpack.c.bf16 %v3329, %v3321
        %v3410 = vpack.c.bf16 %v3338, %v3330
        %v3411 = vpack.c.bf16 %v3339, %v3331
        %v3412 = vpack.c.bf16 %v3340, %v3332
        %v3413 = vpack.c.bf16 %v3341, %v3333
        %v3414 = vpack.c.bf16 %v3342, %v3334
        %v3415 = vpack.c.bf16 %v3343, %v3335
        %v3416 = vpack.c.bf16 %v3344, %v3336
        %v3417 = vpack.c.bf16 %v3345, %v3337
        %v3418 = vpack.c.bf16 %v3354, %v3346
        %v3419 = vpack.c.bf16 %v3355, %v3347
        %v3420 = vpack.c.bf16 %v3356, %v3348
        %v3421 = vpack.c.bf16 %v3357, %v3349
        %v3422 = vpack.c.bf16 %v3358, %v3350
        %v3423 = vpack.c.bf16 %v3359, %v3351
        %v3424 = vpack.c.bf16 %v3360, %v3352
        %v3425 = vpack.c.bf16 %v3361, %v3353
        %v3426 = vld [vmem:[#allocation5] sm:$0xff]
        %v3427 = vld [vmem:[#allocation5 + $0x8] sm:$0xff]
        %v3428 = vld [vmem:[#allocation5 + $0x10] sm:$0xff]
        %v3429 = vld [vmem:[#allocation5 + $0x18] sm:$0xff]
        %v3430 = vld [vmem:[#allocation5 + $0x20] sm:$0xff]
        %v3431 = vld [vmem:[#allocation5 + $0x28] sm:$0xff]
        %v3432 = vld [vmem:[#allocation5 + $0x30] sm:$0xff]
        %v3433 = vld [vmem:[#allocation5 + $0x38] sm:$0xff]
        %v3434 = vld [vmem:[#allocation5 + $0x40] sm:$0xff]
        %v3435 = vld [vmem:[#allocation5 + $0x48] sm:$0xff]
        %v3436 = vld [vmem:[#allocation5 + $0x50] sm:$0xff]
        %v3437 = vld [vmem:[#allocation5 + $0x58] sm:$0xff]
        %v3438 = vld [vmem:[#allocation5 + $0x60] sm:$0xff]
        %v3439 = vld [vmem:[#allocation5 + $0x68] sm:$0xff]
        %v3440 = vld [vmem:[#allocation5 + $0x70] sm:$0xff]
        %v3441 = vld [vmem:[#allocation5 + $0x78] sm:$0xff]
        %v3442 = vld [vmem:[#allocation5 + $0x80] sm:$0xff]
        %v3443 = vld [vmem:[#allocation5 + $0x88] sm:$0xff]
        %v3444 = vld [vmem:[#allocation5 + $0x90] sm:$0xff]
        %v3445 = vld [vmem:[#allocation5 + $0x98] sm:$0xff]
        %v3446 = vld [vmem:[#allocation5 + $0xa0] sm:$0xff]
        %v3447 = vld [vmem:[#allocation5 + $0xa8] sm:$0xff]
        %v3448 = vld [vmem:[#allocation5 + $0xb0] sm:$0xff]
        %v3449 = vld [vmem:[#allocation5 + $0xb8] sm:$0xff]
        %v3450 = vld [vmem:[#allocation5 + $0xc0] sm:$0xff]
        %v3451 = vld [vmem:[#allocation5 + $0xc8] sm:$0xff]
        %v3452 = vld [vmem:[#allocation5 + $0xd0] sm:$0xff]
        %v3453 = vld [vmem:[#allocation5 + $0xd8] sm:$0xff]
        %v3454 = vld [vmem:[#allocation5 + $0xe0] sm:$0xff]
        %v3455 = vld [vmem:[#allocation5 + $0xe8] sm:$0xff]
        %v3456 = vld [vmem:[#allocation5 + $0xf0] sm:$0xff]
        %v3457 = vld [vmem:[#allocation5 + $0xf8] sm:$0xff]
        %v3458 = vld [vmem:[#allocation5 + $0x100] sm:$0xff]
        %v3459 = vld [vmem:[#allocation5 + $0x108] sm:$0xff]
        %v3460 = vld [vmem:[#allocation5 + $0x110] sm:$0xff]
        %v3461 = vld [vmem:[#allocation5 + $0x118] sm:$0xff]
        %v3462 = vld [vmem:[#allocation5 + $0x120] sm:$0xff]
        %v3463 = vld [vmem:[#allocation5 + $0x128] sm:$0xff]
        %v3464 = vld [vmem:[#allocation5 + $0x130] sm:$0xff]
        %v3465 = vld [vmem:[#allocation5 + $0x138] sm:$0xff]
        %v3466 = vld [vmem:[#allocation5 + $0x140] sm:$0xff]
        %v3467 = vld [vmem:[#allocation5 + $0x148] sm:$0xff]
        %v3468 = vld [vmem:[#allocation5 + $0x150] sm:$0xff]
        %v3469 = vld [vmem:[#allocation5 + $0x158] sm:$0xff]
        %v3470 = vld [vmem:[#allocation5 + $0x160] sm:$0xff]
        %v3471 = vld [vmem:[#allocation5 + $0x168] sm:$0xff]
        %v3472 = vld [vmem:[#allocation5 + $0x170] sm:$0xff]
        %v3473 = vld [vmem:[#allocation5 + $0x178] sm:$0xff]
        %v3474 = vld [vmem:[#allocation5 + $0x180] sm:$0xff]
        %v3475 = vld [vmem:[#allocation5 + $0x188] sm:$0xff]
        %v3476 = vld [vmem:[#allocation5 + $0x190] sm:$0xff]
        %v3477 = vld [vmem:[#allocation5 + $0x198] sm:$0xff]
        %v3478 = vld [vmem:[#allocation5 + $0x1a0] sm:$0xff]
        %v3479 = vld [vmem:[#allocation5 + $0x1a8] sm:$0xff]
        %v3480 = vld [vmem:[#allocation5 + $0x1b0] sm:$0xff]
        %v3481 = vld [vmem:[#allocation5 + $0x1b8] sm:$0xff]
        %v3482 = vld [vmem:[#allocation5 + $0x1c0] sm:$0xff]
        %v3483 = vld [vmem:[#allocation5 + $0x1c8] sm:$0xff]
        %v3484 = vld [vmem:[#allocation5 + $0x1d0] sm:$0xff]
        %v3485 = vld [vmem:[#allocation5 + $0x1d8] sm:$0xff]
        %v3486 = vld [vmem:[#allocation5 + $0x1e0] sm:$0xff]
        %v3487 = vld [vmem:[#allocation5 + $0x1e8] sm:$0xff]
        %v3488 = vld [vmem:[#allocation5 + $0x1f0] sm:$0xff]
        %v3489 = vld [vmem:[#allocation5 + $0x1f8] sm:$0xff]
        %v3490 = vld [vmem:[#allocation5 + $0x200] sm:$0xff]
        %v3491 = vld [vmem:[#allocation5 + $0x208] sm:$0xff]
        %v3492 = vld [vmem:[#allocation5 + $0x210] sm:$0xff]
        %v3493 = vld [vmem:[#allocation5 + $0x218] sm:$0xff]
        %v3494 = vld [vmem:[#allocation5 + $0x220] sm:$0xff]
        %v3495 = vld [vmem:[#allocation5 + $0x228] sm:$0xff]
        %v3496 = vld [vmem:[#allocation5 + $0x230] sm:$0xff]
        %v3497 = vld [vmem:[#allocation5 + $0x238] sm:$0xff]
        %v3498 = vld [vmem:[#allocation5 + $0x240] sm:$0xff]
        %v3499 = vld [vmem:[#allocation5 + $0x248] sm:$0xff]
        %v3500 = vld [vmem:[#allocation5 + $0x250] sm:$0xff]
        %v3501 = vld [vmem:[#allocation5 + $0x258] sm:$0xff]
        %v3502 = vld [vmem:[#allocation5 + $0x260] sm:$0xff]
        %v3503 = vld [vmem:[#allocation5 + $0x268] sm:$0xff]
        %v3504 = vld [vmem:[#allocation5 + $0x270] sm:$0xff]
        %v3505 = vld [vmem:[#allocation5 + $0x278] sm:$0xff]
        %v3506 = vld [vmem:[#allocation5 + $0x280] sm:$0xff]
        %v3507 = vld [vmem:[#allocation5 + $0x288] sm:$0xff]
        %v3508 = vld [vmem:[#allocation5 + $0x290] sm:$0xff]
        %v3509 = vld [vmem:[#allocation5 + $0x298] sm:$0xff]
        %v3510 = vld [vmem:[#allocation5 + $0x2a0] sm:$0xff]
        %v3511 = vld [vmem:[#allocation5 + $0x2a8] sm:$0xff]
        %v3512 = vld [vmem:[#allocation5 + $0x2b0] sm:$0xff]
        %v3513 = vld [vmem:[#allocation5 + $0x2b8] sm:$0xff]
        %v3514 = vld [vmem:[#allocation5 + $0x2c0] sm:$0xff]
        %v3515 = vld [vmem:[#allocation5 + $0x2c8] sm:$0xff]
        %v3516 = vld [vmem:[#allocation5 + $0x2d0] sm:$0xff]
        %v3517 = vld [vmem:[#allocation5 + $0x2d8] sm:$0xff]
        %v3518 = vld [vmem:[#allocation5 + $0x2e0] sm:$0xff]
        %v3519 = vld [vmem:[#allocation5 + $0x2e8] sm:$0xff]
        %v3520 = vld [vmem:[#allocation5 + $0x2f0] sm:$0xff]
        %v3521 = vld [vmem:[#allocation5 + $0x2f8] sm:$0xff]
        %v3522 = vld [vmem:[#allocation5 + $0x300] sm:$0xff]
        %v3523 = vld [vmem:[#allocation5 + $0x308] sm:$0xff]
        %v3524 = vld [vmem:[#allocation5 + $0x310] sm:$0xff]
        %v3525 = vld [vmem:[#allocation5 + $0x318] sm:$0xff]
        %v3526 = vld [vmem:[#allocation5 + $0x320] sm:$0xff]
        %v3527 = vld [vmem:[#allocation5 + $0x328] sm:$0xff]
        %v3528 = vld [vmem:[#allocation5 + $0x330] sm:$0xff]
        %v3529 = vld [vmem:[#allocation5 + $0x338] sm:$0xff]
        %v3530 = vld [vmem:[#allocation5 + $0x340] sm:$0xff]
        %v3531 = vld [vmem:[#allocation5 + $0x348] sm:$0xff]
        %v3532 = vld [vmem:[#allocation5 + $0x350] sm:$0xff]
        %v3533 = vld [vmem:[#allocation5 + $0x358] sm:$0xff]
        %v3534 = vld [vmem:[#allocation5 + $0x360] sm:$0xff]
        %v3535 = vld [vmem:[#allocation5 + $0x368] sm:$0xff]
        %v3536 = vld [vmem:[#allocation5 + $0x370] sm:$0xff]
        %v3537 = vld [vmem:[#allocation5 + $0x378] sm:$0xff]
        %v3538 = vld [vmem:[#allocation5 + $0x380] sm:$0xff]
        %v3539 = vld [vmem:[#allocation5 + $0x388] sm:$0xff]
        %v3540 = vld [vmem:[#allocation5 + $0x390] sm:$0xff]
        %v3541 = vld [vmem:[#allocation5 + $0x398] sm:$0xff]
        %v3542 = vld [vmem:[#allocation5 + $0x3a0] sm:$0xff]
        %v3543 = vld [vmem:[#allocation5 + $0x3a8] sm:$0xff]
        %v3544 = vld [vmem:[#allocation5 + $0x3b0] sm:$0xff]
        %v3545 = vld [vmem:[#allocation5 + $0x3b8] sm:$0xff]
        %v3546 = vld [vmem:[#allocation5 + $0x3c0] sm:$0xff]
        %v3547 = vld [vmem:[#allocation5 + $0x3c8] sm:$0xff]
        %v3548 = vld [vmem:[#allocation5 + $0x3d0] sm:$0xff]
        %v3549 = vld [vmem:[#allocation5 + $0x3d8] sm:$0xff]
        %v3550 = vld [vmem:[#allocation5 + $0x3e0] sm:$0xff]
        %v3551 = vld [vmem:[#allocation5 + $0x3e8] sm:$0xff]
        %v3552 = vld [vmem:[#allocation5 + $0x3f0] sm:$0xff]
        %v3553 = vld [vmem:[#allocation5 + $0x3f8] sm:$0xff]
        %v3554 = vld [vmem:[%s6] sm:$0x3]
        %v3556 = vlaneseq
        %v3557 = vshrl.u32 %v3556, 7
        %v3558 = vsub.s32 0, %v3557
        %v3559 = vrot.slane %v3554, %v3558
        %v3560 = vlaneseq
        %v3561 = vshrl.u32 %v3560, 7
        %v3562 = vsub.s32 1, %v3561
        %v3563 = vrot.slane %v3554, %v3562
        %v3694 = vunpack.c.l.b16 %v3426
        %v3695 = vunpack.c.h.b16 %v3426
        %v3696 = vunpack.c.l.b16 %v3427
        %v3697 = vunpack.c.h.b16 %v3427
        %v3698 = vunpack.c.l.b16 %v3428
        %v3699 = vunpack.c.h.b16 %v3428
        %v3700 = vunpack.c.l.b16 %v3429
        %v3701 = vunpack.c.h.b16 %v3429
        %v3702 = vunpack.c.l.b16 %v3430
        %v3703 = vunpack.c.h.b16 %v3430
        %v3704 = vunpack.c.l.b16 %v3431
        %v3705 = vunpack.c.h.b16 %v3431
        %v3706 = vunpack.c.l.b16 %v3432
        %v3707 = vunpack.c.h.b16 %v3432
        %v3708 = vunpack.c.l.b16 %v3433
        %v3709 = vunpack.c.h.b16 %v3433
        %v3710 = vunpack.c.l.b16 %v3434
        %v3711 = vunpack.c.h.b16 %v3434
        %v3712 = vunpack.c.l.b16 %v3435
        %v3713 = vunpack.c.h.b16 %v3435
        %v3714 = vunpack.c.l.b16 %v3436
        %v3715 = vunpack.c.h.b16 %v3436
        %v3716 = vunpack.c.l.b16 %v3437
        %v3717 = vunpack.c.h.b16 %v3437
        %v3718 = vunpack.c.l.b16 %v3438
        %v3719 = vunpack.c.h.b16 %v3438
        %v3720 = vunpack.c.l.b16 %v3439
        %v3721 = vunpack.c.h.b16 %v3439
        %v3722 = vunpack.c.l.b16 %v3440
        %v3723 = vunpack.c.h.b16 %v3440
        %v3724 = vunpack.c.l.b16 %v3441
        %v3725 = vunpack.c.h.b16 %v3441
        %v3726 = vunpack.c.l.b16 %v3442
        %v3727 = vunpack.c.h.b16 %v3442
        %v3728 = vunpack.c.l.b16 %v3443
        %v3729 = vunpack.c.h.b16 %v3443
        %v3730 = vunpack.c.l.b16 %v3444
        %v3731 = vunpack.c.h.b16 %v3444
        %v3732 = vunpack.c.l.b16 %v3445
        %v3733 = vunpack.c.h.b16 %v3445
        %v3734 = vunpack.c.l.b16 %v3446
        %v3735 = vunpack.c.h.b16 %v3446
        %v3736 = vunpack.c.l.b16 %v3447
        %v3737 = vunpack.c.h.b16 %v3447
        %v3738 = vunpack.c.l.b16 %v3448
        %v3739 = vunpack.c.h.b16 %v3448
        %v3740 = vunpack.c.l.b16 %v3449
        %v3741 = vunpack.c.h.b16 %v3449
        %v3742 = vunpack.c.l.b16 %v3450
        %v3743 = vunpack.c.h.b16 %v3450
        %v3744 = vunpack.c.l.b16 %v3451
        %v3745 = vunpack.c.h.b16 %v3451
        %v3746 = vunpack.c.l.b16 %v3452
        %v3747 = vunpack.c.h.b16 %v3452
        %v3748 = vunpack.c.l.b16 %v3453
        %v3749 = vunpack.c.h.b16 %v3453
        %v3750 = vunpack.c.l.b16 %v3454
        %v3751 = vunpack.c.h.b16 %v3454
        %v3752 = vunpack.c.l.b16 %v3455
        %v3753 = vunpack.c.h.b16 %v3455
        %v3754 = vunpack.c.l.b16 %v3456
        %v3755 = vunpack.c.h.b16 %v3456
        %v3756 = vunpack.c.l.b16 %v3457
        %v3757 = vunpack.c.h.b16 %v3457
        %v3758 = vunpack.c.l.b16 %v3458
        %v3759 = vunpack.c.h.b16 %v3458
        %v3760 = vunpack.c.l.b16 %v3459
        %v3761 = vunpack.c.h.b16 %v3459
        %v3762 = vunpack.c.l.b16 %v3460
        %v3763 = vunpack.c.h.b16 %v3460
        %v3764 = vunpack.c.l.b16 %v3461
        %v3765 = vunpack.c.h.b16 %v3461
        %v3766 = vunpack.c.l.b16 %v3462
        %v3767 = vunpack.c.h.b16 %v3462
        %v3768 = vunpack.c.l.b16 %v3463
        %v3769 = vunpack.c.h.b16 %v3463
        %v3770 = vunpack.c.l.b16 %v3464
        %v3771 = vunpack.c.h.b16 %v3464
        %v3772 = vunpack.c.l.b16 %v3465
        %v3773 = vunpack.c.h.b16 %v3465
        %v3774 = vunpack.c.l.b16 %v3466
        %v3775 = vunpack.c.h.b16 %v3466
        %v3776 = vunpack.c.l.b16 %v3467
        %v3777 = vunpack.c.h.b16 %v3467
        %v3778 = vunpack.c.l.b16 %v3468
        %v3779 = vunpack.c.h.b16 %v3468
        %v3780 = vunpack.c.l.b16 %v3469
        %v3781 = vunpack.c.h.b16 %v3469
        %v3782 = vunpack.c.l.b16 %v3470
        %v3783 = vunpack.c.h.b16 %v3470
        %v3784 = vunpack.c.l.b16 %v3471
        %v3785 = vunpack.c.h.b16 %v3471
        %v3786 = vunpack.c.l.b16 %v3472
        %v3787 = vunpack.c.h.b16 %v3472
        %v3788 = vunpack.c.l.b16 %v3473
        %v3789 = vunpack.c.h.b16 %v3473
        %v3790 = vunpack.c.l.b16 %v3474
        %v3791 = vunpack.c.h.b16 %v3474
        %v3792 = vunpack.c.l.b16 %v3475
        %v3793 = vunpack.c.h.b16 %v3475
        %v3794 = vunpack.c.l.b16 %v3476
        %v3795 = vunpack.c.h.b16 %v3476
        %v3796 = vunpack.c.l.b16 %v3477
        %v3797 = vunpack.c.h.b16 %v3477
        %v3798 = vunpack.c.l.b16 %v3478
        %v3799 = vunpack.c.h.b16 %v3478
        %v3800 = vunpack.c.l.b16 %v3479
        %v3801 = vunpack.c.h.b16 %v3479
        %v3802 = vunpack.c.l.b16 %v3480
        %v3803 = vunpack.c.h.b16 %v3480
        %v3804 = vunpack.c.l.b16 %v3481
        %v3805 = vunpack.c.h.b16 %v3481
        %v3806 = vunpack.c.l.b16 %v3482
        %v3807 = vunpack.c.h.b16 %v3482
        %v3808 = vunpack.c.l.b16 %v3483
        %v3809 = vunpack.c.h.b16 %v3483
        %v3810 = vunpack.c.l.b16 %v3484
        %v3811 = vunpack.c.h.b16 %v3484
        %v3812 = vunpack.c.l.b16 %v3485
        %v3813 = vunpack.c.h.b16 %v3485
        %v3814 = vunpack.c.l.b16 %v3486
        %v3815 = vunpack.c.h.b16 %v3486
        %v3816 = vunpack.c.l.b16 %v3487
        %v3817 = vunpack.c.h.b16 %v3487
        %v3818 = vunpack.c.l.b16 %v3488
        %v3819 = vunpack.c.h.b16 %v3488
        %v3820 = vunpack.c.l.b16 %v3489
        %v3821 = vunpack.c.h.b16 %v3489
        %v3822 = vunpack.c.l.b16 %v3490
        %v3823 = vunpack.c.h.b16 %v3490
        %v3824 = vunpack.c.l.b16 %v3491
        %v3825 = vunpack.c.h.b16 %v3491
        %v3826 = vunpack.c.l.b16 %v3492
        %v3827 = vunpack.c.h.b16 %v3492
        %v3828 = vunpack.c.l.b16 %v3493
        %v3829 = vunpack.c.h.b16 %v3493
        %v3830 = vunpack.c.l.b16 %v3494
        %v3831 = vunpack.c.h.b16 %v3494
        %v3832 = vunpack.c.l.b16 %v3495
        %v3833 = vunpack.c.h.b16 %v3495
        %v3834 = vunpack.c.l.b16 %v3496
        %v3835 = vunpack.c.h.b16 %v3496
        %v3836 = vunpack.c.l.b16 %v3497
        %v3837 = vunpack.c.h.b16 %v3497
        %v3838 = vunpack.c.l.b16 %v3498
        %v3839 = vunpack.c.h.b16 %v3498
        %v3840 = vunpack.c.l.b16 %v3499
        %v3841 = vunpack.c.h.b16 %v3499
        %v3842 = vunpack.c.l.b16 %v3500
        %v3843 = vunpack.c.h.b16 %v3500
        %v3844 = vunpack.c.l.b16 %v3501
        %v3845 = vunpack.c.h.b16 %v3501
        %v3846 = vunpack.c.l.b16 %v3502
        %v3847 = vunpack.c.h.b16 %v3502
        %v3848 = vunpack.c.l.b16 %v3503
        %v3849 = vunpack.c.h.b16 %v3503
        %v3850 = vunpack.c.l.b16 %v3504
        %v3851 = vunpack.c.h.b16 %v3504
        %v3852 = vunpack.c.l.b16 %v3505
        %v3853 = vunpack.c.h.b16 %v3505
        %v3854 = vunpack.c.l.b16 %v3506
        %v3855 = vunpack.c.h.b16 %v3506
        %v3856 = vunpack.c.l.b16 %v3507
        %v3857 = vunpack.c.h.b16 %v3507
        %v3858 = vunpack.c.l.b16 %v3508
        %v3859 = vunpack.c.h.b16 %v3508
        %v3860 = vunpack.c.l.b16 %v3509
        %v3861 = vunpack.c.h.b16 %v3509
        %v3862 = vunpack.c.l.b16 %v3510
        %v3863 = vunpack.c.h.b16 %v3510
        %v3864 = vunpack.c.l.b16 %v3511
        %v3865 = vunpack.c.h.b16 %v3511
        %v3866 = vunpack.c.l.b16 %v3512
        %v3867 = vunpack.c.h.b16 %v3512
        %v3868 = vunpack.c.l.b16 %v3513
        %v3869 = vunpack.c.h.b16 %v3513
        %v3870 = vunpack.c.l.b16 %v3514
        %v3871 = vunpack.c.h.b16 %v3514
        %v3872 = vunpack.c.l.b16 %v3515
        %v3873 = vunpack.c.h.b16 %v3515
        %v3874 = vunpack.c.l.b16 %v3516
        %v3875 = vunpack.c.h.b16 %v3516
        %v3876 = vunpack.c.l.b16 %v3517
        %v3877 = vunpack.c.h.b16 %v3517
        %v3878 = vunpack.c.l.b16 %v3518
        %v3879 = vunpack.c.h.b16 %v3518
        %v3880 = vunpack.c.l.b16 %v3519
        %v3881 = vunpack.c.h.b16 %v3519
        %v3882 = vunpack.c.l.b16 %v3520
        %v3883 = vunpack.c.h.b16 %v3520
        %v3884 = vunpack.c.l.b16 %v3521
        %v3885 = vunpack.c.h.b16 %v3521
        %v3886 = vunpack.c.l.b16 %v3522
        %v3887 = vunpack.c.h.b16 %v3522
        %v3888 = vunpack.c.l.b16 %v3523
        %v3889 = vunpack.c.h.b16 %v3523
        %v3890 = vunpack.c.l.b16 %v3524
        %v3891 = vunpack.c.h.b16 %v3524
        %v3892 = vunpack.c.l.b16 %v3525
        %v3893 = vunpack.c.h.b16 %v3525
        %v3894 = vunpack.c.l.b16 %v3526
        %v3895 = vunpack.c.h.b16 %v3526
        %v3896 = vunpack.c.l.b16 %v3527
        %v3897 = vunpack.c.h.b16 %v3527
        %v3898 = vunpack.c.l.b16 %v3528
        %v3899 = vunpack.c.h.b16 %v3528
        %v3900 = vunpack.c.l.b16 %v3529
        %v3901 = vunpack.c.h.b16 %v3529
        %v3902 = vunpack.c.l.b16 %v3530
        %v3903 = vunpack.c.h.b16 %v3530
        %v3904 = vunpack.c.l.b16 %v3531
        %v3905 = vunpack.c.h.b16 %v3531
        %v3906 = vunpack.c.l.b16 %v3532
        %v3907 = vunpack.c.h.b16 %v3532
        %v3908 = vunpack.c.l.b16 %v3533
        %v3909 = vunpack.c.h.b16 %v3533
        %v3910 = vunpack.c.l.b16 %v3534
        %v3911 = vunpack.c.h.b16 %v3534
        %v3912 = vunpack.c.l.b16 %v3535
        %v3913 = vunpack.c.h.b16 %v3535
        %v3914 = vunpack.c.l.b16 %v3536
        %v3915 = vunpack.c.h.b16 %v3536
        %v3916 = vunpack.c.l.b16 %v3537
        %v3917 = vunpack.c.h.b16 %v3537
        %v3918 = vunpack.c.l.b16 %v3538
        %v3919 = vunpack.c.h.b16 %v3538
        %v3920 = vunpack.c.l.b16 %v3539
        %v3921 = vunpack.c.h.b16 %v3539
        %v3922 = vunpack.c.l.b16 %v3540
        %v3923 = vunpack.c.h.b16 %v3540
        %v3924 = vunpack.c.l.b16 %v3541
        %v3925 = vunpack.c.h.b16 %v3541
        %v3926 = vunpack.c.l.b16 %v3542
        %v3927 = vunpack.c.h.b16 %v3542
        %v3928 = vunpack.c.l.b16 %v3543
        %v3929 = vunpack.c.h.b16 %v3543
        %v3930 = vunpack.c.l.b16 %v3544
        %v3931 = vunpack.c.h.b16 %v3544
        %v3932 = vunpack.c.l.b16 %v3545
        %v3933 = vunpack.c.h.b16 %v3545
        %v3934 = vunpack.c.l.b16 %v3546
        %v3935 = vunpack.c.h.b16 %v3546
        %v3936 = vunpack.c.l.b16 %v3547
        %v3937 = vunpack.c.h.b16 %v3547
        %v3938 = vunpack.c.l.b16 %v3548
        %v3939 = vunpack.c.h.b16 %v3548
        %v3940 = vunpack.c.l.b16 %v3549
        %v3941 = vunpack.c.h.b16 %v3549
        %v3942 = vunpack.c.l.b16 %v3550
        %v3943 = vunpack.c.h.b16 %v3550
        %v3944 = vunpack.c.l.b16 %v3551
        %v3945 = vunpack.c.h.b16 %v3551
        %v3946 = vunpack.c.l.b16 %v3552
        %v3947 = vunpack.c.h.b16 %v3552
        %v3948 = vunpack.c.l.b16 %v3553
        %v3949 = vunpack.c.h.b16 %v3553
        %v3950 = vpack.c.b16 %v3696, %v3694
        %v3951 = vpack.c.b16 %v3697, %v3695
        %v3952 = vpack.c.b16 %v3700, %v3698
        %v3953 = vpack.c.b16 %v3701, %v3699
        %v3954 = vpack.c.b16 %v3704, %v3702
        %v3955 = vpack.c.b16 %v3705, %v3703
        %v3956 = vpack.c.b16 %v3708, %v3706
        %v3957 = vpack.c.b16 %v3709, %v3707
        %v3958 = vpack.c.b16 %v3712, %v3710
        %v3959 = vpack.c.b16 %v3713, %v3711
        %v3960 = vpack.c.b16 %v3716, %v3714
        %v3961 = vpack.c.b16 %v3717, %v3715
        %v3962 = vpack.c.b16 %v3720, %v3718
        %v3963 = vpack.c.b16 %v3721, %v3719
        %v3964 = vpack.c.b16 %v3724, %v3722
        %v3965 = vpack.c.b16 %v3725, %v3723
        %v3966 = vpack.c.b16 %v3728, %v3726
        %v3967 = vpack.c.b16 %v3729, %v3727
        %v3968 = vpack.c.b16 %v3732, %v3730
        %v3969 = vpack.c.b16 %v3733, %v3731
        %v3970 = vpack.c.b16 %v3736, %v3734
        %v3971 = vpack.c.b16 %v3737, %v3735
        %v3972 = vpack.c.b16 %v3740, %v3738
        %v3973 = vpack.c.b16 %v3741, %v3739
        %v3974 = vpack.c.b16 %v3744, %v3742
        %v3975 = vpack.c.b16 %v3745, %v3743
        %v3976 = vpack.c.b16 %v3748, %v3746
        %v3977 = vpack.c.b16 %v3749, %v3747
        %v3978 = vpack.c.b16 %v3752, %v3750
        %v3979 = vpack.c.b16 %v3753, %v3751
        %v3980 = vpack.c.b16 %v3756, %v3754
        %v3981 = vpack.c.b16 %v3757, %v3755
        %v3982 = vpack.c.b16 %v3760, %v3758
        %v3983 = vpack.c.b16 %v3761, %v3759
        %v3984 = vpack.c.b16 %v3764, %v3762
        %v3985 = vpack.c.b16 %v3765, %v3763
        %v3986 = vpack.c.b16 %v3768, %v3766
        %v3987 = vpack.c.b16 %v3769, %v3767
        %v3988 = vpack.c.b16 %v3772, %v3770
        %v3989 = vpack.c.b16 %v3773, %v3771
        %v3990 = vpack.c.b16 %v3776, %v3774
        %v3991 = vpack.c.b16 %v3777, %v3775
        %v3992 = vpack.c.b16 %v3780, %v3778
        %v3993 = vpack.c.b16 %v3781, %v3779
        %v3994 = vpack.c.b16 %v3784, %v3782
        %v3995 = vpack.c.b16 %v3785, %v3783
        %v3996 = vpack.c.b16 %v3788, %v3786
        %v3997 = vpack.c.b16 %v3789, %v3787
        %v3998 = vpack.c.b16 %v3792, %v3790
        %v3999 = vpack.c.b16 %v3793, %v3791
        %v4000 = vpack.c.b16 %v3796, %v3794
        %v4001 = vpack.c.b16 %v3797, %v3795
        %v4002 = vpack.c.b16 %v3800, %v3798
        %v4003 = vpack.c.b16 %v3801, %v3799
        %v4004 = vpack.c.b16 %v3804, %v3802
        %v4005 = vpack.c.b16 %v3805, %v3803
        %v4006 = vpack.c.b16 %v3808, %v3806
        %v4007 = vpack.c.b16 %v3809, %v3807
        %v4008 = vpack.c.b16 %v3812, %v3810
        %v4009 = vpack.c.b16 %v3813, %v3811
        %v4010 = vpack.c.b16 %v3816, %v3814
        %v4011 = vpack.c.b16 %v3817, %v3815
        %v4012 = vpack.c.b16 %v3820, %v3818
        %v4013 = vpack.c.b16 %v3821, %v3819
        %v4014 = vpack.c.b16 %v3824, %v3822
        %v4015 = vpack.c.b16 %v3825, %v3823
        %v4016 = vpack.c.b16 %v3828, %v3826
        %v4017 = vpack.c.b16 %v3829, %v3827
        %v4018 = vpack.c.b16 %v3832, %v3830
        %v4019 = vpack.c.b16 %v3833, %v3831
        %v4020 = vpack.c.b16 %v3836, %v3834
        %v4021 = vpack.c.b16 %v3837, %v3835
        %v4022 = vpack.c.b16 %v3840, %v3838
        %v4023 = vpack.c.b16 %v3841, %v3839
        %v4024 = vpack.c.b16 %v3844, %v3842
        %v4025 = vpack.c.b16 %v3845, %v3843
        %v4026 = vpack.c.b16 %v3848, %v3846
        %v4027 = vpack.c.b16 %v3849, %v3847
        %v4028 = vpack.c.b16 %v3852, %v3850
        %v4029 = vpack.c.b16 %v3853, %v3851
        %v4030 = vpack.c.b16 %v3856, %v3854
        %v4031 = vpack.c.b16 %v3857, %v3855
        %v4032 = vpack.c.b16 %v3860, %v3858
        %v4033 = vpack.c.b16 %v3861, %v3859
        %v4034 = vpack.c.b16 %v3864, %v3862
        %v4035 = vpack.c.b16 %v3865, %v3863
        %v4036 = vpack.c.b16 %v3868, %v3866
        %v4037 = vpack.c.b16 %v3869, %v3867
        %v4038 = vpack.c.b16 %v3872, %v3870
        %v4039 = vpack.c.b16 %v3873, %v3871
        %v4040 = vpack.c.b16 %v3876, %v3874
        %v4041 = vpack.c.b16 %v3877, %v3875
        %v4042 = vpack.c.b16 %v3880, %v3878
        %v4043 = vpack.c.b16 %v3881, %v3879
        %v4044 = vpack.c.b16 %v3884, %v3882
        %v4045 = vpack.c.b16 %v3885, %v3883
        %v4046 = vpack.c.b16 %v3888, %v3886
        %v4047 = vpack.c.b16 %v3889, %v3887
        %v4048 = vpack.c.b16 %v3892, %v3890
        %v4049 = vpack.c.b16 %v3893, %v3891
        %v4050 = vpack.c.b16 %v3896, %v3894
        %v4051 = vpack.c.b16 %v3897, %v3895
        %v4052 = vpack.c.b16 %v3900, %v3898
        %v4053 = vpack.c.b16 %v3901, %v3899
        %v4054 = vpack.c.b16 %v3904, %v3902
        %v4055 = vpack.c.b16 %v3905, %v3903
        %v4056 = vpack.c.b16 %v3908, %v3906
        %v4057 = vpack.c.b16 %v3909, %v3907
        %v4058 = vpack.c.b16 %v3912, %v3910
        %v4059 = vpack.c.b16 %v3913, %v3911
        %v4060 = vpack.c.b16 %v3916, %v3914
        %v4061 = vpack.c.b16 %v3917, %v3915
        %v4062 = vpack.c.b16 %v3920, %v3918
        %v4063 = vpack.c.b16 %v3921, %v3919
        %v4064 = vpack.c.b16 %v3924, %v3922
        %v4065 = vpack.c.b16 %v3925, %v3923
        %v4066 = vpack.c.b16 %v3928, %v3926
        %v4067 = vpack.c.b16 %v3929, %v3927
        %v4068 = vpack.c.b16 %v3932, %v3930
        %v4069 = vpack.c.b16 %v3933, %v3931
        %v4070 = vpack.c.b16 %v3936, %v3934
        %v4071 = vpack.c.b16 %v3937, %v3935
        %v4072 = vpack.c.b16 %v3940, %v3938
        %v4073 = vpack.c.b16 %v3941, %v3939
        %v4074 = vpack.c.b16 %v3944, %v3942
        %v4075 = vpack.c.b16 %v3945, %v3943
        %v4076 = vpack.c.b16 %v3948, %v3946
        %v4077 = vpack.c.b16 %v3949, %v3947
        %4206 = vmatprep.subr.bf16.mxu0 %v3965
        %4207 = vmatpush1.bf16.msra.mxu0 %v3964
        %4208 = vmatprep.subr.bf16.mxu0 %v3963
        %4209 = vmatpush1.bf16.msra.mxu0 %v3962
        %4210 = vmatprep.subr.bf16.mxu0 %v3961
        %4211 = vmatpush1.bf16.msra.mxu0 %v3960
        %4212 = vmatprep.subr.bf16.mxu0 %v3959
        %4213 = vmatpush1.bf16.msra.mxu0 %v3958
        %4214 = vmatprep.subr.bf16.mxu0 %v3957
        %4215 = vmatpush1.bf16.msra.mxu0 %v3956
        %4216 = vmatprep.subr.bf16.mxu0 %v3955
        %4217 = vmatpush1.bf16.msra.mxu0 %v3954
        %4218 = vmatprep.subr.bf16.mxu0 %v3953
        %4219 = vmatpush1.bf16.msra.mxu0 %v3952
        %4220 = vmatprep.subr.bf16.mxu0 %v3951
        %4221 = vmatpush1.bf16.msra.mxu0 %v3950
        %4222 = vmatprep.subr.bf16.mxu0 %v3981
        %4223 = vmatpush2.bf16.msra.mxu0 %v3980
        %4224 = vmatprep.subr.bf16.mxu0 %v3979
        %4225 = vmatpush2.bf16.msra.mxu0 %v3978
        %4226 = vmatprep.subr.bf16.mxu0 %v3977
        %4227 = vmatpush2.bf16.msra.mxu0 %v3976
        %4228 = vmatprep.subr.bf16.mxu0 %v3975
        %4229 = vmatpush2.bf16.msra.mxu0 %v3974
        %4230 = vmatprep.subr.bf16.mxu0 %v3973
        %4231 = vmatpush2.bf16.msra.mxu0 %v3972
        %4232 = vmatprep.subr.bf16.mxu0 %v3971
        %4233 = vmatpush2.bf16.msra.mxu0 %v3970
        %4234 = vmatprep.subr.bf16.mxu0 %v3969
        %4235 = vmatpush2.bf16.msra.mxu0 %v3968
        %4236 = vmatprep.subr.bf16.mxu0 %v3967
        %4237 = vmatpush2.bf16.msra.mxu0 %v3966
        %4238 = vmatprep.mubr.bf16.mxu0 %v3363
        %4239 = vmatmul.mubr.bf16.gmra.mxu0 %v3362
        %v4240 = vpop.f32.mrf.mxu0
        %v4241 = vadd.f32 %v3559, %v4240
        %v4242 = vpop.f32.mrf.mxu0
        %v4243 = vadd.f32 %v3563, %v4242
        %v4244 = vpop.f32.mrf.mxu0
        %v4245 = vadd.f32 %v3559, %v4244
        %v4246 = vpop.f32.mrf.mxu0
        %v4247 = vadd.f32 %v3563, %v4246
        %4248 = vmatprep.mubr.bf16.mxu0 %v3371
        %4249 = vmatmul.mubr.bf16.gmra.mxu0 %v3370
        %v4250 = vpop.f32.mrf.mxu0
        %v4251 = vadd.f32 %v3559, %v4250
        %v4252 = vpop.f32.mrf.mxu0
        %v4253 = vadd.f32 %v3563, %v4252
        %v4254 = vpop.f32.mrf.mxu0
        %v4255 = vadd.f32 %v3559, %v4254
        %v4256 = vpop.f32.mrf.mxu0
        %v4257 = vadd.f32 %v3563, %v4256
        %4258 = vmatprep.mubr.bf16.mxu0 %v3379
        %4259 = vmatmul.mubr.bf16.gmra.mxu0 %v3378
        %v4260 = vpop.f32.mrf.mxu0
        %v4261 = vadd.f32 %v3559, %v4260
        %v4262 = vpop.f32.mrf.mxu0
        %v4263 = vadd.f32 %v3563, %v4262
        %v4264 = vpop.f32.mrf.mxu0
        %v4265 = vadd.f32 %v3559, %v4264
        %v4266 = vpop.f32.mrf.mxu0
        %v4267 = vadd.f32 %v3563, %v4266
        %4268 = vmatprep.mubr.bf16.mxu0 %v3387
        %4269 = vmatmul.mubr.bf16.gmra.mxu0 %v3386
        %v4270 = vpop.f32.mrf.mxu0
        %v4271 = vadd.f32 %v3559, %v4270
        %v4272 = vpop.f32.mrf.mxu0
        %v4273 = vadd.f32 %v3563, %v4272
        %v4274 = vpop.f32.mrf.mxu0
        %v4275 = vadd.f32 %v3559, %v4274
        %v4276 = vpop.f32.mrf.mxu0
        %v4277 = vadd.f32 %v3563, %v4276
        %4278 = vmatprep.mubr.bf16.mxu0 %v3395
        %4279 = vmatmul.mubr.bf16.gmra.mxu0 %v3394
        %v4280 = vpop.f32.mrf.mxu0
        %v4281 = vadd.f32 %v3559, %v4280
        %v4282 = vpop.f32.mrf.mxu0
        %v4283 = vadd.f32 %v3563, %v4282
        %v4284 = vpop.f32.mrf.mxu0
        %v4285 = vadd.f32 %v3559, %v4284
        %v4286 = vpop.f32.mrf.mxu0
        %v4287 = vadd.f32 %v3563, %v4286
        %4288 = vmatprep.mubr.bf16.mxu0 %v3403
        %4289 = vmatmul.mubr.bf16.gmra.mxu0 %v3402
        %v4290 = vpop.f32.mrf.mxu0
        %v4291 = vadd.f32 %v3559, %v4290
        %v4292 = vpop.f32.mrf.mxu0
        %v4293 = vadd.f32 %v3563, %v4292
        %v4294 = vpop.f32.mrf.mxu0
        %v4295 = vadd.f32 %v3559, %v4294
        %v4296 = vpop.f32.mrf.mxu0
        %v4297 = vadd.f32 %v3563, %v4296
        %4298 = vmatprep.mubr.bf16.mxu0 %v3411
        %4299 = vmatmul.mubr.bf16.gmra.mxu0 %v3410
        %v4300 = vpop.f32.mrf.mxu0
        %v4301 = vadd.f32 %v3559, %v4300
        %v4302 = vpop.f32.mrf.mxu0
        %v4303 = vadd.f32 %v3563, %v4302
        %v4304 = vpop.f32.mrf.mxu0
        %v4305 = vadd.f32 %v3559, %v4304
        %v4306 = vpop.f32.mrf.mxu0
        %v4307 = vadd.f32 %v3563, %v4306
        %4308 = vmatprep.mubr.bf16.mxu0 %v3419
        %4309 = vmatmul.mubr.bf16.gmra.mxu0 %v3418
        %v4310 = vpop.f32.mrf.mxu0
        %v4311 = vadd.f32 %v3559, %v4310
        %v4312 = vpop.f32.mrf.mxu0
        %v4313 = vadd.f32 %v3563, %v4312
        %v4314 = vpop.f32.mrf.mxu0
        %v4315 = vadd.f32 %v3559, %v4314
        %v4316 = vpop.f32.mrf.mxu0
        %v4317 = vadd.f32 %v3563, %v4316
        %4318 = vdwg.mxu0
        %4319 = vmatprep.subr.bf16.mxu0 %v3997
        %4320 = vmatpush1.bf16.msra.mxu0 %v3996
        %4321 = vmatprep.subr.bf16.mxu0 %v3995
        %4322 = vmatpush1.bf16.msra.mxu0 %v3994
        %4323 = vmatprep.subr.bf16.mxu0 %v3993
        %4324 = vmatpush1.bf16.msra.mxu0 %v3992
        %4325 = vmatprep.subr.bf16.mxu0 %v3991
        %4326 = vmatpush1.bf16.msra.mxu0 %v3990
        %4327 = vmatprep.subr.bf16.mxu0 %v3989
        %4328 = vmatpush1.bf16.msra.mxu0 %v3988
        %4329 = vmatprep.subr.bf16.mxu0 %v3987
        %4330 = vmatpush1.bf16.msra.mxu0 %v3986
        %4331 = vmatprep.subr.bf16.mxu0 %v3985
        %4332 = vmatpush1.bf16.msra.mxu0 %v3984
        %4333 = vmatprep.subr.bf16.mxu0 %v3983
        %4334 = vmatpush1.bf16.msra.mxu0 %v3982
        %4335 = vmatprep.subr.bf16.mxu0 %v4013
        %4336 = vmatpush2.bf16.msra.mxu0 %v4012
        %4337 = vmatprep.subr.bf16.mxu0 %v4011
        %4338 = vmatpush2.bf16.msra.mxu0 %v4010
        %4339 = vmatprep.subr.bf16.mxu0 %v4009
        %4340 = vmatpush2.bf16.msra.mxu0 %v4008
        %4341 = vmatprep.subr.bf16.mxu0 %v4007
        %4342 = vmatpush2.bf16.msra.mxu0 %v4006
        %4343 = vmatprep.subr.bf16.mxu0 %v4005
        %4344 = vmatpush2.bf16.msra.mxu0 %v4004
        %4345 = vmatprep.subr.bf16.mxu0 %v4003
        %4346 = vmatpush2.bf16.msra.mxu0 %v4002
        %4347 = vmatprep.subr.bf16.mxu0 %v4001
        %4348 = vmatpush2.bf16.msra.mxu0 %v4000
        %4349 = vmatprep.subr.bf16.mxu0 %v3999
        %4350 = vmatpush2.bf16.msra.mxu0 %v3998
        %4351 = vmatprep.mubr.bf16.mxu0 %v3365
        %4352 = vmatmul.mubr.bf16.gmra.mxu0 %v3364
        %v4353 = vpop.f32.mrf.mxu0
        %v4354 = vadd.f32 %v4241, %v4353
        %v4355 = vpop.f32.mrf.mxu0
        %v4356 = vadd.f32 %v4243, %v4355
        %v4357 = vpop.f32.mrf.mxu0
        %v4358 = vadd.f32 %v4245, %v4357
        %v4359 = vpop.f32.mrf.mxu0
        %v4360 = vadd.f32 %v4247, %v4359
        %4361 = vmatprep.mubr.bf16.mxu0 %v3373
        %4362 = vmatmul.mubr.bf16.gmra.mxu0 %v3372
        %v4363 = vpop.f32.mrf.mxu0
        %v4364 = vadd.f32 %v4251, %v4363
        %v4365 = vpop.f32.mrf.mxu0
        %v4366 = vadd.f32 %v4253, %v4365
        %v4367 = vpop.f32.mrf.mxu0
        %v4368 = vadd.f32 %v4255, %v4367
        %v4369 = vpop.f32.mrf.mxu0
        %v4370 = vadd.f32 %v4257, %v4369
        %4371 = vmatprep.mubr.bf16.mxu0 %v3381
        %4372 = vmatmul.mubr.bf16.gmra.mxu0 %v3380
        %v4373 = vpop.f32.mrf.mxu0
        %v4374 = vadd.f32 %v4261, %v4373
        %v4375 = vpop.f32.mrf.mxu0
        %v4376 = vadd.f32 %v4263, %v4375
        %v4377 = vpop.f32.mrf.mxu0
        %v4378 = vadd.f32 %v4265, %v4377
        %v4379 = vpop.f32.mrf.mxu0
        %v4380 = vadd.f32 %v4267, %v4379
        %4381 = vmatprep.mubr.bf16.mxu0 %v3389
        %4382 = vmatmul.mubr.bf16.gmra.mxu0 %v3388
        %v4383 = vpop.f32.mrf.mxu0
        %v4384 = vadd.f32 %v4271, %v4383
        %v4385 = vpop.f32.mrf.mxu0
        %v4386 = vadd.f32 %v4273, %v4385
        %v4387 = vpop.f32.mrf.mxu0
        %v4388 = vadd.f32 %v4275, %v4387
        %v4389 = vpop.f32.mrf.mxu0
        %v4390 = vadd.f32 %v4277, %v4389
        %4391 = vmatprep.mubr.bf16.mxu0 %v3397
        %4392 = vmatmul.mubr.bf16.gmra.mxu0 %v3396
        %v4393 = vpop.f32.mrf.mxu0
        %v4394 = vadd.f32 %v4281, %v4393
        %v4395 = vpop.f32.mrf.mxu0
        %v4396 = vadd.f32 %v4283, %v4395
        %v4397 = vpop.f32.mrf.mxu0
        %v4398 = vadd.f32 %v4285, %v4397
        %v4399 = vpop.f32.mrf.mxu0
        %v4400 = vadd.f32 %v4287, %v4399
        %4401 = vmatprep.mubr.bf16.mxu0 %v3405
        %4402 = vmatmul.mubr.bf16.gmra.mxu0 %v3404
        %v4403 = vpop.f32.mrf.mxu0
        %v4404 = vadd.f32 %v4291, %v4403
        %v4405 = vpop.f32.mrf.mxu0
        %v4406 = vadd.f32 %v4293, %v4405
        %v4407 = vpop.f32.mrf.mxu0
        %v4408 = vadd.f32 %v4295, %v4407
        %v4409 = vpop.f32.mrf.mxu0
        %v4410 = vadd.f32 %v4297, %v4409
        %4411 = vmatprep.mubr.bf16.mxu0 %v3413
        %4412 = vmatmul.mubr.bf16.gmra.mxu0 %v3412
        %v4413 = vpop.f32.mrf.mxu0
        %v4414 = vadd.f32 %v4301, %v4413
        %v4415 = vpop.f32.mrf.mxu0
        %v4416 = vadd.f32 %v4303, %v4415
        %v4417 = vpop.f32.mrf.mxu0
        %v4418 = vadd.f32 %v4305, %v4417
        %v4419 = vpop.f32.mrf.mxu0
        %v4420 = vadd.f32 %v4307, %v4419
        %4421 = vmatprep.mubr.bf16.mxu0 %v3421
        %4422 = vmatmul.mubr.bf16.gmra.mxu0 %v3420
        %v4423 = vpop.f32.mrf.mxu0
        %v4424 = vadd.f32 %v4311, %v4423
        %v4425 = vpop.f32.mrf.mxu0
        %v4426 = vadd.f32 %v4313, %v4425
        %v4427 = vpop.f32.mrf.mxu0
        %v4428 = vadd.f32 %v4315, %v4427
        %v4429 = vpop.f32.mrf.mxu0
        %v4430 = vadd.f32 %v4317, %v4429
        %4431 = vdwg.mxu0
        %4432 = vmatprep.subr.bf16.mxu0 %v4029
        %4433 = vmatpush1.bf16.msra.mxu0 %v4028
        %4434 = vmatprep.subr.bf16.mxu0 %v4027
        %4435 = vmatpush1.bf16.msra.mxu0 %v4026
        %4436 = vmatprep.subr.bf16.mxu0 %v4025
        %4437 = vmatpush1.bf16.msra.mxu0 %v4024
        %4438 = vmatprep.subr.bf16.mxu0 %v4023
        %4439 = vmatpush1.bf16.msra.mxu0 %v4022
        %4440 = vmatprep.subr.bf16.mxu0 %v4021
        %4441 = vmatpush1.bf16.msra.mxu0 %v4020
        %4442 = vmatprep.subr.bf16.mxu0 %v4019
        %4443 = vmatpush1.bf16.msra.mxu0 %v4018
        %4444 = vmatprep.subr.bf16.mxu0 %v4017
        %4445 = vmatpush1.bf16.msra.mxu0 %v4016
        %4446 = vmatprep.subr.bf16.mxu0 %v4015
        %4447 = vmatpush1.bf16.msra.mxu0 %v4014
        %4448 = vmatprep.subr.bf16.mxu0 %v4045
        %4449 = vmatpush2.bf16.msra.mxu0 %v4044
        %4450 = vmatprep.subr.bf16.mxu0 %v4043
        %4451 = vmatpush2.bf16.msra.mxu0 %v4042
        %4452 = vmatprep.subr.bf16.mxu0 %v4041
        %4453 = vmatpush2.bf16.msra.mxu0 %v4040
        %4454 = vmatprep.subr.bf16.mxu0 %v4039
        %4455 = vmatpush2.bf16.msra.mxu0 %v4038
        %4456 = vmatprep.subr.bf16.mxu0 %v4037
        %4457 = vmatpush2.bf16.msra.mxu0 %v4036
        %4458 = vmatprep.subr.bf16.mxu0 %v4035
        %4459 = vmatpush2.bf16.msra.mxu0 %v4034
        %4460 = vmatprep.subr.bf16.mxu0 %v4033
        %4461 = vmatpush2.bf16.msra.mxu0 %v4032
        %4462 = vmatprep.subr.bf16.mxu0 %v4031
        %4463 = vmatpush2.bf16.msra.mxu0 %v4030
        %4464 = vmatprep.mubr.bf16.mxu0 %v3367
        %4465 = vmatmul.mubr.bf16.gmra.mxu0 %v3366
        %v4466 = vpop.f32.mrf.mxu0
        %v4467 = vadd.f32 %v4354, %v4466
        %v4468 = vpop.f32.mrf.mxu0
        %v4469 = vadd.f32 %v4356, %v4468
        %v4470 = vpop.f32.mrf.mxu0
        %v4471 = vadd.f32 %v4358, %v4470
        %v4472 = vpop.f32.mrf.mxu0
        %v4473 = vadd.f32 %v4360, %v4472
        %4474 = vmatprep.mubr.bf16.mxu0 %v3375
        %4475 = vmatmul.mubr.bf16.gmra.mxu0 %v3374
        %v4476 = vpop.f32.mrf.mxu0
        %v4477 = vadd.f32 %v4364, %v4476
        %v4478 = vpop.f32.mrf.mxu0
        %v4479 = vadd.f32 %v4366, %v4478
        %v4480 = vpop.f32.mrf.mxu0
        %v4481 = vadd.f32 %v4368, %v4480
        %v4482 = vpop.f32.mrf.mxu0
        %v4483 = vadd.f32 %v4370, %v4482
        %4484 = vmatprep.mubr.bf16.mxu0 %v3383
        %4485 = vmatmul.mubr.bf16.gmra.mxu0 %v3382
        %v4486 = vpop.f32.mrf.mxu0
        %v4487 = vadd.f32 %v4374, %v4486
        %v4488 = vpop.f32.mrf.mxu0
        %v4489 = vadd.f32 %v4376, %v4488
        %v4490 = vpop.f32.mrf.mxu0
        %v4491 = vadd.f32 %v4378, %v4490
        %v4492 = vpop.f32.mrf.mxu0
        %v4493 = vadd.f32 %v4380, %v4492
        %4494 = vmatprep.mubr.bf16.mxu0 %v3391
        %4495 = vmatmul.mubr.bf16.gmra.mxu0 %v3390
        %v4496 = vpop.f32.mrf.mxu0
        %v4497 = vadd.f32 %v4384, %v4496
        %v4498 = vpop.f32.mrf.mxu0
        %v4499 = vadd.f32 %v4386, %v4498
        %v4500 = vpop.f32.mrf.mxu0
        %v4501 = vadd.f32 %v4388, %v4500
        %v4502 = vpop.f32.mrf.mxu0
        %v4503 = vadd.f32 %v4390, %v4502
        %4504 = vmatprep.mubr.bf16.mxu0 %v3399
        %4505 = vmatmul.mubr.bf16.gmra.mxu0 %v3398
        %v4506 = vpop.f32.mrf.mxu0
        %v4507 = vadd.f32 %v4394, %v4506
        %v4508 = vpop.f32.mrf.mxu0
        %v4509 = vadd.f32 %v4396, %v4508
        %v4510 = vpop.f32.mrf.mxu0
        %v4511 = vadd.f32 %v4398, %v4510
        %v4512 = vpop.f32.mrf.mxu0
        %v4513 = vadd.f32 %v4400, %v4512
        %4514 = vmatprep.mubr.bf16.mxu0 %v3407
        %4515 = vmatmul.mubr.bf16.gmra.mxu0 %v3406
        %v4516 = vpop.f32.mrf.mxu0
        %v4517 = vadd.f32 %v4404, %v4516
        %v4518 = vpop.f32.mrf.mxu0
        %v4519 = vadd.f32 %v4406, %v4518
        %v4520 = vpop.f32.mrf.mxu0
        %v4521 = vadd.f32 %v4408, %v4520
        %v4522 = vpop.f32.mrf.mxu0
        %v4523 = vadd.f32 %v4410, %v4522
        %4524 = vmatprep.mubr.bf16.mxu0 %v3415
        %4525 = vmatmul.mubr.bf16.gmra.mxu0 %v3414
        %v4526 = vpop.f32.mrf.mxu0
        %v4527 = vadd.f32 %v4414, %v4526
        %v4528 = vpop.f32.mrf.mxu0
        %v4529 = vadd.f32 %v4416, %v4528
        %v4530 = vpop.f32.mrf.mxu0
        %v4531 = vadd.f32 %v4418, %v4530
        %v4532 = vpop.f32.mrf.mxu0
        %v4533 = vadd.f32 %v4420, %v4532
        %4534 = vmatprep.mubr.bf16.mxu0 %v3423
        %4535 = vmatmul.mubr.bf16.gmra.mxu0 %v3422
        %v4536 = vpop.f32.mrf.mxu0
        %v4537 = vadd.f32 %v4424, %v4536
        %v4538 = vpop.f32.mrf.mxu0
        %v4539 = vadd.f32 %v4426, %v4538
        %v4540 = vpop.f32.mrf.mxu0
        %v4541 = vadd.f32 %v4428, %v4540
        %v4542 = vpop.f32.mrf.mxu0
        %v4543 = vadd.f32 %v4430, %v4542
        %4544 = vdwg.mxu0
        %4545 = vmatprep.subr.bf16.mxu0 %v4061
        %4546 = vmatpush1.bf16.msra.mxu0 %v4060
        %4547 = vmatprep.subr.bf16.mxu0 %v4059
        %4548 = vmatpush1.bf16.msra.mxu0 %v4058
        %4549 = vmatprep.subr.bf16.mxu0 %v4057
        %4550 = vmatpush1.bf16.msra.mxu0 %v4056
        %4551 = vmatprep.subr.bf16.mxu0 %v4055
        %4552 = vmatpush1.bf16.msra.mxu0 %v4054
        %4553 = vmatprep.subr.bf16.mxu0 %v4053
        %4554 = vmatpush1.bf16.msra.mxu0 %v4052
        %4555 = vmatprep.subr.bf16.mxu0 %v4051
        %4556 = vmatpush1.bf16.msra.mxu0 %v4050
        %4557 = vmatprep.subr.bf16.mxu0 %v4049
        %4558 = vmatpush1.bf16.msra.mxu0 %v4048
        %4559 = vmatprep.subr.bf16.mxu0 %v4047
        %4560 = vmatpush1.bf16.msra.mxu0 %v4046
        %4561 = vmatprep.subr.bf16.mxu0 %v4077
        %4562 = vmatpush2.bf16.msra.mxu0 %v4076
        %4563 = vmatprep.subr.bf16.mxu0 %v4075
        %4564 = vmatpush2.bf16.msra.mxu0 %v4074
        %4565 = vmatprep.subr.bf16.mxu0 %v4073
        %4566 = vmatpush2.bf16.msra.mxu0 %v4072
        %4567 = vmatprep.subr.bf16.mxu0 %v4071
        %4568 = vmatpush2.bf16.msra.mxu0 %v4070
        %4569 = vmatprep.subr.bf16.mxu0 %v4069
        %4570 = vmatpush2.bf16.msra.mxu0 %v4068
        %4571 = vmatprep.subr.bf16.mxu0 %v4067
        %4572 = vmatpush2.bf16.msra.mxu0 %v4066
        %4573 = vmatprep.subr.bf16.mxu0 %v4065
        %4574 = vmatpush2.bf16.msra.mxu0 %v4064
        %4575 = vmatprep.subr.bf16.mxu0 %v4063
        %4576 = vmatpush2.bf16.msra.mxu0 %v4062
        %4577 = vmatprep.mubr.bf16.mxu0 %v3369
        %4578 = vmatmul.mubr.bf16.gmra.mxu0 %v3368
        %v4579 = vpop.f32.mrf.mxu0
        %v4580 = vadd.f32 %v4467, %v4579
        %v4581 = vpop.f32.mrf.mxu0
        %v4582 = vadd.f32 %v4469, %v4581
        %v4583 = vpop.f32.mrf.mxu0
        %v4584 = vadd.f32 %v4471, %v4583
        %v4585 = vpop.f32.mrf.mxu0
        %v4586 = vadd.f32 %v4473, %v4585
        %4587 = vmatprep.mubr.bf16.mxu0 %v3377
        %4588 = vmatmul.mubr.bf16.gmra.mxu0 %v3376
        %v4589 = vpop.f32.mrf.mxu0
        %v4590 = vadd.f32 %v4477, %v4589
        %v4591 = vpop.f32.mrf.mxu0
        %v4592 = vadd.f32 %v4479, %v4591
        %v4593 = vpop.f32.mrf.mxu0
        %v4594 = vadd.f32 %v4481, %v4593
        %v4595 = vpop.f32.mrf.mxu0
        %v4596 = vadd.f32 %v4483, %v4595
        %4597 = vmatprep.mubr.bf16.mxu0 %v3385
        %4598 = vmatmul.mubr.bf16.gmra.mxu0 %v3384
        %v4599 = vpop.f32.mrf.mxu0
        %v4600 = vadd.f32 %v4487, %v4599
        %v4601 = vpop.f32.mrf.mxu0
        %v4602 = vadd.f32 %v4489, %v4601
        %v4603 = vpop.f32.mrf.mxu0
        %v4604 = vadd.f32 %v4491, %v4603
        %v4605 = vpop.f32.mrf.mxu0
        %v4606 = vadd.f32 %v4493, %v4605
        %4607 = vmatprep.mubr.bf16.mxu0 %v3393
        %4608 = vmatmul.mubr.bf16.gmra.mxu0 %v3392
        %v4609 = vpop.f32.mrf.mxu0
        %v4610 = vadd.f32 %v4497, %v4609
        %v4611 = vpop.f32.mrf.mxu0
        %v4612 = vadd.f32 %v4499, %v4611
        %v4613 = vpop.f32.mrf.mxu0
        %v4614 = vadd.f32 %v4501, %v4613
        %v4615 = vpop.f32.mrf.mxu0
        %v4616 = vadd.f32 %v4503, %v4615
        %4617 = vmatprep.mubr.bf16.mxu0 %v3401
        %4618 = vmatmul.mubr.bf16.gmra.mxu0 %v3400
        %v4619 = vpop.f32.mrf.mxu0
        %v4620 = vadd.f32 %v4507, %v4619
        %v4621 = vpop.f32.mrf.mxu0
        %v4622 = vadd.f32 %v4509, %v4621
        %v4623 = vpop.f32.mrf.mxu0
        %v4624 = vadd.f32 %v4511, %v4623
        %v4625 = vpop.f32.mrf.mxu0
        %v4626 = vadd.f32 %v4513, %v4625
        %4627 = vmatprep.mubr.bf16.mxu0 %v3409
        %4628 = vmatmul.mubr.bf16.gmra.mxu0 %v3408
        %v4629 = vpop.f32.mrf.mxu0
        %v4630 = vadd.f32 %v4517, %v4629
        %v4631 = vpop.f32.mrf.mxu0
        %v4632 = vadd.f32 %v4519, %v4631
        %v4633 = vpop.f32.mrf.mxu0
        %v4634 = vadd.f32 %v4521, %v4633
        %v4635 = vpop.f32.mrf.mxu0
        %v4636 = vadd.f32 %v4523, %v4635
        %4637 = vmatprep.mubr.bf16.mxu0 %v3417
        %4638 = vmatmul.mubr.bf16.gmra.mxu0 %v3416
        %v4639 = vpop.f32.mrf.mxu0
        %v4640 = vadd.f32 %v4527, %v4639
        %v4641 = vpop.f32.mrf.mxu0
        %v4642 = vadd.f32 %v4529, %v4641
        %v4643 = vpop.f32.mrf.mxu0
        %v4644 = vadd.f32 %v4531, %v4643
        %v4645 = vpop.f32.mrf.mxu0
        %v4646 = vadd.f32 %v4533, %v4645
        %4647 = vmatprep.mubr.bf16.mxu0 %v3425
        %4648 = vmatmul.mubr.bf16.gmra.mxu0 %v3424
        %v4649 = vpop.f32.mrf.mxu0
        %v4650 = vadd.f32 %v4537, %v4649
        %v4651 = vpop.f32.mrf.mxu0
        %v4652 = vadd.f32 %v4539, %v4651
        %v4653 = vpop.f32.mrf.mxu0
        %v4654 = vadd.f32 %v4541, %v4653
        %v4655 = vpop.f32.mrf.mxu0
        %v4656 = vadd.f32 %v4543, %v4655
        %4657 = vdwg.mxu0
        %v4658 = vtanh.pop %v4580
        %v4659 = vtanh.pop %v4582
        %v4660 = vtanh.pop %v4584
        %v4661 = vtanh.pop %v4586
        %v4662 = vtanh.pop %v4590
        %v4663 = vtanh.pop %v4592
        %v4664 = vtanh.pop %v4594
        %v4665 = vtanh.pop %v4596
        %v4666 = vtanh.pop %v4600
        %v4667 = vtanh.pop %v4602
        %v4668 = vtanh.pop %v4604
        %v4669 = vtanh.pop %v4606
        %v4670 = vtanh.pop %v4610
        %v4671 = vtanh.pop %v4612
        %v4672 = vtanh.pop %v4614
        %v4673 = vtanh.pop %v4616
        %v4674 = vtanh.pop %v4620
        %v4675 = vtanh.pop %v4622
        %v4676 = vtanh.pop %v4624
        %v4677 = vtanh.pop %v4626
        %v4678 = vtanh.pop %v4630
        %v4679 = vtanh.pop %v4632
        %v4680 = vtanh.pop %v4634
        %v4681 = vtanh.pop %v4636
        %v4682 = vtanh.pop %v4640
        %v4683 = vtanh.pop %v4642
        %v4684 = vtanh.pop %v4644
        %v4685 = vtanh.pop %v4646
        %v4686 = vtanh.pop %v4650
        %v4687 = vtanh.pop %v4652
        %v4688 = vtanh.pop %v4654
        %v4689 = vtanh.pop %v4656
        %v4690 = vpack.c.bf16 %v4660, %v4658
        %v4691 = vpack.c.bf16 %v4661, %v4659
        %v4692 = vpack.c.bf16 %v4664, %v4662
        %v4693 = vpack.c.bf16 %v4665, %v4663
        %v4694 = vpack.c.bf16 %v4668, %v4666
        %v4695 = vpack.c.bf16 %v4669, %v4667
        %v4696 = vpack.c.bf16 %v4672, %v4670
        %v4697 = vpack.c.bf16 %v4673, %v4671
        %v4698 = vpack.c.bf16 %v4676, %v4674
        %v4699 = vpack.c.bf16 %v4677, %v4675
        %v4700 = vpack.c.bf16 %v4680, %v4678
        %v4701 = vpack.c.bf16 %v4681, %v4679
        %v4702 = vpack.c.bf16 %v4684, %v4682
        %v4703 = vpack.c.bf16 %v4685, %v4683
        %v4704 = vpack.c.bf16 %v4688, %v4686
        %v4705 = vpack.c.bf16 %v4689, %v4687
        %v4722 = vunpack.c.l.b16 %v4690
        %v4723 = vunpack.c.l.b16 %v4691
        %v4724 = vunpack.c.h.b16 %v4690
        %v4725 = vunpack.c.h.b16 %v4691
        %v4726 = vunpack.c.l.b16 %v4692
        %v4727 = vunpack.c.l.b16 %v4693
        %v4728 = vunpack.c.h.b16 %v4692
        %v4729 = vunpack.c.h.b16 %v4693
        %v4730 = vunpack.c.l.b16 %v4694
        %v4731 = vunpack.c.l.b16 %v4695
        %v4732 = vunpack.c.h.b16 %v4694
        %v4733 = vunpack.c.h.b16 %v4695
        %v4734 = vunpack.c.l.b16 %v4696
        %v4735 = vunpack.c.l.b16 %v4697
        %v4736 = vunpack.c.h.b16 %v4696
        %v4737 = vunpack.c.h.b16 %v4697
        %v4738 = vunpack.c.l.b16 %v4698
        %v4739 = vunpack.c.l.b16 %v4699
        %v4740 = vunpack.c.h.b16 %v4698
        %v4741 = vunpack.c.h.b16 %v4699
        %v4742 = vunpack.c.l.b16 %v4700
        %v4743 = vunpack.c.l.b16 %v4701
        %v4744 = vunpack.c.h.b16 %v4700
        %v4745 = vunpack.c.h.b16 %v4701
        %v4746 = vunpack.c.l.b16 %v4702
        %v4747 = vunpack.c.l.b16 %v4703
        %v4748 = vunpack.c.h.b16 %v4702
        %v4749 = vunpack.c.h.b16 %v4703
        %v4750 = vunpack.c.l.b16 %v4704
        %v4751 = vunpack.c.l.b16 %v4705
        %v4752 = vunpack.c.h.b16 %v4704
        %v4753 = vunpack.c.h.b16 %v4705
        %v4754 = vpack.c.b16 %v4723, %v4722
        %v4755 = vpack.c.b16 %v4725, %v4724
        %v4756 = vpack.c.b16 %v4727, %v4726
        %v4757 = vpack.c.b16 %v4729, %v4728
        %v4758 = vpack.c.b16 %v4731, %v4730
        %v4759 = vpack.c.b16 %v4733, %v4732
        %v4760 = vpack.c.b16 %v4735, %v4734
        %v4761 = vpack.c.b16 %v4737, %v4736
        %v4762 = vpack.c.b16 %v4739, %v4738
        %v4763 = vpack.c.b16 %v4741, %v4740
        %v4764 = vpack.c.b16 %v4743, %v4742
        %v4765 = vpack.c.b16 %v4745, %v4744
        %v4766 = vpack.c.b16 %v4747, %v4746
        %v4767 = vpack.c.b16 %v4749, %v4748
        %v4768 = vpack.c.b16 %v4751, %v4750
        %v4769 = vpack.c.b16 %v4753, %v4752
        %4786 = vst [vmem:[%s302] sm:$0xff] %v4754
        %4787 = vst [vmem:[%s302 + $0x8] sm:$0xff] %v4755
        %4788 = vst [vmem:[%s302 + $0x10] sm:$0xff] %v4756
        %4789 = vst [vmem:[%s302 + $0x18] sm:$0xff] %v4757
        %4790 = vst [vmem:[%s302 + $0x20] sm:$0xff] %v4758
        %4791 = vst [vmem:[%s302 + $0x28] sm:$0xff] %v4759
        %4792 = vst [vmem:[%s302 + $0x30] sm:$0xff] %v4760
        %4793 = vst [vmem:[%s302 + $0x38] sm:$0xff] %v4761
        %4794 = vst [vmem:[%s302 + $0x40] sm:$0xff] %v4762
        %4795 = vst [vmem:[%s302 + $0x48] sm:$0xff] %v4763
        %4796 = vst [vmem:[%s302 + $0x50] sm:$0xff] %v4764
        %4797 = vst [vmem:[%s302 + $0x58] sm:$0xff] %v4765
        %4798 = vst [vmem:[%s302 + $0x60] sm:$0xff] %v4766
        %4799 = vst [vmem:[%s302 + $0x68] sm:$0xff] %v4767
        %4800 = vst [vmem:[%s302 + $0x70] sm:$0xff] %v4768
        %4801 = vst [vmem:[%s302 + $0x78] sm:$0xff] %v4769
        %s4802 = sand.u32 %s183, 1
        %s4803 = scalar_lea.sflag [#allocation4], %s4802
        %s4804 = sand.u32 %s183, 1
        %s4805 = smul.addr %s4804, 128
        %s4806 = scalar_lea.vmem [#allocation7], %s4805
        // Predicated region
        $region57: #{tpu_custom_call.1} parent=47 // pred_check
          %p4807 = pneg %p193
        $region58: #{tpu_custom_call.1} parent=47 // pred_check_branch
          %4809 = sbr.rel (%p4807) target = $region60
        $region59: #{tpu_custom_call.1} parent=47 // pred_region
          %s4810 = smul.u32 16, %s23
          %s4812 = ssub.s32 2048, 2048
          %4813 = vsyncadd %s4803, %s4812
          %s4814 = smul.addr %s4810, 2
          %s4815 = smul.addr %s4814, 64
          %s4816 = scalar_lea.hbm %s7, %s4815
          %s4817 = sshll.u32 %s4806, 4
          %s4818 = int_to_ptr.vmem [resolvable:$true] %s4817
          %4823 = dma.vmem_to_hbm [thread:$0]  %s4818, 2048, %s4816, %s4803, 128, 128, 8
        $region60: #{tpu_custom_call.1} parent=47 // pred_fallthru
          _
      $region48: #{tpu_custom_call.1} parent=5 // pred_fallthru
        _
      %p4824 = scmp.le.s32.totalorder 2, %s18
      // Predicated region
      $region61: #{tpu_custom_call.1} parent=5 // pred_check
        %p4825 = pneg %p4824
      $region62: #{tpu_custom_call.1} parent=5 // pred_check_branch
        %4827 = sbr.rel (%p4825) target = $region64
      $region63: #{tpu_custom_call.1} parent=5 // pred_region
        %s4828 = ssub.s32 %s18, 2
        // Predicated region
        $region65: #{tpu_custom_call.1} parent=63 // pred_check
          %p4829 = pneg %p199
        $region66: #{tpu_custom_call.1} parent=63 // pred_check_branch
          %4831 = sbr.rel (%p4829) target = $region68
        $region67: #{tpu_custom_call.1} parent=63 // pred_region
          %s4832 = sand.u32 %s184, 1
          %s4833 = scalar_lea.sflag [#allocation4], %s4832
          %s4834 = sand.u32 %s184, 1
          %s4835 = smul.addr %s4834, 128
          %s4836 = scalar_lea.vmem [#allocation7], %s4835
          %4837 = dma.done %s4833, 2048
        $region68: #{tpu_custom_call.1} parent=63 // pred_fallthru
          _
      $region64: #{tpu_custom_call.1} parent=5 // pred_fallthru
        _
    $region6: #{tpu_custom_call.1} parent=1 // loop_footer
      %s22 = sadd.s32 1, %s18
    $region7: #{tpu_custom_call.1} parent=1 // loop_footer_branch
      %17 = sbr.rel target = $region3
    $region8: #{tpu_custom_call.1} parent=1 // loop_exit
      _
    %4838 = vsyncpa [#allocation3], 1
    %s4839 = scalar_lea.sflag [#allocation3], 1
    %4840 = vsyncpa %s4839, 1
    %4841 = vsyncpa [#allocation6], 1
    %4842 = vsyncpa [#allocation4], 1
    %s4843 = scalar_lea.sflag [#allocation4], 1
    %4844 = vsyncpa %s4843, 1

</llo_original>
